<compile_context>
chip_gen: v6e
topology: v6e:2x2x1
jax: 0.10.0
libtpu: 0.0.40
codegen_flags: <defaults>
</compile_context>

<pallas_src>
import jax
import jax.numpy as jnp
from jax import lax
from jax.experimental import pallas as pl
from jax.experimental.pallas import tpu as pltpu

# Small, shape-consistent hyperparameters (original: n_features=348, n_heads=6,
# block_size=256, n_layers=6; vocab_size comes from the training text).
N_FEATURES = 48            # divisible by N_HEADS
N_HEADS = 6
HEAD_DIM = N_FEATURES // N_HEADS
N_LAYERS = 2
BLOCK_SIZE = 16
VOCAB_SIZE = 32
LN_EPS = 1e-5              # python float only (never a jnp scalar)

# Lane-dense padded sizes (last dims are multiples of 128).
C_PAD = 128                # 48  -> 128
QKV_PAD = 3 * C_PAD        # q/k/v segments each padded to 128 -> 384
FF_PAD = 256               # 192 -> 256
V_PAD = 128                # 32  -> 128


# ---------------------------------------------------------------------------
# Fused whole-model kernel (single grid step, layers statically unrolled)
# ---------------------------------------------------------------------------
def model_kernel(x0_ref, bias_ref, hmask_ref,
                 ln1_g, ln1_b, wqkv, bqkv, wo, bo,
                 ln2_g, ln2_b, w1, b1, w2, b2,
                 lnf_g, lnf_b, wlm, blm,
                 out_ref):
    bf16 = jnp.bfloat16

    x = x0_ref[...]                       # (BT, C_PAD) f32, padded lanes zero
    bias = bias_ref[...]                  # (BT, BT) f32 additive causal+batch mask
    hmask = hmask_ref[...]                # (N_HEADS, C_PAD) f32 0/1 lane masks

    def layernorm(h, g, b):
        # Padded lanes of h are exactly zero, so lane-wide sums == real-feature sums.
        mu = jnp.sum(h, axis=-1, keepdims=True) * (1.0 / N_FEATURES)
        ex2 = jnp.sum(h * h, axis=-1, keepdims=True) * (1.0 / N_FEATURES)
        var = ex2 - mu * mu
        return (h - mu) * lax.rsqrt(var + LN_EPS) * g + b

    def matmul(a_f32, w_bf, b=None):
        out = jnp.dot(a_f32.astype(bf16), w_bf, preferred_element_type=jnp.float32)
        if b is not None:
            out = out + b
        return out

    for l in range(N_LAYERS):             # static unroll (N_LAYERS = 2)
        # ---------------- self-attention branch (pre-LN) ----------------
        h = layernorm(x, ln1_g[l], ln1_b[l])
        qkv = matmul(h, wqkv[l], bqkv[l])          # (BT, 3*C_PAD) f32; q pre-scaled
        q = qkv[:, 0:C_PAD]                        # 128-aligned slices (free)
        k = qkv[:, C_PAD:2 * C_PAD]
        v = qkv[:, 2 * C_PAD:3 * C_PAD]
        k_b = k.astype(bf16)

        o_cat = jnp.zeros_like(x)                  # (BT, C_PAD) f32
        for hd in range(N_HEADS):                  # static unroll over heads
            hm = hmask[hd:hd + 1, :]               # (1, C_PAD) 0/1 f32
            qm_b = (q * hm).astype(bf16)           # only head hd's lanes survive
            vm_b = (v * hm).astype(bf16)
            # scores: contract full 128 lanes (masked lanes contribute zero)
            s = lax.dot_general(qm_b, k_b, (((1,), (1,)), ((), ())),
                                preferred_element_type=jnp.float32)
            s = s + bias
            s = s - jnp.max(s, axis=-1, keepdims=True)
            p = jnp.exp(s)
            p = p * pl.reciprocal(jnp.sum(p, axis=-1, keepdims=True), approx=True)
            # head hd's output lands in its own 8-lane segment of o_cat
            o_cat = o_cat + jnp.dot(p.astype(bf16), vm_b,
                                    preferred_element_type=jnp.float32)
        # single K=128 output projection over the implicit head concat
        x = x + matmul(o_cat, wo[l], bo[l])        # residual 1 (drop1 = identity)

        # ---------------- feed-forward branch (pre-LN) ----------------
        h2 = layernorm(x, ln2_g[l], ln2_b[l])
        ff = jnp.maximum(matmul(h2, w1[l], b1[l]), 0.0)
        x = x + matmul(ff, w2[l], b2[l])           # residual 2 (dropouts = identity)

    # ---------------- final LayerNorm + lm_head ----------------
    hf = layernorm(x, lnf_g[...], lnf_b[...])
    out_ref[...] = matmul(hf, wlm[...], blm[...])  # (BT, V_PAD) lane-dense store


# ---------------------------------------------------------------------------
# pallas_call wrapper
# ---------------------------------------------------------------------------
def run_model(x0, kp, B, T):
    BT = B * T

    # Additive causal + same-sequence mask over the flattened token axis.
    r = jnp.arange(BT, dtype=jnp.int32)
    same_seq = (r[:, None] // T) == (r[None, :] // T)
    causal = (r[:, None] % T) >= (r[None, :] % T)
    attn_bias = jnp.where(same_seq & causal, 0.0, -1e30).astype(jnp.float32)

    # Per-head 0/1 lane masks over the padded feature axis.
    lane = jnp.arange(C_PAD, dtype=jnp.int32)
    head_mask = ((lane[None, :] // HEAD_DIM) ==
                 jnp.arange(N_HEADS, dtype=jnp.int32)[:, None]).astype(jnp.float32)

    inputs = [
        x0, attn_bias, head_mask,
        kp["ln1_g"], kp["ln1_b"], kp["wqkv"], kp["bqkv"], kp["wo"], kp["bo"],
        kp["ln2_g"], kp["ln2_b"], kp["w1"], kp["b1"], kp["w2"], kp["b2"],
        kp["lnf_g"], kp["lnf_b"], kp["wlm"], kp["blm"],
    ]

    def whole(a):
        zeros = (0,) * a.ndim
        return pl.BlockSpec(a.shape, lambda i, _z=zeros: _z)

    return pl.pallas_call(
        model_kernel,
        grid=(1,),
        in_specs=[whole(a) for a in inputs],
        out_specs=pl.BlockSpec((BT, V_PAD), lambda i: (0, 0)),
        out_shape=jax.ShapeDtypeStruct((BT, V_PAD), jnp.float32),
        compiler_params=pltpu.CompilerParams(dimension_semantics=("arbitrary",)),
    )(*inputs)


# ---------------------------------------------------------------------------
# Parameters: PyTorch-convention init, then pack (transpose + pad + bf16 + stack)
# ---------------------------------------------------------------------------
def init_params(key):
    C, V = N_FEATURES, VOCAB_SIZE

    def normal(k, shape, scale=0.02):
        return (scale * jax.random.normal(k, shape)).astype(jnp.float32)

    keys = jax.random.split(key, 4 + N_LAYERS)
    params = {
        "embedding": normal(keys[0], (V, C)),
        "pos_encoding": normal(keys[1], (BLOCK_SIZE, C)),
        "ln_f_g": jnp.ones((C,), jnp.float32),
        "ln_f_b": jnp.zeros((C,), jnp.float32),
        "lm_head_w": normal(keys[2], (V, C)),      # (out, in) torch layout
        "lm_head_b": normal(keys[3], (V,)),
    }
    blocks = []
    for li in range(N_LAYERS):
        bk = jax.random.split(keys[4 + li], 8)
        blocks.append(dict(
            ln1_g=jnp.ones((C,), jnp.float32), ln1_b=jnp.zeros((C,), jnp.float32),
            in_proj_w=normal(bk[0], (3 * C, C)), in_proj_b=normal(bk[1], (3 * C,)),
            out_proj_w=normal(bk[2], (C, C)),    out_proj_b=normal(bk[3], (C,)),
            ln2_g=jnp.ones((C,), jnp.float32),   ln2_b=jnp.zeros((C,), jnp.float32),
            ff1_w=normal(bk[4], (4 * C, C)),     ff1_b=normal(bk[5], (4 * C,)),
            ff2_w=normal(bk[6], (C, 4 * C)),     ff2_b=normal(bk[7], (C,)),
        ))
    params["blocks"] = blocks
    return params


def _wt_pad(w, in_pad, out_pad):
    """Torch (out, in) weight -> zero-padded (in_pad, out_pad) for h @ W."""
    wt = w.T
    return jnp.pad(wt, ((0, in_pad - wt.shape[0]), (0, out_pad - wt.shape[1])))


def _vec_pad(v, n_pad):
    return jnp.pad(v, (0, n_pad - v.shape[0])).reshape(1, n_pad)


def _pack_qkv_w(w):
    """in_proj_weight (3C, C) -> (C_PAD, 3*C_PAD); q segment pre-scaled by 1/sqrt(D)."""
    C = N_FEATURES
    scale = 1.0 / (HEAD_DIM ** 0.5)
    segs = []
    for i in range(3):
        wt = w[i * C:(i + 1) * C].T                        # (C_in, C_out)
        if i == 0:
            wt = wt * scale
        segs.append(jnp.pad(wt, ((0, C_PAD - C), (0, C_PAD - C))))
    return jnp.concatenate(segs, axis=1)                    # (C_PAD, 3*C_PAD)


def _pack_qkv_b(b):
    C = N_FEATURES
    scale = 1.0 / (HEAD_DIM ** 0.5)
    segs = []
    for i in range(3):
        seg = b[i * C:(i + 1) * C]
        if i == 0:
            seg = seg * scale
        segs.append(jnp.pad(seg, (0, C_PAD - C)))
    return jnp.concatenate(segs).reshape(1, QKV_PAD)


def pack_params(p):
    blocks = p["blocks"]
    stack = lambda xs: jnp.stack(xs, axis=0)
    bf16 = jnp.bfloat16
    return {
        "embedding": p["embedding"],
        "pos_encoding": p["pos_encoding"],
        "ln1_g": stack([_vec_pad(b["ln1_g"], C_PAD) for b in blocks]),
        "ln1_b": stack([_vec_pad(b["ln1_b"], C_PAD) for b in blocks]),
        "wqkv": stack([_pack_qkv_w(b["in_proj_w"]) for b in blocks]).astype(bf16),
        "bqkv": stack([_pack_qkv_b(b["in_proj_b"]) for b in blocks]),
        # out_proj padded to (C_PAD, C_PAD): one K=128 matmul, no in-kernel slicing
        "wo":   stack([_wt_pad(b["out_proj_w"], C_PAD, C_PAD) for b in blocks]).astype(bf16),
        "bo":   stack([_vec_pad(b["out_proj_b"], C_PAD) for b in blocks]),
        "ln2_g": stack([_vec_pad(b["ln2_g"], C_PAD) for b in blocks]),
        "ln2_b": stack([_vec_pad(b["ln2_b"], C_PAD) for b in blocks]),
        "w1":   stack([_wt_pad(b["ff1_w"], C_PAD, FF_PAD) for b in blocks]).astype(bf16),
        "b1":   stack([_vec_pad(b["ff1_b"], FF_PAD) for b in blocks]),
        "w2":   stack([_wt_pad(b["ff2_w"], FF_PAD, C_PAD) for b in blocks]).astype(bf16),
        "b2":   stack([_vec_pad(b["ff2_b"], C_PAD) for b in blocks]),
        "lnf_g": _vec_pad(p["ln_f_g"], C_PAD),
        "lnf_b": _vec_pad(p["ln_f_b"], C_PAD),
        "wlm":  _wt_pad(p["lm_head_w"], C_PAD, V_PAD).astype(bf16),
        "blm":  _vec_pad(p["lm_head_b"], V_PAD),
    }


# ---------------------------------------------------------------------------
# Forward glue (embedding gathers + padding + loss stay in plain JAX)
# ---------------------------------------------------------------------------
def song_generator_forward(idx, kp, targets=None):
    B, T = idx.shape
    tok_emb = kp["embedding"][idx]                    # (B, T, C) gather (glue)
    pos_emb = kp["pos_encoding"][:T]                  # (T, C)
    x = (tok_emb + pos_emb[None, :, :]).astype(jnp.float32)
    x = jnp.pad(x, ((0, 0), (0, 0), (0, C_PAD - N_FEATURES)))
    x = x.reshape(B * T, C_PAD)

    logits_pad = run_model(x, kp, B, T)               # (B*T, V_PAD)
    logits = logits_pad[:, :VOCAB_SIZE].reshape(B, T, VOCAB_SIZE)

    loss = None
    if targets is not None:
        lg = logits.reshape(B * T, VOCAB_SIZE)
        tg = targets.reshape(B * T)
        lse = jax.nn.logsumexp(lg, axis=-1)
        loss = jnp.mean(lse - jnp.take_along_axis(lg, tg[:, None], axis=-1)[:, 0])
    return logits, loss


if __name__ == "__main__":
    key = jax.random.PRNGKey(0)
    pkey, ikey = jax.random.split(key)
    raw_params = init_params(pkey)
    kp = pack_params(raw_params)

    B, T = 2, 8
    idx = jax.random.randint(ikey, (B, T), 0, VOCAB_SIZE, dtype=jnp.int32)

    logits, _ = song_generator_forward(idx, kp, targets=None)
    logits = jax.block_until_ready(logits)
    assert logits.shape == (B, T, VOCAB_SIZE)
    assert bool(jnp.all(jnp.isfinite(logits)))
    print("KERNEL_OK")
</pallas_src>

<mosaic_0001>
module attributes {stable_mosaic.version = 11 : i64} {
  func.func @model_kernel(%arg0: i32, %arg1: memref<16x128xf32, #tpu.memory_space<vmem>>, %arg2: memref<16x16xf32, #tpu.memory_space<vmem>>, %arg3: memref<6x128xf32, #tpu.memory_space<vmem>>, %arg4: memref<2x1x128xf32, #tpu.memory_space<vmem>>, %arg5: memref<2x1x128xf32, #tpu.memory_space<vmem>>, %arg6: memref<2x128x384xbf16, #tpu.memory_space<vmem>>, %arg7: memref<2x1x384xf32, #tpu.memory_space<vmem>>, %arg8: memref<2x128x128xbf16, #tpu.memory_space<vmem>>, %arg9: memref<2x1x128xf32, #tpu.memory_space<vmem>>, %arg10: memref<2x1x128xf32, #tpu.memory_space<vmem>>, %arg11: memref<2x1x128xf32, #tpu.memory_space<vmem>>, %arg12: memref<2x128x256xbf16, #tpu.memory_space<vmem>>, %arg13: memref<2x1x256xf32, #tpu.memory_space<vmem>>, %arg14: memref<2x256x128xbf16, #tpu.memory_space<vmem>>, %arg15: memref<2x1x128xf32, #tpu.memory_space<vmem>>, %arg16: memref<1x128xf32, #tpu.memory_space<vmem>>, %arg17: memref<1x128xf32, #tpu.memory_space<vmem>>, %arg18: memref<128x128xbf16, #tpu.memory_space<vmem>>, %arg19: memref<1x128xf32, #tpu.memory_space<vmem>>, %arg20: memref<16x128xf32, #tpu.memory_space<vmem>>) attributes {dimension_semantics = [#tpu.dimension_semantics<arbitrary>], iteration_bounds = array<i64: 1>, scalar_prefetch = 0 : i64, scratch_operands = 0 : i64, tpu.core_type = #tpu.core_type<tc>, window_params = [{pipeline_mode = #tpu.pipeline_mode<synchronous>, transform_indices = @transform_0, window_bounds = array<i64: 16, 128>}, {pipeline_mode = #tpu.pipeline_mode<synchronous>, transform_indices = @transform_1, window_bounds = array<i64: 16, 16>}, {pipeline_mode = #tpu.pipeline_mode<synchronous>, transform_indices = @transform_2, window_bounds = array<i64: 6, 128>}, {pipeline_mode = #tpu.pipeline_mode<synchronous>, transform_indices = @transform_3, window_bounds = array<i64: 2, 1, 128>}, {pipeline_mode = #tpu.pipeline_mode<synchronous>, transform_indices = @transform_4, window_bounds = array<i64: 2, 1, 128>}, {pipeline_mode = #tpu.pipeline_mode<synchronous>, transform_indices = @transform_5, window_bounds = array<i64: 2, 128, 384>}, {pipeline_mode = #tpu.pipeline_mode<synchronous>, transform_indices = @transform_6, window_bounds = array<i64: 2, 1, 384>}, {pipeline_mode = #tpu.pipeline_mode<synchronous>, transform_indices = @transform_7, window_bounds = array<i64: 2, 128, 128>}, {pipeline_mode = #tpu.pipeline_mode<synchronous>, transform_indices = @transform_8, window_bounds = array<i64: 2, 1, 128>}, {pipeline_mode = #tpu.pipeline_mode<synchronous>, transform_indices = @transform_9, window_bounds = array<i64: 2, 1, 128>}, {pipeline_mode = #tpu.pipeline_mode<synchronous>, transform_indices = @transform_10, window_bounds = array<i64: 2, 1, 128>}, {pipeline_mode = #tpu.pipeline_mode<synchronous>, transform_indices = @transform_11, window_bounds = array<i64: 2, 128, 256>}, {pipeline_mode = #tpu.pipeline_mode<synchronous>, transform_indices = @transform_12, window_bounds = array<i64: 2, 1, 256>}, {pipeline_mode = #tpu.pipeline_mode<synchronous>, transform_indices = @transform_13, window_bounds = array<i64: 2, 256, 128>}, {pipeline_mode = #tpu.pipeline_mode<synchronous>, transform_indices = @transform_14, window_bounds = array<i64: 2, 1, 128>}, {pipeline_mode = #tpu.pipeline_mode<synchronous>, transform_indices = @transform_15, window_bounds = array<i64: 1, 128>}, {pipeline_mode = #tpu.pipeline_mode<synchronous>, transform_indices = @transform_16, window_bounds = array<i64: 1, 128>}, {pipeline_mode = #tpu.pipeline_mode<synchronous>, transform_indices = @transform_17, window_bounds = array<i64: 128, 128>}, {pipeline_mode = #tpu.pipeline_mode<synchronous>, transform_indices = @transform_18, window_bounds = array<i64: 1, 128>}, {pipeline_mode = #tpu.pipeline_mode<synchronous>, transform_indices = @transform_19, window_bounds = array<i64: 16, 128>}]} {
    %c0 = arith.constant 0 : index
    %c0_0 = arith.constant 0 : index
    %0 = vector.load %arg1[%c0, %c0_0] : memref<16x128xf32, #tpu.memory_space<vmem>>, vector<16x128xf32>
    %c0_1 = arith.constant 0 : index
    %c0_2 = arith.constant 0 : index
    %1 = vector.load %arg2[%c0_1, %c0_2] : memref<16x16xf32, #tpu.memory_space<vmem>>, vector<16x16xf32>
    %c0_3 = arith.constant 0 : index
    %c0_4 = arith.constant 0 : index
    %2 = vector.load %arg3[%c0_3, %c0_4] : memref<6x128xf32, #tpu.memory_space<vmem>>, vector<6x128xf32>
    %c0_5 = arith.constant 0 : index
    %c0_6 = arith.constant 0 : index
    %c0_7 = arith.constant 0 : index
    %3 = vector.load %arg4[%c0_5, %c0_6, %c0_7] : memref<2x1x128xf32, #tpu.memory_space<vmem>>, vector<1x1x128xf32>
    %4 = vector.shape_cast %3 : vector<1x1x128xf32> to vector<1x128xf32>
    %c0_8 = arith.constant 0 : index
    %c0_9 = arith.constant 0 : index
    %c0_10 = arith.constant 0 : index
    %5 = vector.load %arg5[%c0_8, %c0_9, %c0_10] : memref<2x1x128xf32, #tpu.memory_space<vmem>>, vector<1x1x128xf32>
    %6 = vector.shape_cast %5 : vector<1x1x128xf32> to vector<1x128xf32>
    %cst = arith.constant dense<0.000000e+00> : vector<16xf32>
    %7 = vector.multi_reduction <add>, %0, %cst [1] : vector<16x128xf32> to vector<16xf32>
    %8 = vector.shape_cast %7 : vector<16xf32> to vector<16x1xf32>
    %cst_11 = arith.constant 0.020833334 : f32
    %9 = vector.broadcast %cst_11 : f32 to vector<16x1xf32>
    %10 = arith.mulf %8, %9 : vector<16x1xf32>
    %11 = arith.mulf %0, %0 : vector<16x128xf32>
    %cst_12 = arith.constant dense<0.000000e+00> : vector<16xf32>
    %12 = vector.multi_reduction <add>, %11, %cst_12 [1] : vector<16x128xf32> to vector<16xf32>
    %13 = vector.shape_cast %12 : vector<16xf32> to vector<16x1xf32>
    %cst_13 = arith.constant 0.020833334 : f32
    %14 = vector.broadcast %cst_13 : f32 to vector<16x1xf32>
    %15 = arith.mulf %13, %14 : vector<16x1xf32>
    %16 = arith.mulf %10, %10 : vector<16x1xf32>
    %17 = arith.subf %15, %16 : vector<16x1xf32>
    %18 = vector.broadcast %10 : vector<16x1xf32> to vector<16x128xf32>
    %19 = arith.subf %0, %18 : vector<16x128xf32>
    %cst_14 = arith.constant 9.99999974E-6 : f32
    %20 = vector.broadcast %cst_14 : f32 to vector<16x1xf32>
    %21 = arith.addf %17, %20 : vector<16x1xf32>
    %22 = math.rsqrt %21 : vector<16x1xf32>
    %23 = vector.broadcast %22 : vector<16x1xf32> to vector<16x128xf32>
    %24 = arith.mulf %19, %23 : vector<16x128xf32>
    %25 = vector.broadcast %4 : vector<1x128xf32> to vector<16x128xf32>
    %26 = arith.mulf %24, %25 : vector<16x128xf32>
    %27 = vector.broadcast %6 : vector<1x128xf32> to vector<16x128xf32>
    %28 = arith.addf %26, %27 : vector<16x128xf32>
    %c0_15 = arith.constant 0 : index
    %c0_16 = arith.constant 0 : index
    %c0_17 = arith.constant 0 : index
    %29 = vector.load %arg6[%c0_15, %c0_16, %c0_17] : memref<2x128x384xbf16, #tpu.memory_space<vmem>>, vector<1x128x384xbf16>
    %30 = vector.shape_cast %29 : vector<1x128x384xbf16> to vector<128x384xbf16>
    %c0_18 = arith.constant 0 : index
    %c0_19 = arith.constant 0 : index
    %c0_20 = arith.constant 0 : index
    %31 = vector.load %arg7[%c0_18, %c0_19, %c0_20] : memref<2x1x384xf32, #tpu.memory_space<vmem>>, vector<1x1x384xf32>
    %32 = vector.shape_cast %31 : vector<1x1x384xf32> to vector<1x384xf32>
    %33 = arith.truncf %28 : vector<16x128xf32> to vector<16x128xbf16>
    %cst_21 = arith.constant dense<0.000000e+00> : vector<16x384xf32>
    %34 = tpu.matmul %33, %30, %cst_21 {dimension_numbers = #tpu.dot_dimension_numbers<[1], [0], [0], [1], [0, 0, 1, 1], [], []>} : vector<16x128xbf16>, vector<128x384xbf16>, vector<16x384xf32> -> vector<16x384xf32>
    %35 = vector.broadcast %32 : vector<1x384xf32> to vector<16x384xf32>
    %36 = arith.addf %34, %35 : vector<16x384xf32>
    %37 = vector.extract_strided_slice %36 {offsets = [0, 0], sizes = [16, 128], strides = [1, 1]} : vector<16x384xf32> to vector<16x128xf32>
    %38 = vector.extract_strided_slice %36 {offsets = [0, 128], sizes = [16, 128], strides = [1, 1]} : vector<16x384xf32> to vector<16x128xf32>
    %39 = vector.extract_strided_slice %36 {offsets = [0, 256], sizes = [16, 128], strides = [1, 1]} : vector<16x384xf32> to vector<16x128xf32>
    %40 = arith.truncf %38 : vector<16x128xf32> to vector<16x128xbf16>
    %cst_22 = arith.constant 0.000000e+00 : f32
    %41 = vector.broadcast %cst_22 : f32 to vector<16x128xf32>
    %42 = vector.extract_strided_slice %2 {offsets = [0, 0], sizes = [1, 128], strides = [1, 1]} : vector<6x128xf32> to vector<1x128xf32>
    %43 = vector.broadcast %42 : vector<1x128xf32> to vector<16x128xf32>
    %44 = arith.mulf %37, %43 : vector<16x128xf32>
    %45 = arith.truncf %44 : vector<16x128xf32> to vector<16x128xbf16>
    %46 = vector.broadcast %42 : vector<1x128xf32> to vector<16x128xf32>
    %47 = arith.mulf %39, %46 : vector<16x128xf32>
    %48 = arith.truncf %47 : vector<16x128xf32> to vector<16x128xbf16>
    %cst_23 = arith.constant dense<0.000000e+00> : vector<16x16xf32>
    %49 = tpu.matmul %45, %40, %cst_23 {dimension_numbers = #tpu.dot_dimension_numbers<[1], [1], [0], [0], [0, 0, 1, 0], [], []>} : vector<16x128xbf16>, vector<16x128xbf16>, vector<16x16xf32> -> vector<16x16xf32>
    %50 = arith.addf %49, %1 : vector<16x16xf32>
    %cst_24 = arith.constant dense<0xFF800000> : vector<16xf32>
    %51 = vector.multi_reduction <maximumf>, %50, %cst_24 [1] : vector<16x16xf32> to vector<16xf32>
    %52 = vector.shape_cast %51 : vector<16xf32> to vector<16x1xf32>
    %53 = vector.broadcast %52 : vector<16x1xf32> to vector<16x16xf32>
    %54 = arith.subf %50, %53 : vector<16x16xf32>
    %55 = math.exp %54 : vector<16x16xf32>
    %cst_25 = arith.constant dense<0.000000e+00> : vector<16xf32>
    %56 = vector.multi_reduction <add>, %55, %cst_25 [1] : vector<16x16xf32> to vector<16xf32>
    %57 = vector.shape_cast %56 : vector<16xf32> to vector<16x1xf32>
    %58 = tpu.reciprocal %57 {approx = true} : vector<16x1xf32> -> vector<16x1xf32>
    %59 = vector.broadcast %58 : vector<16x1xf32> to vector<16x16xf32>
    %60 = arith.mulf %55, %59 : vector<16x16xf32>
    %61 = arith.truncf %60 : vector<16x16xf32> to vector<16x16xbf16>
    %cst_26 = arith.constant dense<0.000000e+00> : vector<16x128xf32>
    %62 = tpu.matmul %61, %48, %cst_26 {dimension_numbers = #tpu.dot_dimension_numbers<[1], [0], [0], [1], [0, 0, 1, 1], [], []>} : vector<16x16xbf16>, vector<16x128xbf16>, vector<16x128xf32> -> vector<16x128xf32>
    %63 = arith.addf %41, %62 : vector<16x128xf32>
    %64 = vector.extract_strided_slice %2 {offsets = [1, 0], sizes = [1, 128], strides = [1, 1]} : vector<6x128xf32> to vector<1x128xf32>
    %65 = vector.broadcast %64 : vector<1x128xf32> to vector<16x128xf32>
    %66 = arith.mulf %37, %65 : vector<16x128xf32>
    %67 = arith.truncf %66 : vector<16x128xf32> to vector<16x128xbf16>
    %68 = vector.broadcast %64 : vector<1x128xf32> to vector<16x128xf32>
    %69 = arith.mulf %39, %68 : vector<16x128xf32>
    %70 = arith.truncf %69 : vector<16x128xf32> to vector<16x128xbf16>
    %cst_27 = arith.constant dense<0.000000e+00> : vector<16x16xf32>
    %71 = tpu.matmul %67, %40, %cst_27 {dimension_numbers = #tpu.dot_dimension_numbers<[1], [1], [0], [0], [0, 0, 1, 0], [], []>} : vector<16x128xbf16>, vector<16x128xbf16>, vector<16x16xf32> -> vector<16x16xf32>
    %72 = arith.addf %71, %1 : vector<16x16xf32>
    %cst_28 = arith.constant dense<0xFF800000> : vector<16xf32>
    %73 = vector.multi_reduction <maximumf>, %72, %cst_28 [1] : vector<16x16xf32> to vector<16xf32>
    %74 = vector.shape_cast %73 : vector<16xf32> to vector<16x1xf32>
    %75 = vector.broadcast %74 : vector<16x1xf32> to vector<16x16xf32>
    %76 = arith.subf %72, %75 : vector<16x16xf32>
    %77 = math.exp %76 : vector<16x16xf32>
    %cst_29 = arith.constant dense<0.000000e+00> : vector<16xf32>
    %78 = vector.multi_reduction <add>, %77, %cst_29 [1] : vector<16x16xf32> to vector<16xf32>
    %79 = vector.shape_cast %78 : vector<16xf32> to vector<16x1xf32>
    %80 = tpu.reciprocal %79 {approx = true} : vector<16x1xf32> -> vector<16x1xf32>
    %81 = vector.broadcast %80 : vector<16x1xf32> to vector<16x16xf32>
    %82 = arith.mulf %77, %81 : vector<16x16xf32>
    %83 = arith.truncf %82 : vector<16x16xf32> to vector<16x16xbf16>
    %cst_30 = arith.constant dense<0.000000e+00> : vector<16x128xf32>
    %84 = tpu.matmul %83, %70, %cst_30 {dimension_numbers = #tpu.dot_dimension_numbers<[1], [0], [0], [1], [0, 0, 1, 1], [], []>} : vector<16x16xbf16>, vector<16x128xbf16>, vector<16x128xf32> -> vector<16x128xf32>
    %85 = arith.addf %63, %84 : vector<16x128xf32>
    %86 = vector.extract_strided_slice %2 {offsets = [2, 0], sizes = [1, 128], strides = [1, 1]} : vector<6x128xf32> to vector<1x128xf32>
    %87 = vector.broadcast %86 : vector<1x128xf32> to vector<16x128xf32>
    %88 = arith.mulf %37, %87 : vector<16x128xf32>
    %89 = arith.truncf %88 : vector<16x128xf32> to vector<16x128xbf16>
    %90 = vector.broadcast %86 : vector<1x128xf32> to vector<16x128xf32>
    %91 = arith.mulf %39, %90 : vector<16x128xf32>
    %92 = arith.truncf %91 : vector<16x128xf32> to vector<16x128xbf16>
    %cst_31 = arith.constant dense<0.000000e+00> : vector<16x16xf32>
    %93 = tpu.matmul %89, %40, %cst_31 {dimension_numbers = #tpu.dot_dimension_numbers<[1], [1], [0], [0], [0, 0, 1, 0], [], []>} : vector<16x128xbf16>, vector<16x128xbf16>, vector<16x16xf32> -> vector<16x16xf32>
    %94 = arith.addf %93, %1 : vector<16x16xf32>
    %cst_32 = arith.constant dense<0xFF800000> : vector<16xf32>
    %95 = vector.multi_reduction <maximumf>, %94, %cst_32 [1] : vector<16x16xf32> to vector<16xf32>
    %96 = vector.shape_cast %95 : vector<16xf32> to vector<16x1xf32>
    %97 = vector.broadcast %96 : vector<16x1xf32> to vector<16x16xf32>
    %98 = arith.subf %94, %97 : vector<16x16xf32>
    %99 = math.exp %98 : vector<16x16xf32>
    %cst_33 = arith.constant dense<0.000000e+00> : vector<16xf32>
    %100 = vector.multi_reduction <add>, %99, %cst_33 [1] : vector<16x16xf32> to vector<16xf32>
    %101 = vector.shape_cast %100 : vector<16xf32> to vector<16x1xf32>
    %102 = tpu.reciprocal %101 {approx = true} : vector<16x1xf32> -> vector<16x1xf32>
    %103 = vector.broadcast %102 : vector<16x1xf32> to vector<16x16xf32>
    %104 = arith.mulf %99, %103 : vector<16x16xf32>
    %105 = arith.truncf %104 : vector<16x16xf32> to vector<16x16xbf16>
    %cst_34 = arith.constant dense<0.000000e+00> : vector<16x128xf32>
    %106 = tpu.matmul %105, %92, %cst_34 {dimension_numbers = #tpu.dot_dimension_numbers<[1], [0], [0], [1], [0, 0, 1, 1], [], []>} : vector<16x16xbf16>, vector<16x128xbf16>, vector<16x128xf32> -> vector<16x128xf32>
    %107 = arith.addf %85, %106 : vector<16x128xf32>
    %108 = vector.extract_strided_slice %2 {offsets = [3, 0], sizes = [1, 128], strides = [1, 1]} : vector<6x128xf32> to vector<1x128xf32>
    %109 = vector.broadcast %108 : vector<1x128xf32> to vector<16x128xf32>
    %110 = arith.mulf %37, %109 : vector<16x128xf32>
    %111 = arith.truncf %110 : vector<16x128xf32> to vector<16x128xbf16>
    %112 = vector.broadcast %108 : vector<1x128xf32> to vector<16x128xf32>
    %113 = arith.mulf %39, %112 : vector<16x128xf32>
    %114 = arith.truncf %113 : vector<16x128xf32> to vector<16x128xbf16>
    %cst_35 = arith.constant dense<0.000000e+00> : vector<16x16xf32>
    %115 = tpu.matmul %111, %40, %cst_35 {dimension_numbers = #tpu.dot_dimension_numbers<[1], [1], [0], [0], [0, 0, 1, 0], [], []>} : vector<16x128xbf16>, vector<16x128xbf16>, vector<16x16xf32> -> vector<16x16xf32>
    %116 = arith.addf %115, %1 : vector<16x16xf32>
    %cst_36 = arith.constant dense<0xFF800000> : vector<16xf32>
    %117 = vector.multi_reduction <maximumf>, %116, %cst_36 [1] : vector<16x16xf32> to vector<16xf32>
    %118 = vector.shape_cast %117 : vector<16xf32> to vector<16x1xf32>
    %119 = vector.broadcast %118 : vector<16x1xf32> to vector<16x16xf32>
    %120 = arith.subf %116, %119 : vector<16x16xf32>
    %121 = math.exp %120 : vector<16x16xf32>
    %cst_37 = arith.constant dense<0.000000e+00> : vector<16xf32>
    %122 = vector.multi_reduction <add>, %121, %cst_37 [1] : vector<16x16xf32> to vector<16xf32>
    %123 = vector.shape_cast %122 : vector<16xf32> to vector<16x1xf32>
    %124 = tpu.reciprocal %123 {approx = true} : vector<16x1xf32> -> vector<16x1xf32>
    %125 = vector.broadcast %124 : vector<16x1xf32> to vector<16x16xf32>
    %126 = arith.mulf %121, %125 : vector<16x16xf32>
    %127 = arith.truncf %126 : vector<16x16xf32> to vector<16x16xbf16>
    %cst_38 = arith.constant dense<0.000000e+00> : vector<16x128xf32>
    %128 = tpu.matmul %127, %114, %cst_38 {dimension_numbers = #tpu.dot_dimension_numbers<[1], [0], [0], [1], [0, 0, 1, 1], [], []>} : vector<16x16xbf16>, vector<16x128xbf16>, vector<16x128xf32> -> vector<16x128xf32>
    %129 = arith.addf %107, %128 : vector<16x128xf32>
    %130 = vector.extract_strided_slice %2 {offsets = [4, 0], sizes = [1, 128], strides = [1, 1]} : vector<6x128xf32> to vector<1x128xf32>
    %131 = vector.broadcast %130 : vector<1x128xf32> to vector<16x128xf32>
    %132 = arith.mulf %37, %131 : vector<16x128xf32>
    %133 = arith.truncf %132 : vector<16x128xf32> to vector<16x128xbf16>
    %134 = vector.broadcast %130 : vector<1x128xf32> to vector<16x128xf32>
    %135 = arith.mulf %39, %134 : vector<16x128xf32>
    %136 = arith.truncf %135 : vector<16x128xf32> to vector<16x128xbf16>
    %cst_39 = arith.constant dense<0.000000e+00> : vector<16x16xf32>
    %137 = tpu.matmul %133, %40, %cst_39 {dimension_numbers = #tpu.dot_dimension_numbers<[1], [1], [0], [0], [0, 0, 1, 0], [], []>} : vector<16x128xbf16>, vector<16x128xbf16>, vector<16x16xf32> -> vector<16x16xf32>
    %138 = arith.addf %137, %1 : vector<16x16xf32>
    %cst_40 = arith.constant dense<0xFF800000> : vector<16xf32>
    %139 = vector.multi_reduction <maximumf>, %138, %cst_40 [1] : vector<16x16xf32> to vector<16xf32>
    %140 = vector.shape_cast %139 : vector<16xf32> to vector<16x1xf32>
    %141 = vector.broadcast %140 : vector<16x1xf32> to vector<16x16xf32>
    %142 = arith.subf %138, %141 : vector<16x16xf32>
    %143 = math.exp %142 : vector<16x16xf32>
    %cst_41 = arith.constant dense<0.000000e+00> : vector<16xf32>
    %144 = vector.multi_reduction <add>, %143, %cst_41 [1] : vector<16x16xf32> to vector<16xf32>
    %145 = vector.shape_cast %144 : vector<16xf32> to vector<16x1xf32>
    %146 = tpu.reciprocal %145 {approx = true} : vector<16x1xf32> -> vector<16x1xf32>
    %147 = vector.broadcast %146 : vector<16x1xf32> to vector<16x16xf32>
    %148 = arith.mulf %143, %147 : vector<16x16xf32>
    %149 = arith.truncf %148 : vector<16x16xf32> to vector<16x16xbf16>
    %cst_42 = arith.constant dense<0.000000e+00> : vector<16x128xf32>
    %150 = tpu.matmul %149, %136, %cst_42 {dimension_numbers = #tpu.dot_dimension_numbers<[1], [0], [0], [1], [0, 0, 1, 1], [], []>} : vector<16x16xbf16>, vector<16x128xbf16>, vector<16x128xf32> -> vector<16x128xf32>
    %151 = arith.addf %129, %150 : vector<16x128xf32>
    %152 = vector.extract_strided_slice %2 {offsets = [5, 0], sizes = [1, 128], strides = [1, 1]} : vector<6x128xf32> to vector<1x128xf32>
    %153 = vector.broadcast %152 : vector<1x128xf32> to vector<16x128xf32>
    %154 = arith.mulf %37, %153 : vector<16x128xf32>
    %155 = arith.truncf %154 : vector<16x128xf32> to vector<16x128xbf16>
    %156 = vector.broadcast %152 : vector<1x128xf32> to vector<16x128xf32>
    %157 = arith.mulf %39, %156 : vector<16x128xf32>
    %158 = arith.truncf %157 : vector<16x128xf32> to vector<16x128xbf16>
    %cst_43 = arith.constant dense<0.000000e+00> : vector<16x16xf32>
    %159 = tpu.matmul %155, %40, %cst_43 {dimension_numbers = #tpu.dot_dimension_numbers<[1], [1], [0], [0], [0, 0, 1, 0], [], []>} : vector<16x128xbf16>, vector<16x128xbf16>, vector<16x16xf32> -> vector<16x16xf32>
    %160 = arith.addf %159, %1 : vector<16x16xf32>
    %cst_44 = arith.constant dense<0xFF800000> : vector<16xf32>
    %161 = vector.multi_reduction <maximumf>, %160, %cst_44 [1] : vector<16x16xf32> to vector<16xf32>
    %162 = vector.shape_cast %161 : vector<16xf32> to vector<16x1xf32>
    %163 = vector.broadcast %162 : vector<16x1xf32> to vector<16x16xf32>
    %164 = arith.subf %160, %163 : vector<16x16xf32>
    %165 = math.exp %164 : vector<16x16xf32>
    %cst_45 = arith.constant dense<0.000000e+00> : vector<16xf32>
    %166 = vector.multi_reduction <add>, %165, %cst_45 [1] : vector<16x16xf32> to vector<16xf32>
    %167 = vector.shape_cast %166 : vector<16xf32> to vector<16x1xf32>
    %168 = tpu.reciprocal %167 {approx = true} : vector<16x1xf32> -> vector<16x1xf32>
    %169 = vector.broadcast %168 : vector<16x1xf32> to vector<16x16xf32>
    %170 = arith.mulf %165, %169 : vector<16x16xf32>
    %171 = arith.truncf %170 : vector<16x16xf32> to vector<16x16xbf16>
    %cst_46 = arith.constant dense<0.000000e+00> : vector<16x128xf32>
    %172 = tpu.matmul %171, %158, %cst_46 {dimension_numbers = #tpu.dot_dimension_numbers<[1], [0], [0], [1], [0, 0, 1, 1], [], []>} : vector<16x16xbf16>, vector<16x128xbf16>, vector<16x128xf32> -> vector<16x128xf32>
    %173 = arith.addf %151, %172 : vector<16x128xf32>
    %c0_47 = arith.constant 0 : index
    %c0_48 = arith.constant 0 : index
    %c0_49 = arith.constant 0 : index
    %174 = vector.load %arg8[%c0_47, %c0_48, %c0_49] : memref<2x128x128xbf16, #tpu.memory_space<vmem>>, vector<1x128x128xbf16>
    %175 = vector.shape_cast %174 : vector<1x128x128xbf16> to vector<128x128xbf16>
    %c0_50 = arith.constant 0 : index
    %c0_51 = arith.constant 0 : index
    %c0_52 = arith.constant 0 : index
    %176 = vector.load %arg9[%c0_50, %c0_51, %c0_52] : memref<2x1x128xf32, #tpu.memory_space<vmem>>, vector<1x1x128xf32>
    %177 = vector.shape_cast %176 : vector<1x1x128xf32> to vector<1x128xf32>
    %178 = arith.truncf %173 : vector<16x128xf32> to vector<16x128xbf16>
    %cst_53 = arith.constant dense<0.000000e+00> : vector<16x128xf32>
    %179 = tpu.matmul %178, %175, %cst_53 {dimension_numbers = #tpu.dot_dimension_numbers<[1], [0], [0], [1], [0, 0, 1, 1], [], []>} : vector<16x128xbf16>, vector<128x128xbf16>, vector<16x128xf32> -> vector<16x128xf32>
    %180 = vector.broadcast %177 : vector<1x128xf32> to vector<16x128xf32>
    %181 = arith.addf %179, %180 : vector<16x128xf32>
    %182 = arith.addf %0, %181 : vector<16x128xf32>
    %c0_54 = arith.constant 0 : index
    %c0_55 = arith.constant 0 : index
    %c0_56 = arith.constant 0 : index
    %183 = vector.load %arg10[%c0_54, %c0_55, %c0_56] : memref<2x1x128xf32, #tpu.memory_space<vmem>>, vector<1x1x128xf32>
    %184 = vector.shape_cast %183 : vector<1x1x128xf32> to vector<1x128xf32>
    %c0_57 = arith.constant 0 : index
    %c0_58 = arith.constant 0 : index
    %c0_59 = arith.constant 0 : index
    %185 = vector.load %arg11[%c0_57, %c0_58, %c0_59] : memref<2x1x128xf32, #tpu.memory_space<vmem>>, vector<1x1x128xf32>
    %186 = vector.shape_cast %185 : vector<1x1x128xf32> to vector<1x128xf32>
    %cst_60 = arith.constant dense<0.000000e+00> : vector<16xf32>
    %187 = vector.multi_reduction <add>, %182, %cst_60 [1] : vector<16x128xf32> to vector<16xf32>
    %188 = vector.shape_cast %187 : vector<16xf32> to vector<16x1xf32>
    %cst_61 = arith.constant 0.020833334 : f32
    %189 = vector.broadcast %cst_61 : f32 to vector<16x1xf32>
    %190 = arith.mulf %188, %189 : vector<16x1xf32>
    %191 = arith.mulf %182, %182 : vector<16x128xf32>
    %cst_62 = arith.constant dense<0.000000e+00> : vector<16xf32>
    %192 = vector.multi_reduction <add>, %191, %cst_62 [1] : vector<16x128xf32> to vector<16xf32>
    %193 = vector.shape_cast %192 : vector<16xf32> to vector<16x1xf32>
    %cst_63 = arith.constant 0.020833334 : f32
    %194 = vector.broadcast %cst_63 : f32 to vector<16x1xf32>
    %195 = arith.mulf %193, %194 : vector<16x1xf32>
    %196 = arith.mulf %190, %190 : vector<16x1xf32>
    %197 = arith.subf %195, %196 : vector<16x1xf32>
    %198 = vector.broadcast %190 : vector<16x1xf32> to vector<16x128xf32>
    %199 = arith.subf %182, %198 : vector<16x128xf32>
    %cst_64 = arith.constant 9.99999974E-6 : f32
    %200 = vector.broadcast %cst_64 : f32 to vector<16x1xf32>
    %201 = arith.addf %197, %200 : vector<16x1xf32>
    %202 = math.rsqrt %201 : vector<16x1xf32>
    %203 = vector.broadcast %202 : vector<16x1xf32> to vector<16x128xf32>
    %204 = arith.mulf %199, %203 : vector<16x128xf32>
    %205 = vector.broadcast %184 : vector<1x128xf32> to vector<16x128xf32>
    %206 = arith.mulf %204, %205 : vector<16x128xf32>
    %207 = vector.broadcast %186 : vector<1x128xf32> to vector<16x128xf32>
    %208 = arith.addf %206, %207 : vector<16x128xf32>
    %c0_65 = arith.constant 0 : index
    %c0_66 = arith.constant 0 : index
    %c0_67 = arith.constant 0 : index
    %209 = vector.load %arg12[%c0_65, %c0_66, %c0_67] : memref<2x128x256xbf16, #tpu.memory_space<vmem>>, vector<1x128x256xbf16>
    %210 = vector.shape_cast %209 : vector<1x128x256xbf16> to vector<128x256xbf16>
    %c0_68 = arith.constant 0 : index
    %c0_69 = arith.constant 0 : index
    %c0_70 = arith.constant 0 : index
    %211 = vector.load %arg13[%c0_68, %c0_69, %c0_70] : memref<2x1x256xf32, #tpu.memory_space<vmem>>, vector<1x1x256xf32>
    %212 = vector.shape_cast %211 : vector<1x1x256xf32> to vector<1x256xf32>
    %213 = arith.truncf %208 : vector<16x128xf32> to vector<16x128xbf16>
    %cst_71 = arith.constant dense<0.000000e+00> : vector<16x256xf32>
    %214 = tpu.matmul %213, %210, %cst_71 {dimension_numbers = #tpu.dot_dimension_numbers<[1], [0], [0], [1], [0, 0, 1, 1], [], []>} : vector<16x128xbf16>, vector<128x256xbf16>, vector<16x256xf32> -> vector<16x256xf32>
    %215 = vector.broadcast %212 : vector<1x256xf32> to vector<16x256xf32>
    %216 = arith.addf %214, %215 : vector<16x256xf32>
    %cst_72 = arith.constant 0.000000e+00 : f32
    %217 = vector.broadcast %cst_72 : f32 to vector<16x256xf32>
    %218 = arith.maximumf %216, %217 : vector<16x256xf32>
    %c0_73 = arith.constant 0 : index
    %c0_74 = arith.constant 0 : index
    %c0_75 = arith.constant 0 : index
    %219 = vector.load %arg14[%c0_73, %c0_74, %c0_75] : memref<2x256x128xbf16, #tpu.memory_space<vmem>>, vector<1x256x128xbf16>
    %220 = vector.shape_cast %219 : vector<1x256x128xbf16> to vector<256x128xbf16>
    %c0_76 = arith.constant 0 : index
    %c0_77 = arith.constant 0 : index
    %c0_78 = arith.constant 0 : index
    %221 = vector.load %arg15[%c0_76, %c0_77, %c0_78] : memref<2x1x128xf32, #tpu.memory_space<vmem>>, vector<1x1x128xf32>
    %222 = vector.shape_cast %221 : vector<1x1x128xf32> to vector<1x128xf32>
    %223 = arith.truncf %218 : vector<16x256xf32> to vector<16x256xbf16>
    %cst_79 = arith.constant dense<0.000000e+00> : vector<16x128xf32>
    %224 = tpu.matmul %223, %220, %cst_79 {dimension_numbers = #tpu.dot_dimension_numbers<[1], [0], [0], [1], [0, 0, 1, 1], [], []>} : vector<16x256xbf16>, vector<256x128xbf16>, vector<16x128xf32> -> vector<16x128xf32>
    %225 = vector.broadcast %222 : vector<1x128xf32> to vector<16x128xf32>
    %226 = arith.addf %224, %225 : vector<16x128xf32>
    %227 = arith.addf %182, %226 : vector<16x128xf32>
    %c1 = arith.constant 1 : index
    %c0_80 = arith.constant 0 : index
    %c0_81 = arith.constant 0 : index
    %228 = vector.load %arg4[%c1, %c0_80, %c0_81] : memref<2x1x128xf32, #tpu.memory_space<vmem>>, vector<1x1x128xf32>
    %229 = vector.shape_cast %228 : vector<1x1x128xf32> to vector<1x128xf32>
    %c1_82 = arith.constant 1 : index
    %c0_83 = arith.constant 0 : index
    %c0_84 = arith.constant 0 : index
    %230 = vector.load %arg5[%c1_82, %c0_83, %c0_84] : memref<2x1x128xf32, #tpu.memory_space<vmem>>, vector<1x1x128xf32>
    %231 = vector.shape_cast %230 : vector<1x1x128xf32> to vector<1x128xf32>
    %cst_85 = arith.constant dense<0.000000e+00> : vector<16xf32>
    %232 = vector.multi_reduction <add>, %227, %cst_85 [1] : vector<16x128xf32> to vector<16xf32>
    %233 = vector.shape_cast %232 : vector<16xf32> to vector<16x1xf32>
    %cst_86 = arith.constant 0.020833334 : f32
    %234 = vector.broadcast %cst_86 : f32 to vector<16x1xf32>
    %235 = arith.mulf %233, %234 : vector<16x1xf32>
    %236 = arith.mulf %227, %227 : vector<16x128xf32>
    %cst_87 = arith.constant dense<0.000000e+00> : vector<16xf32>
    %237 = vector.multi_reduction <add>, %236, %cst_87 [1] : vector<16x128xf32> to vector<16xf32>
    %238 = vector.shape_cast %237 : vector<16xf32> to vector<16x1xf32>
    %cst_88 = arith.constant 0.020833334 : f32
    %239 = vector.broadcast %cst_88 : f32 to vector<16x1xf32>
    %240 = arith.mulf %238, %239 : vector<16x1xf32>
    %241 = arith.mulf %235, %235 : vector<16x1xf32>
    %242 = arith.subf %240, %241 : vector<16x1xf32>
    %243 = vector.broadcast %235 : vector<16x1xf32> to vector<16x128xf32>
    %244 = arith.subf %227, %243 : vector<16x128xf32>
    %cst_89 = arith.constant 9.99999974E-6 : f32
    %245 = vector.broadcast %cst_89 : f32 to vector<16x1xf32>
    %246 = arith.addf %242, %245 : vector<16x1xf32>
    %247 = math.rsqrt %246 : vector<16x1xf32>
    %248 = vector.broadcast %247 : vector<16x1xf32> to vector<16x128xf32>
    %249 = arith.mulf %244, %248 : vector<16x128xf32>
    %250 = vector.broadcast %229 : vector<1x128xf32> to vector<16x128xf32>
    %251 = arith.mulf %249, %250 : vector<16x128xf32>
    %252 = vector.broadcast %231 : vector<1x128xf32> to vector<16x128xf32>
    %253 = arith.addf %251, %252 : vector<16x128xf32>
    %c1_90 = arith.constant 1 : index
    %c0_91 = arith.constant 0 : index
    %c0_92 = arith.constant 0 : index
    %254 = vector.load %arg6[%c1_90, %c0_91, %c0_92] : memref<2x128x384xbf16, #tpu.memory_space<vmem>>, vector<1x128x384xbf16>
    %255 = vector.shape_cast %254 : vector<1x128x384xbf16> to vector<128x384xbf16>
    %c1_93 = arith.constant 1 : index
    %c0_94 = arith.constant 0 : index
    %c0_95 = arith.constant 0 : index
    %256 = vector.load %arg7[%c1_93, %c0_94, %c0_95] : memref<2x1x384xf32, #tpu.memory_space<vmem>>, vector<1x1x384xf32>
    %257 = vector.shape_cast %256 : vector<1x1x384xf32> to vector<1x384xf32>
    %258 = arith.truncf %253 : vector<16x128xf32> to vector<16x128xbf16>
    %cst_96 = arith.constant dense<0.000000e+00> : vector<16x384xf32>
    %259 = tpu.matmul %258, %255, %cst_96 {dimension_numbers = #tpu.dot_dimension_numbers<[1], [0], [0], [1], [0, 0, 1, 1], [], []>} : vector<16x128xbf16>, vector<128x384xbf16>, vector<16x384xf32> -> vector<16x384xf32>
    %260 = vector.broadcast %257 : vector<1x384xf32> to vector<16x384xf32>
    %261 = arith.addf %259, %260 : vector<16x384xf32>
    %262 = vector.extract_strided_slice %261 {offsets = [0, 0], sizes = [16, 128], strides = [1, 1]} : vector<16x384xf32> to vector<16x128xf32>
    %263 = vector.extract_strided_slice %261 {offsets = [0, 128], sizes = [16, 128], strides = [1, 1]} : vector<16x384xf32> to vector<16x128xf32>
    %264 = vector.extract_strided_slice %261 {offsets = [0, 256], sizes = [16, 128], strides = [1, 1]} : vector<16x384xf32> to vector<16x128xf32>
    %265 = arith.truncf %263 : vector<16x128xf32> to vector<16x128xbf16>
    %cst_97 = arith.constant 0.000000e+00 : f32
    %266 = vector.broadcast %cst_97 : f32 to vector<16x128xf32>
    %267 = vector.extract_strided_slice %2 {offsets = [0, 0], sizes = [1, 128], strides = [1, 1]} : vector<6x128xf32> to vector<1x128xf32>
    %268 = vector.broadcast %267 : vector<1x128xf32> to vector<16x128xf32>
    %269 = arith.mulf %262, %268 : vector<16x128xf32>
    %270 = arith.truncf %269 : vector<16x128xf32> to vector<16x128xbf16>
    %271 = vector.broadcast %267 : vector<1x128xf32> to vector<16x128xf32>
    %272 = arith.mulf %264, %271 : vector<16x128xf32>
    %273 = arith.truncf %272 : vector<16x128xf32> to vector<16x128xbf16>
    %cst_98 = arith.constant dense<0.000000e+00> : vector<16x16xf32>
    %274 = tpu.matmul %270, %265, %cst_98 {dimension_numbers = #tpu.dot_dimension_numbers<[1], [1], [0], [0], [0, 0, 1, 0], [], []>} : vector<16x128xbf16>, vector<16x128xbf16>, vector<16x16xf32> -> vector<16x16xf32>
    %275 = arith.addf %274, %1 : vector<16x16xf32>
    %cst_99 = arith.constant dense<0xFF800000> : vector<16xf32>
    %276 = vector.multi_reduction <maximumf>, %275, %cst_99 [1] : vector<16x16xf32> to vector<16xf32>
    %277 = vector.shape_cast %276 : vector<16xf32> to vector<16x1xf32>
    %278 = vector.broadcast %277 : vector<16x1xf32> to vector<16x16xf32>
    %279 = arith.subf %275, %278 : vector<16x16xf32>
    %280 = math.exp %279 : vector<16x16xf32>
    %cst_100 = arith.constant dense<0.000000e+00> : vector<16xf32>
    %281 = vector.multi_reduction <add>, %280, %cst_100 [1] : vector<16x16xf32> to vector<16xf32>
    %282 = vector.shape_cast %281 : vector<16xf32> to vector<16x1xf32>
    %283 = tpu.reciprocal %282 {approx = true} : vector<16x1xf32> -> vector<16x1xf32>
    %284 = vector.broadcast %283 : vector<16x1xf32> to vector<16x16xf32>
    %285 = arith.mulf %280, %284 : vector<16x16xf32>
    %286 = arith.truncf %285 : vector<16x16xf32> to vector<16x16xbf16>
    %cst_101 = arith.constant dense<0.000000e+00> : vector<16x128xf32>
    %287 = tpu.matmul %286, %273, %cst_101 {dimension_numbers = #tpu.dot_dimension_numbers<[1], [0], [0], [1], [0, 0, 1, 1], [], []>} : vector<16x16xbf16>, vector<16x128xbf16>, vector<16x128xf32> -> vector<16x128xf32>
    %288 = arith.addf %266, %287 : vector<16x128xf32>
    %289 = vector.extract_strided_slice %2 {offsets = [1, 0], sizes = [1, 128], strides = [1, 1]} : vector<6x128xf32> to vector<1x128xf32>
    %290 = vector.broadcast %289 : vector<1x128xf32> to vector<16x128xf32>
    %291 = arith.mulf %262, %290 : vector<16x128xf32>
    %292 = arith.truncf %291 : vector<16x128xf32> to vector<16x128xbf16>
    %293 = vector.broadcast %289 : vector<1x128xf32> to vector<16x128xf32>
    %294 = arith.mulf %264, %293 : vector<16x128xf32>
    %295 = arith.truncf %294 : vector<16x128xf32> to vector<16x128xbf16>
    %cst_102 = arith.constant dense<0.000000e+00> : vector<16x16xf32>
    %296 = tpu.matmul %292, %265, %cst_102 {dimension_numbers = #tpu.dot_dimension_numbers<[1], [1], [0], [0], [0, 0, 1, 0], [], []>} : vector<16x128xbf16>, vector<16x128xbf16>, vector<16x16xf32> -> vector<16x16xf32>
    %297 = arith.addf %296, %1 : vector<16x16xf32>
    %cst_103 = arith.constant dense<0xFF800000> : vector<16xf32>
    %298 = vector.multi_reduction <maximumf>, %297, %cst_103 [1] : vector<16x16xf32> to vector<16xf32>
    %299 = vector.shape_cast %298 : vector<16xf32> to vector<16x1xf32>
    %300 = vector.broadcast %299 : vector<16x1xf32> to vector<16x16xf32>
    %301 = arith.subf %297, %300 : vector<16x16xf32>
    %302 = math.exp %301 : vector<16x16xf32>
    %cst_104 = arith.constant dense<0.000000e+00> : vector<16xf32>
    %303 = vector.multi_reduction <add>, %302, %cst_104 [1] : vector<16x16xf32> to vector<16xf32>
    %304 = vector.shape_cast %303 : vector<16xf32> to vector<16x1xf32>
    %305 = tpu.reciprocal %304 {approx = true} : vector<16x1xf32> -> vector<16x1xf32>
    %306 = vector.broadcast %305 : vector<16x1xf32> to vector<16x16xf32>
    %307 = arith.mulf %302, %306 : vector<16x16xf32>
    %308 = arith.truncf %307 : vector<16x16xf32> to vector<16x16xbf16>
    %cst_105 = arith.constant dense<0.000000e+00> : vector<16x128xf32>
    %309 = tpu.matmul %308, %295, %cst_105 {dimension_numbers = #tpu.dot_dimension_numbers<[1], [0], [0], [1], [0, 0, 1, 1], [], []>} : vector<16x16xbf16>, vector<16x128xbf16>, vector<16x128xf32> -> vector<16x128xf32>
    %310 = arith.addf %288, %309 : vector<16x128xf32>
    %311 = vector.extract_strided_slice %2 {offsets = [2, 0], sizes = [1, 128], strides = [1, 1]} : vector<6x128xf32> to vector<1x128xf32>
    %312 = vector.broadcast %311 : vector<1x128xf32> to vector<16x128xf32>
    %313 = arith.mulf %262, %312 : vector<16x128xf32>
    %314 = arith.truncf %313 : vector<16x128xf32> to vector<16x128xbf16>
    %315 = vector.broadcast %311 : vector<1x128xf32> to vector<16x128xf32>
    %316 = arith.mulf %264, %315 : vector<16x128xf32>
    %317 = arith.truncf %316 : vector<16x128xf32> to vector<16x128xbf16>
    %cst_106 = arith.constant dense<0.000000e+00> : vector<16x16xf32>
    %318 = tpu.matmul %314, %265, %cst_106 {dimension_numbers = #tpu.dot_dimension_numbers<[1], [1], [0], [0], [0, 0, 1, 0], [], []>} : vector<16x128xbf16>, vector<16x128xbf16>, vector<16x16xf32> -> vector<16x16xf32>
    %319 = arith.addf %318, %1 : vector<16x16xf32>
    %cst_107 = arith.constant dense<0xFF800000> : vector<16xf32>
    %320 = vector.multi_reduction <maximumf>, %319, %cst_107 [1] : vector<16x16xf32> to vector<16xf32>
    %321 = vector.shape_cast %320 : vector<16xf32> to vector<16x1xf32>
    %322 = vector.broadcast %321 : vector<16x1xf32> to vector<16x16xf32>
    %323 = arith.subf %319, %322 : vector<16x16xf32>
    %324 = math.exp %323 : vector<16x16xf32>
    %cst_108 = arith.constant dense<0.000000e+00> : vector<16xf32>
    %325 = vector.multi_reduction <add>, %324, %cst_108 [1] : vector<16x16xf32> to vector<16xf32>
    %326 = vector.shape_cast %325 : vector<16xf32> to vector<16x1xf32>
    %327 = tpu.reciprocal %326 {approx = true} : vector<16x1xf32> -> vector<16x1xf32>
    %328 = vector.broadcast %327 : vector<16x1xf32> to vector<16x16xf32>
    %329 = arith.mulf %324, %328 : vector<16x16xf32>
    %330 = arith.truncf %329 : vector<16x16xf32> to vector<16x16xbf16>
    %cst_109 = arith.constant dense<0.000000e+00> : vector<16x128xf32>
    %331 = tpu.matmul %330, %317, %cst_109 {dimension_numbers = #tpu.dot_dimension_numbers<[1], [0], [0], [1], [0, 0, 1, 1], [], []>} : vector<16x16xbf16>, vector<16x128xbf16>, vector<16x128xf32> -> vector<16x128xf32>
    %332 = arith.addf %310, %331 : vector<16x128xf32>
    %333 = vector.extract_strided_slice %2 {offsets = [3, 0], sizes = [1, 128], strides = [1, 1]} : vector<6x128xf32> to vector<1x128xf32>
    %334 = vector.broadcast %333 : vector<1x128xf32> to vector<16x128xf32>
    %335 = arith.mulf %262, %334 : vector<16x128xf32>
    %336 = arith.truncf %335 : vector<16x128xf32> to vector<16x128xbf16>
    %337 = vector.broadcast %333 : vector<1x128xf32> to vector<16x128xf32>
    %338 = arith.mulf %264, %337 : vector<16x128xf32>
    %339 = arith.truncf %338 : vector<16x128xf32> to vector<16x128xbf16>
    %cst_110 = arith.constant dense<0.000000e+00> : vector<16x16xf32>
    %340 = tpu.matmul %336, %265, %cst_110 {dimension_numbers = #tpu.dot_dimension_numbers<[1], [1], [0], [0], [0, 0, 1, 0], [], []>} : vector<16x128xbf16>, vector<16x128xbf16>, vector<16x16xf32> -> vector<16x16xf32>
    %341 = arith.addf %340, %1 : vector<16x16xf32>
    %cst_111 = arith.constant dense<0xFF800000> : vector<16xf32>
    %342 = vector.multi_reduction <maximumf>, %341, %cst_111 [1] : vector<16x16xf32> to vector<16xf32>
    %343 = vector.shape_cast %342 : vector<16xf32> to vector<16x1xf32>
    %344 = vector.broadcast %343 : vector<16x1xf32> to vector<16x16xf32>
    %345 = arith.subf %341, %344 : vector<16x16xf32>
    %346 = math.exp %345 : vector<16x16xf32>
    %cst_112 = arith.constant dense<0.000000e+00> : vector<16xf32>
    %347 = vector.multi_reduction <add>, %346, %cst_112 [1] : vector<16x16xf32> to vector<16xf32>
    %348 = vector.shape_cast %347 : vector<16xf32> to vector<16x1xf32>
    %349 = tpu.reciprocal %348 {approx = true} : vector<16x1xf32> -> vector<16x1xf32>
    %350 = vector.broadcast %349 : vector<16x1xf32> to vector<16x16xf32>
    %351 = arith.mulf %346, %350 : vector<16x16xf32>
    %352 = arith.truncf %351 : vector<16x16xf32> to vector<16x16xbf16>
    %cst_113 = arith.constant dense<0.000000e+00> : vector<16x128xf32>
    %353 = tpu.matmul %352, %339, %cst_113 {dimension_numbers = #tpu.dot_dimension_numbers<[1], [0], [0], [1], [0, 0, 1, 1], [], []>} : vector<16x16xbf16>, vector<16x128xbf16>, vector<16x128xf32> -> vector<16x128xf32>
    %354 = arith.addf %332, %353 : vector<16x128xf32>
    %355 = vector.extract_strided_slice %2 {offsets = [4, 0], sizes = [1, 128], strides = [1, 1]} : vector<6x128xf32> to vector<1x128xf32>
    %356 = vector.broadcast %355 : vector<1x128xf32> to vector<16x128xf32>
    %357 = arith.mulf %262, %356 : vector<16x128xf32>
    %358 = arith.truncf %357 : vector<16x128xf32> to vector<16x128xbf16>
    %359 = vector.broadcast %355 : vector<1x128xf32> to vector<16x128xf32>
    %360 = arith.mulf %264, %359 : vector<16x128xf32>
    %361 = arith.truncf %360 : vector<16x128xf32> to vector<16x128xbf16>
    %cst_114 = arith.constant dense<0.000000e+00> : vector<16x16xf32>
    %362 = tpu.matmul %358, %265, %cst_114 {dimension_numbers = #tpu.dot_dimension_numbers<[1], [1], [0], [0], [0, 0, 1, 0], [], []>} : vector<16x128xbf16>, vector<16x128xbf16>, vector<16x16xf32> -> vector<16x16xf32>
    %363 = arith.addf %362, %1 : vector<16x16xf32>
    %cst_115 = arith.constant dense<0xFF800000> : vector<16xf32>
    %364 = vector.multi_reduction <maximumf>, %363, %cst_115 [1] : vector<16x16xf32> to vector<16xf32>
    %365 = vector.shape_cast %364 : vector<16xf32> to vector<16x1xf32>
    %366 = vector.broadcast %365 : vector<16x1xf32> to vector<16x16xf32>
    %367 = arith.subf %363, %366 : vector<16x16xf32>
    %368 = math.exp %367 : vector<16x16xf32>
    %cst_116 = arith.constant dense<0.000000e+00> : vector<16xf32>
    %369 = vector.multi_reduction <add>, %368, %cst_116 [1] : vector<16x16xf32> to vector<16xf32>
    %370 = vector.shape_cast %369 : vector<16xf32> to vector<16x1xf32>
    %371 = tpu.reciprocal %370 {approx = true} : vector<16x1xf32> -> vector<16x1xf32>
    %372 = vector.broadcast %371 : vector<16x1xf32> to vector<16x16xf32>
    %373 = arith.mulf %368, %372 : vector<16x16xf32>
    %374 = arith.truncf %373 : vector<16x16xf32> to vector<16x16xbf16>
    %cst_117 = arith.constant dense<0.000000e+00> : vector<16x128xf32>
    %375 = tpu.matmul %374, %361, %cst_117 {dimension_numbers = #tpu.dot_dimension_numbers<[1], [0], [0], [1], [0, 0, 1, 1], [], []>} : vector<16x16xbf16>, vector<16x128xbf16>, vector<16x128xf32> -> vector<16x128xf32>
    %376 = arith.addf %354, %375 : vector<16x128xf32>
    %377 = vector.extract_strided_slice %2 {offsets = [5, 0], sizes = [1, 128], strides = [1, 1]} : vector<6x128xf32> to vector<1x128xf32>
    %378 = vector.broadcast %377 : vector<1x128xf32> to vector<16x128xf32>
    %379 = arith.mulf %262, %378 : vector<16x128xf32>
    %380 = arith.truncf %379 : vector<16x128xf32> to vector<16x128xbf16>
    %381 = vector.broadcast %377 : vector<1x128xf32> to vector<16x128xf32>
    %382 = arith.mulf %264, %381 : vector<16x128xf32>
    %383 = arith.truncf %382 : vector<16x128xf32> to vector<16x128xbf16>
    %cst_118 = arith.constant dense<0.000000e+00> : vector<16x16xf32>
    %384 = tpu.matmul %380, %265, %cst_118 {dimension_numbers = #tpu.dot_dimension_numbers<[1], [1], [0], [0], [0, 0, 1, 0], [], []>} : vector<16x128xbf16>, vector<16x128xbf16>, vector<16x16xf32> -> vector<16x16xf32>
    %385 = arith.addf %384, %1 : vector<16x16xf32>
    %cst_119 = arith.constant dense<0xFF800000> : vector<16xf32>
    %386 = vector.multi_reduction <maximumf>, %385, %cst_119 [1] : vector<16x16xf32> to vector<16xf32>
    %387 = vector.shape_cast %386 : vector<16xf32> to vector<16x1xf32>
    %388 = vector.broadcast %387 : vector<16x1xf32> to vector<16x16xf32>
    %389 = arith.subf %385, %388 : vector<16x16xf32>
    %390 = math.exp %389 : vector<16x16xf32>
    %cst_120 = arith.constant dense<0.000000e+00> : vector<16xf32>
    %391 = vector.multi_reduction <add>, %390, %cst_120 [1] : vector<16x16xf32> to vector<16xf32>
    %392 = vector.shape_cast %391 : vector<16xf32> to vector<16x1xf32>
    %393 = tpu.reciprocal %392 {approx = true} : vector<16x1xf32> -> vector<16x1xf32>
    %394 = vector.broadcast %393 : vector<16x1xf32> to vector<16x16xf32>
    %395 = arith.mulf %390, %394 : vector<16x16xf32>
    %396 = arith.truncf %395 : vector<16x16xf32> to vector<16x16xbf16>
    %cst_121 = arith.constant dense<0.000000e+00> : vector<16x128xf32>
    %397 = tpu.matmul %396, %383, %cst_121 {dimension_numbers = #tpu.dot_dimension_numbers<[1], [0], [0], [1], [0, 0, 1, 1], [], []>} : vector<16x16xbf16>, vector<16x128xbf16>, vector<16x128xf32> -> vector<16x128xf32>
    %398 = arith.addf %376, %397 : vector<16x128xf32>
    %c1_122 = arith.constant 1 : index
    %c0_123 = arith.constant 0 : index
    %c0_124 = arith.constant 0 : index
    %399 = vector.load %arg8[%c1_122, %c0_123, %c0_124] : memref<2x128x128xbf16, #tpu.memory_space<vmem>>, vector<1x128x128xbf16>
    %400 = vector.shape_cast %399 : vector<1x128x128xbf16> to vector<128x128xbf16>
    %c1_125 = arith.constant 1 : index
    %c0_126 = arith.constant 0 : index
    %c0_127 = arith.constant 0 : index
    %401 = vector.load %arg9[%c1_125, %c0_126, %c0_127] : memref<2x1x128xf32, #tpu.memory_space<vmem>>, vector<1x1x128xf32>
    %402 = vector.shape_cast %401 : vector<1x1x128xf32> to vector<1x128xf32>
    %403 = arith.truncf %398 : vector<16x128xf32> to vector<16x128xbf16>
    %cst_128 = arith.constant dense<0.000000e+00> : vector<16x128xf32>
    %404 = tpu.matmul %403, %400, %cst_128 {dimension_numbers = #tpu.dot_dimension_numbers<[1], [0], [0], [1], [0, 0, 1, 1], [], []>} : vector<16x128xbf16>, vector<128x128xbf16>, vector<16x128xf32> -> vector<16x128xf32>
    %405 = vector.broadcast %402 : vector<1x128xf32> to vector<16x128xf32>
    %406 = arith.addf %404, %405 : vector<16x128xf32>
    %407 = arith.addf %227, %406 : vector<16x128xf32>
    %c1_129 = arith.constant 1 : index
    %c0_130 = arith.constant 0 : index
    %c0_131 = arith.constant 0 : index
    %408 = vector.load %arg10[%c1_129, %c0_130, %c0_131] : memref<2x1x128xf32, #tpu.memory_space<vmem>>, vector<1x1x128xf32>
    %409 = vector.shape_cast %408 : vector<1x1x128xf32> to vector<1x128xf32>
    %c1_132 = arith.constant 1 : index
    %c0_133 = arith.constant 0 : index
    %c0_134 = arith.constant 0 : index
    %410 = vector.load %arg11[%c1_132, %c0_133, %c0_134] : memref<2x1x128xf32, #tpu.memory_space<vmem>>, vector<1x1x128xf32>
    %411 = vector.shape_cast %410 : vector<1x1x128xf32> to vector<1x128xf32>
    %cst_135 = arith.constant dense<0.000000e+00> : vector<16xf32>
    %412 = vector.multi_reduction <add>, %407, %cst_135 [1] : vector<16x128xf32> to vector<16xf32>
    %413 = vector.shape_cast %412 : vector<16xf32> to vector<16x1xf32>
    %cst_136 = arith.constant 0.020833334 : f32
    %414 = vector.broadcast %cst_136 : f32 to vector<16x1xf32>
    %415 = arith.mulf %413, %414 : vector<16x1xf32>
    %416 = arith.mulf %407, %407 : vector<16x128xf32>
    %cst_137 = arith.constant dense<0.000000e+00> : vector<16xf32>
    %417 = vector.multi_reduction <add>, %416, %cst_137 [1] : vector<16x128xf32> to vector<16xf32>
    %418 = vector.shape_cast %417 : vector<16xf32> to vector<16x1xf32>
    %cst_138 = arith.constant 0.020833334 : f32
    %419 = vector.broadcast %cst_138 : f32 to vector<16x1xf32>
    %420 = arith.mulf %418, %419 : vector<16x1xf32>
    %421 = arith.mulf %415, %415 : vector<16x1xf32>
    %422 = arith.subf %420, %421 : vector<16x1xf32>
    %423 = vector.broadcast %415 : vector<16x1xf32> to vector<16x128xf32>
    %424 = arith.subf %407, %423 : vector<16x128xf32>
    %cst_139 = arith.constant 9.99999974E-6 : f32
    %425 = vector.broadcast %cst_139 : f32 to vector<16x1xf32>
    %426 = arith.addf %422, %425 : vector<16x1xf32>
    %427 = math.rsqrt %426 : vector<16x1xf32>
    %428 = vector.broadcast %427 : vector<16x1xf32> to vector<16x128xf32>
    %429 = arith.mulf %424, %428 : vector<16x128xf32>
    %430 = vector.broadcast %409 : vector<1x128xf32> to vector<16x128xf32>
    %431 = arith.mulf %429, %430 : vector<16x128xf32>
    %432 = vector.broadcast %411 : vector<1x128xf32> to vector<16x128xf32>
    %433 = arith.addf %431, %432 : vector<16x128xf32>
    %c1_140 = arith.constant 1 : index
    %c0_141 = arith.constant 0 : index
    %c0_142 = arith.constant 0 : index
    %434 = vector.load %arg12[%c1_140, %c0_141, %c0_142] : memref<2x128x256xbf16, #tpu.memory_space<vmem>>, vector<1x128x256xbf16>
    %435 = vector.shape_cast %434 : vector<1x128x256xbf16> to vector<128x256xbf16>
    %c1_143 = arith.constant 1 : index
    %c0_144 = arith.constant 0 : index
    %c0_145 = arith.constant 0 : index
    %436 = vector.load %arg13[%c1_143, %c0_144, %c0_145] : memref<2x1x256xf32, #tpu.memory_space<vmem>>, vector<1x1x256xf32>
    %437 = vector.shape_cast %436 : vector<1x1x256xf32> to vector<1x256xf32>
    %438 = arith.truncf %433 : vector<16x128xf32> to vector<16x128xbf16>
    %cst_146 = arith.constant dense<0.000000e+00> : vector<16x256xf32>
    %439 = tpu.matmul %438, %435, %cst_146 {dimension_numbers = #tpu.dot_dimension_numbers<[1], [0], [0], [1], [0, 0, 1, 1], [], []>} : vector<16x128xbf16>, vector<128x256xbf16>, vector<16x256xf32> -> vector<16x256xf32>
    %440 = vector.broadcast %437 : vector<1x256xf32> to vector<16x256xf32>
    %441 = arith.addf %439, %440 : vector<16x256xf32>
    %cst_147 = arith.constant 0.000000e+00 : f32
    %442 = vector.broadcast %cst_147 : f32 to vector<16x256xf32>
    %443 = arith.maximumf %441, %442 : vector<16x256xf32>
    %c1_148 = arith.constant 1 : index
    %c0_149 = arith.constant 0 : index
    %c0_150 = arith.constant 0 : index
    %444 = vector.load %arg14[%c1_148, %c0_149, %c0_150] : memref<2x256x128xbf16, #tpu.memory_space<vmem>>, vector<1x256x128xbf16>
    %445 = vector.shape_cast %444 : vector<1x256x128xbf16> to vector<256x128xbf16>
    %c1_151 = arith.constant 1 : index
    %c0_152 = arith.constant 0 : index
    %c0_153 = arith.constant 0 : index
    %446 = vector.load %arg15[%c1_151, %c0_152, %c0_153] : memref<2x1x128xf32, #tpu.memory_space<vmem>>, vector<1x1x128xf32>
    %447 = vector.shape_cast %446 : vector<1x1x128xf32> to vector<1x128xf32>
    %448 = arith.truncf %443 : vector<16x256xf32> to vector<16x256xbf16>
    %cst_154 = arith.constant dense<0.000000e+00> : vector<16x128xf32>
    %449 = tpu.matmul %448, %445, %cst_154 {dimension_numbers = #tpu.dot_dimension_numbers<[1], [0], [0], [1], [0, 0, 1, 1], [], []>} : vector<16x256xbf16>, vector<256x128xbf16>, vector<16x128xf32> -> vector<16x128xf32>
    %450 = vector.broadcast %447 : vector<1x128xf32> to vector<16x128xf32>
    %451 = arith.addf %449, %450 : vector<16x128xf32>
    %452 = arith.addf %407, %451 : vector<16x128xf32>
    %c0_155 = arith.constant 0 : index
    %c0_156 = arith.constant 0 : index
    %453 = vector.load %arg16[%c0_155, %c0_156] : memref<1x128xf32, #tpu.memory_space<vmem>>, vector<1x128xf32>
    %c0_157 = arith.constant 0 : index
    %c0_158 = arith.constant 0 : index
    %454 = vector.load %arg17[%c0_157, %c0_158] : memref<1x128xf32, #tpu.memory_space<vmem>>, vector<1x128xf32>
    %cst_159 = arith.constant dense<0.000000e+00> : vector<16xf32>
    %455 = vector.multi_reduction <add>, %452, %cst_159 [1] : vector<16x128xf32> to vector<16xf32>
    %456 = vector.shape_cast %455 : vector<16xf32> to vector<16x1xf32>
    %cst_160 = arith.constant 0.020833334 : f32
    %457 = vector.broadcast %cst_160 : f32 to vector<16x1xf32>
    %458 = arith.mulf %456, %457 : vector<16x1xf32>
    %459 = arith.mulf %452, %452 : vector<16x128xf32>
    %cst_161 = arith.constant dense<0.000000e+00> : vector<16xf32>
    %460 = vector.multi_reduction <add>, %459, %cst_161 [1] : vector<16x128xf32> to vector<16xf32>
    %461 = vector.shape_cast %460 : vector<16xf32> to vector<16x1xf32>
    %cst_162 = arith.constant 0.020833334 : f32
    %462 = vector.broadcast %cst_162 : f32 to vector<16x1xf32>
    %463 = arith.mulf %461, %462 : vector<16x1xf32>
    %464 = arith.mulf %458, %458 : vector<16x1xf32>
    %465 = arith.subf %463, %464 : vector<16x1xf32>
    %466 = vector.broadcast %458 : vector<16x1xf32> to vector<16x128xf32>
    %467 = arith.subf %452, %466 : vector<16x128xf32>
    %cst_163 = arith.constant 9.99999974E-6 : f32
    %468 = vector.broadcast %cst_163 : f32 to vector<16x1xf32>
    %469 = arith.addf %465, %468 : vector<16x1xf32>
    %470 = math.rsqrt %469 : vector<16x1xf32>
    %471 = vector.broadcast %470 : vector<16x1xf32> to vector<16x128xf32>
    %472 = arith.mulf %467, %471 : vector<16x128xf32>
    %473 = vector.broadcast %453 : vector<1x128xf32> to vector<16x128xf32>
    %474 = arith.mulf %472, %473 : vector<16x128xf32>
    %475 = vector.broadcast %454 : vector<1x128xf32> to vector<16x128xf32>
    %476 = arith.addf %474, %475 : vector<16x128xf32>
    %c0_164 = arith.constant 0 : index
    %c0_165 = arith.constant 0 : index
    %477 = vector.load %arg18[%c0_164, %c0_165] : memref<128x128xbf16, #tpu.memory_space<vmem>>, vector<128x128xbf16>
    %c0_166 = arith.constant 0 : index
    %c0_167 = arith.constant 0 : index
    %478 = vector.load %arg19[%c0_166, %c0_167] : memref<1x128xf32, #tpu.memory_space<vmem>>, vector<1x128xf32>
    %479 = arith.truncf %476 : vector<16x128xf32> to vector<16x128xbf16>
    %cst_168 = arith.constant dense<0.000000e+00> : vector<16x128xf32>
    %480 = tpu.matmul %479, %477, %cst_168 {dimension_numbers = #tpu.dot_dimension_numbers<[1], [0], [0], [1], [0, 0, 1, 1], [], []>} : vector<16x128xbf16>, vector<128x128xbf16>, vector<16x128xf32> -> vector<16x128xf32>
    %481 = vector.broadcast %478 : vector<1x128xf32> to vector<16x128xf32>
    %482 = arith.addf %480, %481 : vector<16x128xf32>
    %c0_169 = arith.constant 0 : index
    %c0_170 = arith.constant 0 : index
    %483 = vector.load %arg20[%c0_169, %c0_170] : memref<16x128xf32, #tpu.memory_space<vmem>>, vector<16x128xf32>
    tpu.vector_store %arg20[%c0_169, %c0_170], %482 {strides = array<i32>} : memref<16x128xf32, #tpu.memory_space<vmem>>, vector<16x128xf32>,
    return
  }
  func.func @transform_0(%arg0: i32) -> (i32, i32) {
    %c0_i32 = arith.constant 0 : i32
    %c0_i32_0 = arith.constant 0 : i32
    %c0_i32_1 = arith.constant 0 : i32
    return %c0_i32, %c0_i32_0 : i32, i32
  }
  func.func @transform_1(%arg0: i32) -> (i32, i32) {
    %c0_i32 = arith.constant 0 : i32
    %c0_i32_0 = arith.constant 0 : i32
    %c0_i32_1 = arith.constant 0 : i32
    return %c0_i32, %c0_i32_0 : i32, i32
  }
  func.func @transform_2(%arg0: i32) -> (i32, i32) {
    %c0_i32 = arith.constant 0 : i32
    %c0_i32_0 = arith.constant 0 : i32
    %c0_i32_1 = arith.constant 0 : i32
    return %c0_i32, %c0_i32_0 : i32, i32
  }
  func.func @transform_3(%arg0: i32) -> (i32, i32, i32) {
    %c0_i32 = arith.constant 0 : i32
    %c0_i32_0 = arith.constant 0 : i32
    %c0_i32_1 = arith.constant 0 : i32
    %c0_i32_2 = arith.constant 0 : i32
    return %c0_i32, %c0_i32_0, %c0_i32_1 : i32, i32, i32
  }
  func.func @transform_4(%arg0: i32) -> (i32, i32, i32) {
    %c0_i32 = arith.constant 0 : i32
    %c0_i32_0 = arith.constant 0 : i32
    %c0_i32_1 = arith.constant 0 : i32
    %c0_i32_2 = arith.constant 0 : i32
    return %c0_i32, %c0_i32_0, %c0_i32_1 : i32, i32, i32
  }
  func.func @transform_5(%arg0: i32) -> (i32, i32, i32) {
    %c0_i32 = arith.constant 0 : i32
    %c0_i32_0 = arith.constant 0 : i32
    %c0_i32_1 = arith.constant 0 : i32
    %c0_i32_2 = arith.constant 0 : i32
    return %c0_i32, %c0_i32_0, %c0_i32_1 : i32, i32, i32
  }
  func.func @transform_6(%arg0: i32) -> (i32, i32, i32) {
    %c0_i32 = arith.constant 0 : i32
    %c0_i32_0 = arith.constant 0 : i32
    %c0_i32_1 = arith.constant 0 : i32
    %c0_i32_2 = arith.constant 0 : i32
    return %c0_i32, %c0_i32_0, %c0_i32_1 : i32, i32, i32
  }
  func.func @transform_7(%arg0: i32) -> (i32, i32, i32) {
    %c0_i32 = arith.constant 0 : i32
    %c0_i32_0 = arith.constant 0 : i32
    %c0_i32_1 = arith.constant 0 : i32
    %c0_i32_2 = arith.constant 0 : i32
    return %c0_i32, %c0_i32_0, %c0_i32_1 : i32, i32, i32
  }
  func.func @transform_8(%arg0: i32) -> (i32, i32, i32) {
    %c0_i32 = arith.constant 0 : i32
    %c0_i32_0 = arith.constant 0 : i32
    %c0_i32_1 = arith.constant 0 : i32
    %c0_i32_2 = arith.constant 0 : i32
    return %c0_i32, %c0_i32_0, %c0_i32_1 : i32, i32, i32
  }
  func.func @transform_9(%arg0: i32) -> (i32, i32, i32) {
    %c0_i32 = arith.constant 0 : i32
    %c0_i32_0 = arith.constant 0 : i32
    %c0_i32_1 = arith.constant 0 : i32
    %c0_i32_2 = arith.constant 0 : i32
    return %c0_i32, %c0_i32_0, %c0_i32_1 : i32, i32, i32
  }
  func.func @transform_10(%arg0: i32) -> (i32, i32, i32) {
    %c0_i32 = arith.constant 0 : i32
    %c0_i32_0 = arith.constant 0 : i32
    %c0_i32_1 = arith.constant 0 : i32
    %c0_i32_2 = arith.constant 0 : i32
    return %c0_i32, %c0_i32_0, %c0_i32_1 : i32, i32, i32
  }
  func.func @transform_11(%arg0: i32) -> (i32, i32, i32) {
    %c0_i32 = arith.constant 0 : i32
    %c0_i32_0 = arith.constant 0 : i32
    %c0_i32_1 = arith.constant 0 : i32
    %c0_i32_2 = arith.constant 0 : i32
    return %c0_i32, %c0_i32_0, %c0_i32_1 : i32, i32, i32
  }
  func.func @transform_12(%arg0: i32) -> (i32, i32, i32) {
    %c0_i32 = arith.constant 0 : i32
    %c0_i32_0 = arith.constant 0 : i32
    %c0_i32_1 = arith.constant 0 : i32
    %c0_i32_2 = arith.constant 0 : i32
    return %c0_i32, %c0_i32_0, %c0_i32_1 : i32, i32, i32
  }
  func.func @transform_13(%arg0: i32) -> (i32, i32, i32) {
    %c0_i32 = arith.constant 0 : i32
    %c0_i32_0 = arith.constant 0 : i32
    %c0_i32_1 = arith.constant 0 : i32
    %c0_i32_2 = arith.constant 0 : i32
    return %c0_i32, %c0_i32_0, %c0_i32_1 : i32, i32, i32
  }
  func.func @transform_14(%arg0: i32) -> (i32, i32, i32) {
    %c0_i32 = arith.constant 0 : i32
    %c0_i32_0 = arith.constant 0 : i32
    %c0_i32_1 = arith.constant 0 : i32
    %c0_i32_2 = arith.constant 0 : i32
    return %c0_i32, %c0_i32_0, %c0_i32_1 : i32, i32, i32
  }
  func.func @transform_15(%arg0: i32) -> (i32, i32) {
    %c0_i32 = arith.constant 0 : i32
    %c0_i32_0 = arith.constant 0 : i32
    %c0_i32_1 = arith.constant 0 : i32
    return %c0_i32, %c0_i32_0 : i32, i32
  }
  func.func @transform_16(%arg0: i32) -> (i32, i32) {
    %c0_i32 = arith.constant 0 : i32
    %c0_i32_0 = arith.constant 0 : i32
    %c0_i32_1 = arith.constant 0 : i32
    return %c0_i32, %c0_i32_0 : i32, i32
  }
  func.func @transform_17(%arg0: i32) -> (i32, i32) {
    %c0_i32 = arith.constant 0 : i32
    %c0_i32_0 = arith.constant 0 : i32
    %c0_i32_1 = arith.constant 0 : i32
    return %c0_i32, %c0_i32_0 : i32, i32
  }
  func.func @transform_18(%arg0: i32) -> (i32, i32) {
    %c0_i32 = arith.constant 0 : i32
    %c0_i32_0 = arith.constant 0 : i32
    %c0_i32_1 = arith.constant 0 : i32
    return %c0_i32, %c0_i32_0 : i32, i32
  }
  func.func @transform_19(%arg0: i32) -> (i32, i32) {
    %c0_i32 = arith.constant 0 : i32
    %c0_i32_0 = arith.constant 0 : i32
    %c0_i32_1 = arith.constant 0 : i32
    return %c0_i32, %c0_i32_0 : i32, i32
  }
}

</mosaic_0001>

<llo_original>
// kernel: tpu_custom_call.1
$region0: #{tpu_custom_call.1}
  #allocation0 [shape = 'u32[]', space=smem, size = 0x4, offset = 0x4, fixed_abs, tag = 'smem constant byte address 0x4 - core index']
  #allocation1 [shape = 'u32[144,128]{1,0:T(1,128)}', space=vmem, size = 0x12000, scoped, tag = 'internal scratch']
  %s0 = inlined_call_operand.hbm [shape: f32[16,128], index: 0, kind: input, shape index: {}]
  %s1 = inlined_call_operand.hbm [shape: f32[16,16], index: 1, kind: input, shape index: {}]
  %s2 = inlined_call_operand.hbm [shape: f32[6,128], index: 2, kind: input, shape index: {}]
  %s3 = inlined_call_operand.hbm [shape: f32[2,1,128], index: 3, kind: input, shape index: {}]
  %s4 = inlined_call_operand.hbm [shape: f32[2,1,128], index: 4, kind: input, shape index: {}]
  %s5 = inlined_call_operand.hbm [shape: bf16[2,128,384], index: 5, kind: input, shape index: {}]
  %s6 = inlined_call_operand.vmem [shape: f32[2,1,384], index: 6, kind: input, shape index: {}]
  %s7 = inlined_call_operand.hbm [shape: bf16[2,128,128], index: 7, kind: input, shape index: {}]
  %s8 = inlined_call_operand.vmem [shape: f32[2,1,128], index: 8, kind: input, shape index: {}]
  %s9 = inlined_call_operand.vmem [shape: f32[2,1,128], index: 9, kind: input, shape index: {}]
  %s10 = inlined_call_operand.vmem [shape: f32[2,1,128], index: 10, kind: input, shape index: {}]
  %s11 = inlined_call_operand.hbm [shape: bf16[2,128,256], index: 11, kind: input, shape index: {}]
  %s12 = inlined_call_operand.vmem [shape: f32[2,1,256], index: 12, kind: input, shape index: {}]
  %s13 = inlined_call_operand.hbm [shape: bf16[2,256,128], index: 13, kind: input, shape index: {}]
  %s14 = inlined_call_operand.vmem [shape: f32[2,1,128], index: 14, kind: input, shape index: {}]
  %s15 = inlined_call_operand.vmem [shape: f32[1,128], index: 15, kind: input, shape index: {}]
  %s16 = inlined_call_operand.vmem [shape: f32[1,128], index: 16, kind: input, shape index: {}]
  %s17 = inlined_call_operand.hbm [shape: bf16[128,128], index: 17, kind: input, shape index: {}]
  %s18 = inlined_call_operand.vmem [shape: f32[1,128], index: 18, kind: input, shape index: {}]
  %s19 = inlined_call_operand.hbm [shape: f32[16,128], index: 19, kind: output, shape index: {}]
  %s20 = sld [smem:[#allocation0]]
  $region126: #{tpu_custom_call.1} parent=0
    _
  %s22 = ssub.s32 1, %s20
  %s23 = scalar_select 0, %s22, %s20
  $region1: #{tpu_custom_call.1} parent=0
    #allocation2 [shape = 'u8[8192]{0}', space=vmem, size = 0x2000, scoped, tag = 'input window, operand 0, single buffered']
    #allocation3 [shape = 's32[1]{0}', space=sflag, size = 0x4, scoped, tag = 'scoped memory for tpu_custom_call.1']
    #allocation4 [shape = 's32[1]{0}', space=sflag, size = 0x4, scoped, tag = 'scoped memory for tpu_custom_call.1']
    #allocation5 [shape = 'u8[8192]{0}', space=vmem, size = 0x2000, scoped, tag = 'input window, operand 1, single buffered']
    #allocation6 [shape = 's32[1]{0}', space=sflag, size = 0x4, scoped, tag = 'scoped memory for tpu_custom_call.1']
    #allocation7 [shape = 'u8[4096]{0}', space=vmem, size = 0x1000, scoped, tag = 'input window, operand 2, single buffered']
    #allocation8 [shape = 'u8[1024]{0}', space=vmem, size = 0x400, scoped, tag = 'input window, operand 3, single buffered']
    #allocation9 [shape = 's32[1]{0}', space=sflag, size = 0x4, scoped, tag = 'scoped memory for tpu_custom_call.1']
    #allocation10 [shape = 'u8[1024]{0}', space=vmem, size = 0x400, scoped, tag = 'input window, operand 4, single buffered']
    #allocation11 [shape = 'u8[196608]{0}', space=vmem, size = 0x30000, scoped, tag = 'input window, operand 5, single buffered']
    #allocation12 [shape = 's32[1]{0}', space=sflag, size = 0x4, scoped, tag = 'scoped memory for tpu_custom_call.1']
    #allocation13 [shape = 'u8[65536]{0}', space=vmem, size = 0x10000, scoped, tag = 'input window, operand 7, single buffered']
    #allocation14 [shape = 'u8[131072]{0}', space=vmem, size = 0x20000, scoped, tag = 'input window, operand 11, single buffered']
    #allocation15 [shape = 's32[1]{0}', space=sflag, size = 0x4, scoped, tag = 'scoped memory for tpu_custom_call.1']
    #allocation16 [shape = 'u8[131072]{0}', space=vmem, size = 0x20000, scoped, tag = 'input window, operand 13, single buffered']
    #allocation17 [shape = 'u8[32768]{0}', space=vmem, size = 0x8000, scoped, tag = 'input window, operand 17, single buffered']
    #allocation18 [shape = 's32[1]{0}', space=sflag, size = 0x4, scoped, tag = 'scoped memory for tpu_custom_call.1']
    #allocation19 [shape = 'u8[8192]{0}', space=vmem, size = 0x2000, scoped, tag = 'output window, operand 0, single buffered']
    %24 = vsyncpa [#allocation3], 0
    %25 = vsyncpa [#allocation6], 0
    %26 = vsyncpa [#allocation9], 0
    %27 = vsyncpa [#allocation12], 0
    %28 = vsyncpa [#allocation15], 0
    %29 = vsyncpa [#allocation18], 0
    %30 = vsyncpa [#allocation4], 0
    // Predicated region
    $region2: #{tpu_custom_call.1} parent=1 // pred_check
      _
    $region3: #{tpu_custom_call.1} parent=1 // pred_check_branch
      %32 = sbr.rel (0) target = $region5
    $region4: #{tpu_custom_call.1} parent=1 // pred_region
      %s34 = ssub.s32 256, 256
      %35 = vsyncadd [#allocation3], %s34
      %s36 = sshll.u32 [#allocation2], 4
      %s37 = int_to_ptr.vmem [resolvable:$true] %s36
      %42 = dma.hbm_to_vmem [thread:$0]  %s0, 256, %s37, [#allocation3], 128, 128, 8
    $region5: #{tpu_custom_call.1} parent=1 // pred_fallthru
      _
    // Predicated region
    $region6: #{tpu_custom_call.1} parent=1 // pred_check
      _
    $region7: #{tpu_custom_call.1} parent=1 // pred_check_branch
      %44 = sbr.rel (0) target = $region9
    $region8: #{tpu_custom_call.1} parent=1 // pred_region
      %s46 = ssub.s32 256, 256
      %47 = vsyncadd [#allocation6], %s46
      %s48 = sshll.u32 [#allocation5], 4
      %s49 = int_to_ptr.vmem [resolvable:$true] %s48
      %54 = dma.hbm_to_vmem [thread:$0]  %s1, 256, %s49, [#allocation6], 128, 128, 8
    $region9: #{tpu_custom_call.1} parent=1 // pred_fallthru
      _
    // Predicated region
    $region10: #{tpu_custom_call.1} parent=1 // pred_check
      _
    $region11: #{tpu_custom_call.1} parent=1 // pred_check_branch
      %56 = sbr.rel (0) target = $region13
    $region12: #{tpu_custom_call.1} parent=1 // pred_region
      %s58 = ssub.s32 128, 128
      %59 = vsyncadd [#allocation6], %s58
      %s61 = sshll.u32 [#allocation7], 4
      %s62 = int_to_ptr.vmem [resolvable:$true] %s61
      %64 = dma.hbm_to_vmem [thread:$0]  %s2, 128, %s62, [#allocation6]
    $region13: #{tpu_custom_call.1} parent=1 // pred_fallthru
      _
    // Predicated region
    $region14: #{tpu_custom_call.1} parent=1 // pred_check
      _
    $region15: #{tpu_custom_call.1} parent=1 // pred_check_branch
      %66 = sbr.rel (0) target = $region17
    $region16: #{tpu_custom_call.1} parent=1 // pred_region
      %s68 = ssub.s32 32, 32
      %69 = vsyncadd [#allocation9], %s68
      %s70 = sshll.u32 [#allocation8], 4
      %s71 = int_to_ptr.vmem [resolvable:$true] %s70
      %76 = dma.hbm_to_vmem [thread:$0]  %s3, 32, %s71, [#allocation9], 16, 16, 1
    $region17: #{tpu_custom_call.1} parent=1 // pred_fallthru
      _
    // Predicated region
    $region18: #{tpu_custom_call.1} parent=1 // pred_check
      _
    $region19: #{tpu_custom_call.1} parent=1 // pred_check_branch
      %78 = sbr.rel (0) target = $region21
    $region20: #{tpu_custom_call.1} parent=1 // pred_region
      %s80 = ssub.s32 32, 32
      %81 = vsyncadd [#allocation9], %s80
      %s82 = sshll.u32 [#allocation10], 4
      %s83 = int_to_ptr.vmem [resolvable:$true] %s82
      %88 = dma.hbm_to_vmem [thread:$0]  %s4, 32, %s83, [#allocation9], 16, 16, 1
    $region21: #{tpu_custom_call.1} parent=1 // pred_fallthru
      _
    // Predicated region
    $region22: #{tpu_custom_call.1} parent=1 // pred_check
      _
    $region23: #{tpu_custom_call.1} parent=1 // pred_check_branch
      %90 = sbr.rel (0) target = $region25
    $region24: #{tpu_custom_call.1} parent=1 // pred_region
      %s92 = ssub.s32 6144, 6144
      %93 = vsyncadd [#allocation12], %s92
      %s94 = sshll.u32 [#allocation11], 4
      %s95 = int_to_ptr.vmem [resolvable:$true] %s94
      %100 = dma.hbm_to_vmem [thread:$0]  %s5, 6144, %s95, [#allocation12], 192, 192, 12
    $region25: #{tpu_custom_call.1} parent=1 // pred_fallthru
      _
    // Predicated region
    $region26: #{tpu_custom_call.1} parent=1 // pred_check
      _
    $region27: #{tpu_custom_call.1} parent=1 // pred_check_branch
      %102 = sbr.rel (0) target = $region29
    $region28: #{tpu_custom_call.1} parent=1 // pred_region
      _
    $region29: #{tpu_custom_call.1} parent=1 // pred_fallthru
      _
    // Predicated region
    $region30: #{tpu_custom_call.1} parent=1 // pred_check
      _
    $region31: #{tpu_custom_call.1} parent=1 // pred_check_branch
      %104 = sbr.rel (0) target = $region33
    $region32: #{tpu_custom_call.1} parent=1 // pred_region
      %s106 = ssub.s32 2048, 2048
      %107 = vsyncadd [#allocation12], %s106
      %s108 = sshll.u32 [#allocation13], 4
      %s109 = int_to_ptr.vmem [resolvable:$true] %s108
      %114 = dma.hbm_to_vmem [thread:$0]  %s7, 2048, %s109, [#allocation12], 64, 64, 4
    $region33: #{tpu_custom_call.1} parent=1 // pred_fallthru
      _
    // Predicated region
    $region34: #{tpu_custom_call.1} parent=1 // pred_check
      _
    $region35: #{tpu_custom_call.1} parent=1 // pred_check_branch
      %116 = sbr.rel (0) target = $region37
    $region36: #{tpu_custom_call.1} parent=1 // pred_region
      _
    $region37: #{tpu_custom_call.1} parent=1 // pred_fallthru
      _
    // Predicated region
    $region38: #{tpu_custom_call.1} parent=1 // pred_check
      _
    $region39: #{tpu_custom_call.1} parent=1 // pred_check_branch
      %118 = sbr.rel (0) target = $region41
    $region40: #{tpu_custom_call.1} parent=1 // pred_region
      _
    $region41: #{tpu_custom_call.1} parent=1 // pred_fallthru
      _
    // Predicated region
    $region42: #{tpu_custom_call.1} parent=1 // pred_check
      _
    $region43: #{tpu_custom_call.1} parent=1 // pred_check_branch
      %120 = sbr.rel (0) target = $region45
    $region44: #{tpu_custom_call.1} parent=1 // pred_region
      _
    $region45: #{tpu_custom_call.1} parent=1 // pred_fallthru
      _
    // Predicated region
    $region46: #{tpu_custom_call.1} parent=1 // pred_check
      _
    $region47: #{tpu_custom_call.1} parent=1 // pred_check_branch
      %122 = sbr.rel (0) target = $region49
    $region48: #{tpu_custom_call.1} parent=1 // pred_region
      %s124 = ssub.s32 4096, 4096
      %125 = vsyncadd [#allocation15], %s124
      %s126 = sshll.u32 [#allocation14], 4
      %s127 = int_to_ptr.vmem [resolvable:$true] %s126
      %132 = dma.hbm_to_vmem [thread:$0]  %s11, 4096, %s127, [#allocation15], 128, 128, 8
    $region49: #{tpu_custom_call.1} parent=1 // pred_fallthru
      _
    // Predicated region
    $region50: #{tpu_custom_call.1} parent=1 // pred_check
      _
    $region51: #{tpu_custom_call.1} parent=1 // pred_check_branch
      %134 = sbr.rel (0) target = $region53
    $region52: #{tpu_custom_call.1} parent=1 // pred_region
      _
    $region53: #{tpu_custom_call.1} parent=1 // pred_fallthru
      _
    // Predicated region
    $region54: #{tpu_custom_call.1} parent=1 // pred_check
      _
    $region55: #{tpu_custom_call.1} parent=1 // pred_check_branch
      %136 = sbr.rel (0) target = $region57
    $region56: #{tpu_custom_call.1} parent=1 // pred_region
      %s138 = ssub.s32 4096, 4096
      %139 = vsyncadd [#allocation15], %s138
      %s140 = sshll.u32 [#allocation16], 4
      %s141 = int_to_ptr.vmem [resolvable:$true] %s140
      %146 = dma.hbm_to_vmem [thread:$0]  %s13, 4096, %s141, [#allocation15], 64, 64, 4
    $region57: #{tpu_custom_call.1} parent=1 // pred_fallthru
      _
    // Predicated region
    $region58: #{tpu_custom_call.1} parent=1 // pred_check
      _
    $region59: #{tpu_custom_call.1} parent=1 // pred_check_branch
      %148 = sbr.rel (0) target = $region61
    $region60: #{tpu_custom_call.1} parent=1 // pred_region
      _
    $region61: #{tpu_custom_call.1} parent=1 // pred_fallthru
      _
    // Predicated region
    $region62: #{tpu_custom_call.1} parent=1 // pred_check
      _
    $region63: #{tpu_custom_call.1} parent=1 // pred_check_branch
      %150 = sbr.rel (0) target = $region65
    $region64: #{tpu_custom_call.1} parent=1 // pred_region
      _
    $region65: #{tpu_custom_call.1} parent=1 // pred_fallthru
      _
    // Predicated region
    $region66: #{tpu_custom_call.1} parent=1 // pred_check
      _
    $region67: #{tpu_custom_call.1} parent=1 // pred_check_branch
      %152 = sbr.rel (0) target = $region69
    $region68: #{tpu_custom_call.1} parent=1 // pred_region
      _
    $region69: #{tpu_custom_call.1} parent=1 // pred_fallthru
      _
    // Predicated region
    $region70: #{tpu_custom_call.1} parent=1 // pred_check
      _
    $region71: #{tpu_custom_call.1} parent=1 // pred_check_branch
      %154 = sbr.rel (0) target = $region73
    $region72: #{tpu_custom_call.1} parent=1 // pred_region
      %s156 = ssub.s32 1024, 1024
      %157 = vsyncadd [#allocation18], %s156
      %s158 = sshll.u32 [#allocation17], 4
      %s159 = int_to_ptr.vmem [resolvable:$true] %s158
      %164 = dma.hbm_to_vmem [thread:$0]  %s17, 1024, %s159, [#allocation18], 64, 64, 4
    $region73: #{tpu_custom_call.1} parent=1 // pred_fallthru
      _
    // Predicated region
    $region74: #{tpu_custom_call.1} parent=1 // pred_check
      _
    $region75: #{tpu_custom_call.1} parent=1 // pred_check_branch
      %166 = sbr.rel (0) target = $region77
    $region76: #{tpu_custom_call.1} parent=1 // pred_region
      _
    $region77: #{tpu_custom_call.1} parent=1 // pred_fallthru
      _
    // Predicated region
    $region78: #{tpu_custom_call.1} parent=1 // pred_check
      _
    $region79: #{tpu_custom_call.1} parent=1 // pred_check_branch
      %168 = sbr.rel (0) target = $region81
    $region80: #{tpu_custom_call.1} parent=1 // pred_region
      %169 = dma.done [#allocation3], 256
    $region81: #{tpu_custom_call.1} parent=1 // pred_fallthru
      _
    // Predicated region
    $region82: #{tpu_custom_call.1} parent=1 // pred_check
      _
    $region83: #{tpu_custom_call.1} parent=1 // pred_check_branch
      %171 = sbr.rel (0) target = $region85
    $region84: #{tpu_custom_call.1} parent=1 // pred_region
      %172 = dma.done [#allocation6], 256
    $region85: #{tpu_custom_call.1} parent=1 // pred_fallthru
      _
    // Predicated region
    $region86: #{tpu_custom_call.1} parent=1 // pred_check
      _
    $region87: #{tpu_custom_call.1} parent=1 // pred_check_branch
      %174 = sbr.rel (0) target = $region89
    $region88: #{tpu_custom_call.1} parent=1 // pred_region
      %175 = dma.done [#allocation6], 128
    $region89: #{tpu_custom_call.1} parent=1 // pred_fallthru
      _
    // Predicated region
    $region90: #{tpu_custom_call.1} parent=1 // pred_check
      _
    $region91: #{tpu_custom_call.1} parent=1 // pred_check_branch
      %177 = sbr.rel (0) target = $region93
    $region92: #{tpu_custom_call.1} parent=1 // pred_region
      %178 = dma.done [#allocation9], 32
    $region93: #{tpu_custom_call.1} parent=1 // pred_fallthru
      _
    // Predicated region
    $region94: #{tpu_custom_call.1} parent=1 // pred_check
      _
    $region95: #{tpu_custom_call.1} parent=1 // pred_check_branch
      %180 = sbr.rel (0) target = $region97
    $region96: #{tpu_custom_call.1} parent=1 // pred_region
      %181 = dma.done [#allocation9], 32
    $region97: #{tpu_custom_call.1} parent=1 // pred_fallthru
      _
    // Predicated region
    $region98: #{tpu_custom_call.1} parent=1 // pred_check
      _
    $region99: #{tpu_custom_call.1} parent=1 // pred_check_branch
      %183 = sbr.rel (0) target = $region101
    $region100: #{tpu_custom_call.1} parent=1 // pred_region
      %184 = dma.done [#allocation12], 6144
    $region101: #{tpu_custom_call.1} parent=1 // pred_fallthru
      _
    // Predicated region
    $region102: #{tpu_custom_call.1} parent=1 // pred_check
      _
    $region103: #{tpu_custom_call.1} parent=1 // pred_check_branch
      %186 = sbr.rel (0) target = $region105
    $region104: #{tpu_custom_call.1} parent=1 // pred_region
      %187 = dma.done [#allocation12], 2048
    $region105: #{tpu_custom_call.1} parent=1 // pred_fallthru
      _
    // Predicated region
    $region106: #{tpu_custom_call.1} parent=1 // pred_check
      _
    $region107: #{tpu_custom_call.1} parent=1 // pred_check_branch
      %189 = sbr.rel (0) target = $region109
    $region108: #{tpu_custom_call.1} parent=1 // pred_region
      %190 = dma.done [#allocation15], 4096
    $region109: #{tpu_custom_call.1} parent=1 // pred_fallthru
      _
    // Predicated region
    $region110: #{tpu_custom_call.1} parent=1 // pred_check
      _
    $region111: #{tpu_custom_call.1} parent=1 // pred_check_branch
      %192 = sbr.rel (0) target = $region113
    $region112: #{tpu_custom_call.1} parent=1 // pred_region
      %193 = dma.done [#allocation15], 4096
    $region113: #{tpu_custom_call.1} parent=1 // pred_fallthru
      _
    // Predicated region
    $region114: #{tpu_custom_call.1} parent=1 // pred_check
      _
    $region115: #{tpu_custom_call.1} parent=1 // pred_check_branch
      %195 = sbr.rel (0) target = $region117
    $region116: #{tpu_custom_call.1} parent=1 // pred_region
      %196 = dma.done [#allocation18], 1024
    $region117: #{tpu_custom_call.1} parent=1 // pred_fallthru
      _
    %v198 = vld [vmem:[#allocation2] sm:$0xff]
    %v199 = vld [vmem:[#allocation2 + $0x8] sm:$0xff]
    %v200 = vld [vmem:[#allocation5] sm:$0xff]
    %v201 = vld [vmem:[#allocation5 + $0x8] sm:$0xff]
    %v202 = vld [vmem:[#allocation7] sm:$0x3f]
    %v203 = vld [vmem:[#allocation8] sm:$0x1]
    %v204 = vld [vmem:[#allocation10] sm:$0x1]
    %205 = vadd.xlane.f32.xlu0 %v198
    %v206 = vpop.xlane.xlu0 %205
    %207 = vadd.xlane.f32.xlu0 %v199
    %v208 = vpop.xlane.xlu0 %207
    %v209 = vmul.f32 %v206, 0.020833334
    %v210 = vmul.f32 %v208, 0.020833334
    %v211 = vmul.f32 %v198, %v198
    %v212 = vmul.f32 %v199, %v199
    %213 = vadd.xlane.f32.xlu0 %v211
    %v214 = vpop.xlane.xlu0 %213
    %215 = vadd.xlane.f32.xlu0 %v212
    %v216 = vpop.xlane.xlu0 %215
    %v217 = vmul.f32 %v214, 0.020833334
    %v218 = vmul.f32 %v216, 0.020833334
    %v219 = vmul.f32 %v209, %v209
    %v220 = vmul.f32 %v210, %v210
    %v221 = vsub.f32 %v217, %v219
    %v222 = vsub.f32 %v218, %v220
    %v223 = vsub.f32 %v198, %v209
    %v224 = vsub.f32 %v199, %v210
    %v225 = vadd.f32 %v221, 1e-05
    %v226 = vadd.f32 %v222, 1e-05
    %v227 = vrsqrt.pop %v225
    %v228 = vrsqrt.pop %v226
    %v229 = vmul.f32 %v223, %v227
    %v230 = vmul.f32 %v224, %v228
    %v232 = vlaneseq
    %v233 = vshrl.u32 %v232, 7
    %v234 = vsub.s32 0, %v233
    %v235 = vrot.slane %v203, %v234
    %v237 = vmul.f32 %v229, %v235
    %v238 = vmul.f32 %v230, %v235
    %v240 = vlaneseq
    %v241 = vshrl.u32 %v240, 7
    %v242 = vsub.s32 0, %v241
    %v243 = vrot.slane %v204, %v242
    %v245 = vadd.f32 %v237, %v243
    %v246 = vadd.f32 %v238, %v243
    %v247 = vld [vmem:[#allocation11] sm:$0xff]
    %v248 = vld [vmem:[#allocation11 + $0x8] sm:$0xf]
    %v249 = vld [vmem:[#allocation11 + $0xc] sm:$0xff]
    %v250 = vld [vmem:[#allocation11 + $0x14] sm:$0xf]
    %v251 = vld [vmem:[#allocation11 + $0x18] sm:$0xff]
    %v252 = vld [vmem:[#allocation11 + $0x20] sm:$0xf]
    %v253 = vld [vmem:[#allocation11 + $0x24] sm:$0xff]
    %v254 = vld [vmem:[#allocation11 + $0x2c] sm:$0xf]
    %v255 = vld [vmem:[#allocation11 + $0x30] sm:$0xff]
    %v256 = vld [vmem:[#allocation11 + $0x38] sm:$0xf]
    %v257 = vld [vmem:[#allocation11 + $0x3c] sm:$0xff]
    %v258 = vld [vmem:[#allocation11 + $0x44] sm:$0xf]
    %v259 = vld [vmem:[#allocation11 + $0x48] sm:$0xff]
    %v260 = vld [vmem:[#allocation11 + $0x50] sm:$0xf]
    %v261 = vld [vmem:[#allocation11 + $0x54] sm:$0xff]
    %v262 = vld [vmem:[#allocation11 + $0x5c] sm:$0xf]
    %v263 = vld [vmem:[#allocation11 + $0x60] sm:$0xff]
    %v264 = vld [vmem:[#allocation11 + $0x68] sm:$0xf]
    %v265 = vld [vmem:[#allocation11 + $0x6c] sm:$0xff]
    %v266 = vld [vmem:[#allocation11 + $0x74] sm:$0xf]
    %v267 = vld [vmem:[#allocation11 + $0x78] sm:$0xff]
    %v268 = vld [vmem:[#allocation11 + $0x80] sm:$0xf]
    %v269 = vld [vmem:[#allocation11 + $0x84] sm:$0xff]
    %v270 = vld [vmem:[#allocation11 + $0x8c] sm:$0xf]
    %v271 = vld [vmem:[#allocation11 + $0x90] sm:$0xff]
    %v272 = vld [vmem:[#allocation11 + $0x98] sm:$0xf]
    %v273 = vld [vmem:[#allocation11 + $0x9c] sm:$0xff]
    %v274 = vld [vmem:[#allocation11 + $0xa4] sm:$0xf]
    %v275 = vld [vmem:[#allocation11 + $0xa8] sm:$0xff]
    %v276 = vld [vmem:[#allocation11 + $0xb0] sm:$0xf]
    %v277 = vld [vmem:[#allocation11 + $0xb4] sm:$0xff]
    %v278 = vld [vmem:[#allocation11 + $0xbc] sm:$0xf]
    %v279 = vld [vmem:[%s6] sm:$0x7]
    %v280 = vpack.c.bf16 %v246, %v245
    %v282 = vlaneseq
    %v283 = vshrl.u32 %v282, 7
    %v284 = vsub.s32 0, %v283
    %v285 = vrot.slane %v279, %v284
    %v286 = vlaneseq
    %v287 = vshrl.u32 %v286, 7
    %v288 = vsub.s32 1, %v287
    %v289 = vrot.slane %v279, %v288
    %v290 = vlaneseq
    %v291 = vshrl.u32 %v290, 7
    %v292 = vsub.s32 2, %v291
    %v293 = vrot.slane %v279, %v292
    %v329 = vunpack.c.l.b16 %v247
    %v330 = vunpack.c.h.b16 %v247
    %v331 = vunpack.c.l.b16 %v248
    %v332 = vunpack.c.l.b16 %v249
    %v333 = vunpack.c.h.b16 %v249
    %v334 = vunpack.c.l.b16 %v250
    %v335 = vunpack.c.l.b16 %v251
    %v336 = vunpack.c.h.b16 %v251
    %v337 = vunpack.c.l.b16 %v252
    %v338 = vunpack.c.l.b16 %v253
    %v339 = vunpack.c.h.b16 %v253
    %v340 = vunpack.c.l.b16 %v254
    %v341 = vunpack.c.l.b16 %v255
    %v342 = vunpack.c.h.b16 %v255
    %v343 = vunpack.c.l.b16 %v256
    %v344 = vunpack.c.l.b16 %v257
    %v345 = vunpack.c.h.b16 %v257
    %v346 = vunpack.c.l.b16 %v258
    %v347 = vunpack.c.l.b16 %v259
    %v348 = vunpack.c.h.b16 %v259
    %v349 = vunpack.c.l.b16 %v260
    %v350 = vunpack.c.l.b16 %v261
    %v351 = vunpack.c.h.b16 %v261
    %v352 = vunpack.c.l.b16 %v262
    %v353 = vunpack.c.l.b16 %v263
    %v354 = vunpack.c.h.b16 %v263
    %v355 = vunpack.c.l.b16 %v264
    %v356 = vunpack.c.l.b16 %v265
    %v357 = vunpack.c.h.b16 %v265
    %v358 = vunpack.c.l.b16 %v266
    %v359 = vunpack.c.l.b16 %v267
    %v360 = vunpack.c.h.b16 %v267
    %v361 = vunpack.c.l.b16 %v268
    %v362 = vunpack.c.l.b16 %v269
    %v363 = vunpack.c.h.b16 %v269
    %v364 = vunpack.c.l.b16 %v270
    %v365 = vunpack.c.l.b16 %v271
    %v366 = vunpack.c.h.b16 %v271
    %v367 = vunpack.c.l.b16 %v272
    %v368 = vunpack.c.l.b16 %v273
    %v369 = vunpack.c.h.b16 %v273
    %v370 = vunpack.c.l.b16 %v274
    %v371 = vunpack.c.l.b16 %v275
    %v372 = vunpack.c.h.b16 %v275
    %v373 = vunpack.c.l.b16 %v276
    %v374 = vunpack.c.l.b16 %v277
    %v375 = vunpack.c.h.b16 %v277
    %v376 = vunpack.c.l.b16 %v278
    %v377 = vpack.c.b16 %v332, %v329
    %v378 = vpack.c.b16 %v333, %v330
    %v379 = vpack.c.b16 %v334, %v331
    %v380 = vpack.c.b16 %v338, %v335
    %v381 = vpack.c.b16 %v339, %v336
    %v382 = vpack.c.b16 %v340, %v337
    %v383 = vpack.c.b16 %v344, %v341
    %v384 = vpack.c.b16 %v345, %v342
    %v385 = vpack.c.b16 %v346, %v343
    %v386 = vpack.c.b16 %v350, %v347
    %v387 = vpack.c.b16 %v351, %v348
    %v388 = vpack.c.b16 %v352, %v349
    %v389 = vpack.c.b16 %v356, %v353
    %v390 = vpack.c.b16 %v357, %v354
    %v391 = vpack.c.b16 %v358, %v355
    %v392 = vpack.c.b16 %v362, %v359
    %v393 = vpack.c.b16 %v363, %v360
    %v394 = vpack.c.b16 %v364, %v361
    %v395 = vpack.c.b16 %v368, %v365
    %v396 = vpack.c.b16 %v369, %v366
    %v397 = vpack.c.b16 %v370, %v367
    %v398 = vpack.c.b16 %v374, %v371
    %v399 = vpack.c.b16 %v375, %v372
    %v400 = vpack.c.b16 %v376, %v373
    %425 = vmatprep.subr.bf16.mxu0 %v399
    %426 = vmatpush1.bf16.msra.mxu0 %v398
    %427 = vmatprep.subr.bf16.mxu0 %v396
    %428 = vmatpush1.bf16.msra.mxu0 %v395
    %429 = vmatprep.subr.bf16.mxu0 %v393
    %430 = vmatpush1.bf16.msra.mxu0 %v392
    %431 = vmatprep.subr.bf16.mxu0 %v390
    %432 = vmatpush1.bf16.msra.mxu0 %v389
    %433 = vmatprep.subr.bf16.mxu0 %v387
    %434 = vmatpush1.bf16.msra.mxu0 %v386
    %435 = vmatprep.subr.bf16.mxu0 %v384
    %436 = vmatpush1.bf16.msra.mxu0 %v383
    %437 = vmatprep.subr.bf16.mxu0 %v381
    %438 = vmatpush1.bf16.msra.mxu0 %v380
    %439 = vmatprep.subr.bf16.mxu0 %v378
    %440 = vmatpush1.bf16.msra.mxu0 %v377
    %441 = vmatprep.subr.bf16.mxu0 0
    %442 = vmatpush2.bf16.msra.mxu0 0
    %443 = vmatprep.subr.bf16.mxu0 0
    %444 = vmatpush2.bf16.msra.mxu0 0
    %445 = vmatprep.subr.bf16.mxu0 0
    %446 = vmatpush2.bf16.msra.mxu0 0
    %447 = vmatprep.subr.bf16.mxu0 0
    %448 = vmatpush2.bf16.msra.mxu0 0
    %449 = vmatprep.subr.bf16.mxu0 0
    %450 = vmatpush2.bf16.msra.mxu0 0
    %451 = vmatprep.subr.bf16.mxu0 0
    %452 = vmatpush2.bf16.msra.mxu0 0
    %453 = vmatprep.subr.bf16.mxu0 0
    %454 = vmatpush2.bf16.msra.mxu0 0
    %455 = vmatprep.subr.bf16.mxu0 0
    %456 = vmatpush2.bf16.msra.mxu0 0
    %457 = vmatprep.mubr.bf16.mxu0 0
    %458 = vmatmul.mubr.bf16.gmra.mxu0 %v280
    %v459 = vpop.f32.mrf.mxu0
    %v460 = vadd.f32 %v285, %v459
    %v461 = vpop.f32.mrf.mxu0
    %v462 = vadd.f32 %v289, %v461
    %v463 = vpop.f32.mrf.mxu0
    %v464 = vadd.f32 %v285, %v463
    %v465 = vpop.f32.mrf.mxu0
    %v466 = vadd.f32 %v289, %v465
    %467 = vdwg.mxu0
    %468 = vmatprep.subr.bf16.mxu0 0
    %469 = vmatpush1.bf16.msra.mxu0 %v400
    %470 = vmatprep.subr.bf16.mxu0 0
    %471 = vmatpush1.bf16.msra.mxu0 %v397
    %472 = vmatprep.subr.bf16.mxu0 0
    %473 = vmatpush1.bf16.msra.mxu0 %v394
    %474 = vmatprep.subr.bf16.mxu0 0
    %475 = vmatpush1.bf16.msra.mxu0 %v391
    %476 = vmatprep.subr.bf16.mxu0 0
    %477 = vmatpush1.bf16.msra.mxu0 %v388
    %478 = vmatprep.subr.bf16.mxu0 0
    %479 = vmatpush1.bf16.msra.mxu0 %v385
    %480 = vmatprep.subr.bf16.mxu0 0
    %481 = vmatpush1.bf16.msra.mxu0 %v382
    %482 = vmatprep.subr.bf16.mxu0 0
    %483 = vmatpush1.bf16.msra.mxu0 %v379
    %484 = vmatprep.subr.bf16.mxu0 0
    %485 = vmatpush2.bf16.msra.mxu0 0
    %486 = vmatprep.subr.bf16.mxu0 0
    %487 = vmatpush2.bf16.msra.mxu0 0
    %488 = vmatprep.subr.bf16.mxu0 0
    %489 = vmatpush2.bf16.msra.mxu0 0
    %490 = vmatprep.subr.bf16.mxu0 0
    %491 = vmatpush2.bf16.msra.mxu0 0
    %492 = vmatprep.subr.bf16.mxu0 0
    %493 = vmatpush2.bf16.msra.mxu0 0
    %494 = vmatprep.subr.bf16.mxu0 0
    %495 = vmatpush2.bf16.msra.mxu0 0
    %496 = vmatprep.subr.bf16.mxu0 0
    %497 = vmatpush2.bf16.msra.mxu0 0
    %498 = vmatprep.subr.bf16.mxu0 0
    %499 = vmatpush2.bf16.msra.mxu0 0
    %500 = vmatprep.mubr.bf16.mxu0 0
    %501 = vmatmul.mubr.bf16.gmra.mxu0 %v280
    %v502 = vpop.f32.mrf.mxu0
    %v503 = vadd.f32 %v293, %v502
    %v504 = vpop.f32.mrf.mxu0
    %v505 = vpop.f32.mrf.mxu0
    %v506 = vadd.f32 %v293, %v505
    %v507 = vpop.f32.mrf.mxu0
    %508 = vdwg.mxu0
    %v509 = vpack.c.bf16 %v466, %v462
    %v510 = vlaneseq
    %v511 = vshrl.u32 %v510, 7
    %v512 = vsub.s32 0, %v511
    %v513 = vrot.slane %v202, %v512
    %v514 = vmul.f32 %v460, %v513
    %v515 = vmul.f32 %v464, %v513
    %v516 = vpack.c.bf16 %v515, %v514
    %v517 = vmul.f32 %v503, %v513
    %v518 = vmul.f32 %v506, %v513
    %v519 = vpack.c.bf16 %v518, %v517
    %520 = vmatprep.subr.bf16.mxu0 0
    %521 = vmatpush1.bf16.xpose.msra.mxu0 0
    %522 = vmatprep.subr.bf16.mxu0 0
    %523 = vmatpush1.bf16.xpose.msra.mxu0 0
    %524 = vmatprep.subr.bf16.mxu0 0
    %525 = vmatpush1.bf16.xpose.msra.mxu0 0
    %526 = vmatprep.subr.bf16.mxu0 0
    %527 = vmatpush1.bf16.xpose.msra.mxu0 0
    %528 = vmatprep.subr.bf16.mxu0 0
    %529 = vmatpush1.bf16.xpose.msra.mxu0 0
    %530 = vmatprep.subr.bf16.mxu0 0
    %531 = vmatpush1.bf16.xpose.msra.mxu0 0
    %532 = vmatprep.subr.bf16.mxu0 0
    %533 = vmatpush1.bf16.xpose.msra.mxu0 0
    %534 = vmatprep.subr.bf16.mxu0 0
    %535 = vmatpush1.bf16.xpose.msra.mxu0 %v509
    %536 = vmatprep.subr.bf16.mxu0 0
    %537 = vmatpush2.bf16.xpose.msra.mxu0 0
    %538 = vmatprep.subr.bf16.mxu0 0
    %539 = vmatpush2.bf16.xpose.msra.mxu0 0
    %540 = vmatprep.subr.bf16.mxu0 0
    %541 = vmatpush2.bf16.xpose.msra.mxu0 0
    %542 = vmatprep.subr.bf16.mxu0 0
    %543 = vmatpush2.bf16.xpose.msra.mxu0 0
    %544 = vmatprep.subr.bf16.mxu0 0
    %545 = vmatpush2.bf16.xpose.msra.mxu0 0
    %546 = vmatprep.subr.bf16.mxu0 0
    %547 = vmatpush2.bf16.xpose.msra.mxu0 0
    %548 = vmatprep.subr.bf16.mxu0 0
    %549 = vmatpush2.bf16.xpose.msra.mxu0 0
    %550 = vmatprep.subr.bf16.mxu0 0
    %551 = vmatpush2.bf16.xpose.msra.mxu0 0
    %552 = vmatprep.mubr.bf16.mxu0 0
    %553 = vmatmul.mubr.bf16.gmra.mxu0 %v516
    %v554 = vpop.f32.mrf.mxu0
    %v555 = vadd.f32 %v200, %v554
    %v556 = vpop.f32.mrf.mxu0
    %v557 = vpop.f32.mrf.mxu0
    %v558 = vadd.f32 %v201, %v557
    %v559 = vpop.f32.mrf.mxu0
    %560 = vdwg.mxu0
    %vm561 = vcmask 130048
    %v562 = vsel %vm561, %v555, -inf
    %563 = vmax.xlane.f32.xlu0 %v562
    %v564 = vpop.xlane.xlu0 %563
    %v565 = vsel %vm561, %v558, -inf
    %566 = vmax.xlane.f32.xlu0 %v565
    %v567 = vpop.xlane.xlu0 %566
    %v568 = vsub.f32 %v555, %v564
    %v569 = vsub.f32 %v558, %v567
    %v570 = vmul.f32 %v568, 1.442695
    %v571 = vpow.pop %v570
    %v572 = vmul.f32 %v569, 1.442695
    %v573 = vpow.pop %v572
    %v574 = vsel %vm561, %v571, 0.0
    %575 = vadd.xlane.f32.xlu0 %v574
    %v576 = vpop.xlane.xlu0 %575
    %v577 = vsel %vm561, %v573, 0.0
    %578 = vadd.xlane.f32.xlu0 %v577
    %v579 = vpop.xlane.xlu0 %578
    %v580 = vrcp.pop %v576
    %v581 = vrcp.pop %v579
    %v582 = vmul.f32 %v571, %v580
    %v583 = vmul.f32 %v573, %v581
    %v584 = vpack.c.bf16 %v583, %v582
    %v585 = vlaneseq
    %v586 = vshrl.u32 %v585, 7
    %v587 = vsub.s32 1, %v586
    %v588 = vrot.slane %v202, %v587
    %v589 = vmul.f32 %v460, %v588
    %v590 = vmul.f32 %v464, %v588
    %v591 = vpack.c.bf16 %v590, %v589
    %v592 = vmul.f32 %v503, %v588
    %v593 = vmul.f32 %v506, %v588
    %v594 = vpack.c.bf16 %v593, %v592
    %595 = vmatprep.subr.bf16.mxu0 0
    %596 = vmatpush1.bf16.xpose.msra.mxu0 0
    %597 = vmatprep.subr.bf16.mxu0 0
    %598 = vmatpush1.bf16.xpose.msra.mxu0 0
    %599 = vmatprep.subr.bf16.mxu0 0
    %600 = vmatpush1.bf16.xpose.msra.mxu0 0
    %601 = vmatprep.subr.bf16.mxu0 0
    %602 = vmatpush1.bf16.xpose.msra.mxu0 0
    %603 = vmatprep.subr.bf16.mxu0 0
    %604 = vmatpush1.bf16.xpose.msra.mxu0 0
    %605 = vmatprep.subr.bf16.mxu0 0
    %606 = vmatpush1.bf16.xpose.msra.mxu0 0
    %607 = vmatprep.subr.bf16.mxu0 0
    %608 = vmatpush1.bf16.xpose.msra.mxu0 0
    %609 = vmatprep.subr.bf16.mxu0 0
    %610 = vmatpush1.bf16.xpose.msra.mxu0 %v509
    %611 = vmatprep.subr.bf16.mxu0 0
    %612 = vmatpush2.bf16.xpose.msra.mxu0 0
    %613 = vmatprep.subr.bf16.mxu0 0
    %614 = vmatpush2.bf16.xpose.msra.mxu0 0
    %615 = vmatprep.subr.bf16.mxu0 0
    %616 = vmatpush2.bf16.xpose.msra.mxu0 0
    %617 = vmatprep.subr.bf16.mxu0 0
    %618 = vmatpush2.bf16.xpose.msra.mxu0 0
    %619 = vmatprep.subr.bf16.mxu0 0
    %620 = vmatpush2.bf16.xpose.msra.mxu0 0
    %621 = vmatprep.subr.bf16.mxu0 0
    %622 = vmatpush2.bf16.xpose.msra.mxu0 0
    %623 = vmatprep.subr.bf16.mxu0 0
    %624 = vmatpush2.bf16.xpose.msra.mxu0 0
    %625 = vmatprep.subr.bf16.mxu0 0
    %626 = vmatpush2.bf16.xpose.msra.mxu0 0
    %627 = vmatprep.mubr.bf16.mxu0 0
    %628 = vmatmul.mubr.bf16.gmra.mxu0 %v591
    %v629 = vpop.f32.mrf.mxu0
    %v630 = vadd.f32 %v200, %v629
    %v631 = vpop.f32.mrf.mxu0
    %v632 = vpop.f32.mrf.mxu0
    %v633 = vadd.f32 %v201, %v632
    %v634 = vpop.f32.mrf.mxu0
    %635 = vdwg.mxu0
    %v636 = vsel %vm561, %v630, -inf
    %637 = vmax.xlane.f32.xlu0 %v636
    %v638 = vpop.xlane.xlu0 %637
    %v639 = vsel %vm561, %v633, -inf
    %640 = vmax.xlane.f32.xlu0 %v639
    %v641 = vpop.xlane.xlu0 %640
    %v642 = vsub.f32 %v630, %v638
    %v643 = vsub.f32 %v633, %v641
    %v644 = vmul.f32 %v642, 1.442695
    %v645 = vpow.pop %v644
    %v646 = vmul.f32 %v643, 1.442695
    %v647 = vpow.pop %v646
    %v648 = vsel %vm561, %v645, 0.0
    %649 = vadd.xlane.f32.xlu0 %v648
    %v650 = vpop.xlane.xlu0 %649
    %v651 = vsel %vm561, %v647, 0.0
    %652 = vadd.xlane.f32.xlu0 %v651
    %v653 = vpop.xlane.xlu0 %652
    %v654 = vrcp.pop %v650
    %v655 = vrcp.pop %v653
    %v656 = vmul.f32 %v645, %v654
    %v657 = vmul.f32 %v647, %v655
    %v658 = vpack.c.bf16 %v657, %v656
    %v660 = vsel %vm561, %v658, 0
    %662 = vmatprep.subr.bf16.mxu0 0
    %663 = vmatpush1.bf16.msra.mxu0 0
    %664 = vmatprep.subr.bf16.mxu0 0
    %665 = vmatpush1.bf16.msra.mxu0 0
    %666 = vmatprep.subr.bf16.mxu0 0
    %667 = vmatpush1.bf16.msra.mxu0 0
    %668 = vmatprep.subr.bf16.mxu0 0
    %669 = vmatpush1.bf16.msra.mxu0 0
    %670 = vmatprep.subr.bf16.mxu0 0
    %671 = vmatpush1.bf16.msra.mxu0 0
    %672 = vmatprep.subr.bf16.mxu0 0
    %673 = vmatpush1.bf16.msra.mxu0 0
    %674 = vmatprep.subr.bf16.mxu0 0
    %675 = vmatpush1.bf16.msra.mxu0 0
    %676 = vmatprep.subr.bf16.mxu0 0
    %677 = vmatpush1.bf16.msra.mxu0 %v594
    %678 = vmatprep.subr.bf16.mxu0 0
    %679 = vmatpush2.bf16.msra.mxu0 0
    %680 = vmatprep.subr.bf16.mxu0 0
    %681 = vmatpush2.bf16.msra.mxu0 0
    %682 = vmatprep.subr.bf16.mxu0 0
    %683 = vmatpush2.bf16.msra.mxu0 0
    %684 = vmatprep.subr.bf16.mxu0 0
    %685 = vmatpush2.bf16.msra.mxu0 0
    %686 = vmatprep.subr.bf16.mxu0 0
    %687 = vmatpush2.bf16.msra.mxu0 0
    %688 = vmatprep.subr.bf16.mxu0 0
    %689 = vmatpush2.bf16.msra.mxu0 0
    %690 = vmatprep.subr.bf16.mxu0 0
    %691 = vmatpush2.bf16.msra.mxu0 0
    %692 = vmatprep.subr.bf16.mxu0 0
    %693 = vmatpush2.bf16.msra.mxu0 0
    %694 = vmatprep.mubr.bf16.mxu0 0
    %695 = vmatmul.mubr.bf16.gmra.mxu0 %v660
    %v696 = vpop.f32.mrf.mxu0
    %v697 = vadd.f32 0.0, %v696
    %v698 = vpop.f32.mrf.mxu0
    %v699 = vpop.f32.mrf.mxu0
    %v700 = vadd.f32 0.0, %v699
    %v701 = vpop.f32.mrf.mxu0
    %702 = vdwg.mxu0
    %v704 = vsel %vm561, %v584, 0
    %706 = vmatprep.subr.bf16.mxu0 0
    %707 = vmatpush1.bf16.msra.mxu0 0
    %708 = vmatprep.subr.bf16.mxu0 0
    %709 = vmatpush1.bf16.msra.mxu0 0
    %710 = vmatprep.subr.bf16.mxu0 0
    %711 = vmatpush1.bf16.msra.mxu0 0
    %712 = vmatprep.subr.bf16.mxu0 0
    %713 = vmatpush1.bf16.msra.mxu0 0
    %714 = vmatprep.subr.bf16.mxu0 0
    %715 = vmatpush1.bf16.msra.mxu0 0
    %716 = vmatprep.subr.bf16.mxu0 0
    %717 = vmatpush1.bf16.msra.mxu0 0
    %718 = vmatprep.subr.bf16.mxu0 0
    %719 = vmatpush1.bf16.msra.mxu0 0
    %720 = vmatprep.subr.bf16.mxu0 0
    %721 = vmatpush1.bf16.msra.mxu0 %v519
    %722 = vmatprep.subr.bf16.mxu0 0
    %723 = vmatpush2.bf16.msra.mxu0 0
    %724 = vmatprep.subr.bf16.mxu0 0
    %725 = vmatpush2.bf16.msra.mxu0 0
    %726 = vmatprep.subr.bf16.mxu0 0
    %727 = vmatpush2.bf16.msra.mxu0 0
    %728 = vmatprep.subr.bf16.mxu0 0
    %729 = vmatpush2.bf16.msra.mxu0 0
    %730 = vmatprep.subr.bf16.mxu0 0
    %731 = vmatpush2.bf16.msra.mxu0 0
    %732 = vmatprep.subr.bf16.mxu0 0
    %733 = vmatpush2.bf16.msra.mxu0 0
    %734 = vmatprep.subr.bf16.mxu0 0
    %735 = vmatpush2.bf16.msra.mxu0 0
    %736 = vmatprep.subr.bf16.mxu0 0
    %737 = vmatpush2.bf16.msra.mxu0 0
    %738 = vmatprep.mubr.bf16.mxu0 0
    %739 = vmatmul.mubr.bf16.gmra.mxu0 %v704
    %v740 = vpop.f32.mrf.mxu0
    %v741 = vadd.f32 %v697, %v740
    %v742 = vpop.f32.mrf.mxu0
    %v743 = vpop.f32.mrf.mxu0
    %v744 = vadd.f32 %v700, %v743
    %v745 = vpop.f32.mrf.mxu0
    %746 = vdwg.mxu0
    %v747 = vlaneseq
    %v748 = vshrl.u32 %v747, 7
    %v749 = vsub.s32 2, %v748
    %v750 = vrot.slane %v202, %v749
    %v751 = vmul.f32 %v460, %v750
    %v752 = vmul.f32 %v464, %v750
    %v753 = vpack.c.bf16 %v752, %v751
    %v754 = vmul.f32 %v503, %v750
    %v755 = vmul.f32 %v506, %v750
    %v756 = vpack.c.bf16 %v755, %v754
    %757 = vmatprep.subr.bf16.mxu0 0
    %758 = vmatpush1.bf16.xpose.msra.mxu0 0
    %759 = vmatprep.subr.bf16.mxu0 0
    %760 = vmatpush1.bf16.xpose.msra.mxu0 0
    %761 = vmatprep.subr.bf16.mxu0 0
    %762 = vmatpush1.bf16.xpose.msra.mxu0 0
    %763 = vmatprep.subr.bf16.mxu0 0
    %764 = vmatpush1.bf16.xpose.msra.mxu0 0
    %765 = vmatprep.subr.bf16.mxu0 0
    %766 = vmatpush1.bf16.xpose.msra.mxu0 0
    %767 = vmatprep.subr.bf16.mxu0 0
    %768 = vmatpush1.bf16.xpose.msra.mxu0 0
    %769 = vmatprep.subr.bf16.mxu0 0
    %770 = vmatpush1.bf16.xpose.msra.mxu0 0
    %771 = vmatprep.subr.bf16.mxu0 0
    %772 = vmatpush1.bf16.xpose.msra.mxu0 %v509
    %773 = vmatprep.subr.bf16.mxu0 0
    %774 = vmatpush2.bf16.xpose.msra.mxu0 0
    %775 = vmatprep.subr.bf16.mxu0 0
    %776 = vmatpush2.bf16.xpose.msra.mxu0 0
    %777 = vmatprep.subr.bf16.mxu0 0
    %778 = vmatpush2.bf16.xpose.msra.mxu0 0
    %779 = vmatprep.subr.bf16.mxu0 0
    %780 = vmatpush2.bf16.xpose.msra.mxu0 0
    %781 = vmatprep.subr.bf16.mxu0 0
    %782 = vmatpush2.bf16.xpose.msra.mxu0 0
    %783 = vmatprep.subr.bf16.mxu0 0
    %784 = vmatpush2.bf16.xpose.msra.mxu0 0
    %785 = vmatprep.subr.bf16.mxu0 0
    %786 = vmatpush2.bf16.xpose.msra.mxu0 0
    %787 = vmatprep.subr.bf16.mxu0 0
    %788 = vmatpush2.bf16.xpose.msra.mxu0 0
    %789 = vmatprep.mubr.bf16.mxu0 0
    %790 = vmatmul.mubr.bf16.gmra.mxu0 %v753
    %v791 = vpop.f32.mrf.mxu0
    %v792 = vadd.f32 %v200, %v791
    %v793 = vpop.f32.mrf.mxu0
    %v794 = vpop.f32.mrf.mxu0
    %v795 = vadd.f32 %v201, %v794
    %v796 = vpop.f32.mrf.mxu0
    %797 = vdwg.mxu0
    %v798 = vsel %vm561, %v792, -inf
    %799 = vmax.xlane.f32.xlu0 %v798
    %v800 = vpop.xlane.xlu0 %799
    %v801 = vsel %vm561, %v795, -inf
    %802 = vmax.xlane.f32.xlu0 %v801
    %v803 = vpop.xlane.xlu0 %802
    %v804 = vsub.f32 %v792, %v800
    %v805 = vsub.f32 %v795, %v803
    %v806 = vmul.f32 %v804, 1.442695
    %v807 = vpow.pop %v806
    %v808 = vmul.f32 %v805, 1.442695
    %v809 = vpow.pop %v808
    %v810 = vsel %vm561, %v807, 0.0
    %811 = vadd.xlane.f32.xlu0 %v810
    %v812 = vpop.xlane.xlu0 %811
    %v813 = vsel %vm561, %v809, 0.0
    %814 = vadd.xlane.f32.xlu0 %v813
    %v815 = vpop.xlane.xlu0 %814
    %v816 = vrcp.pop %v812
    %v817 = vrcp.pop %v815
    %v818 = vmul.f32 %v807, %v816
    %v819 = vmul.f32 %v809, %v817
    %v820 = vpack.c.bf16 %v819, %v818
    %v822 = vsel %vm561, %v820, 0
    %824 = vmatprep.subr.bf16.mxu0 0
    %825 = vmatpush1.bf16.msra.mxu0 0
    %826 = vmatprep.subr.bf16.mxu0 0
    %827 = vmatpush1.bf16.msra.mxu0 0
    %828 = vmatprep.subr.bf16.mxu0 0
    %829 = vmatpush1.bf16.msra.mxu0 0
    %830 = vmatprep.subr.bf16.mxu0 0
    %831 = vmatpush1.bf16.msra.mxu0 0
    %832 = vmatprep.subr.bf16.mxu0 0
    %833 = vmatpush1.bf16.msra.mxu0 0
    %834 = vmatprep.subr.bf16.mxu0 0
    %835 = vmatpush1.bf16.msra.mxu0 0
    %836 = vmatprep.subr.bf16.mxu0 0
    %837 = vmatpush1.bf16.msra.mxu0 0
    %838 = vmatprep.subr.bf16.mxu0 0
    %839 = vmatpush1.bf16.msra.mxu0 %v756
    %840 = vmatprep.subr.bf16.mxu0 0
    %841 = vmatpush2.bf16.msra.mxu0 0
    %842 = vmatprep.subr.bf16.mxu0 0
    %843 = vmatpush2.bf16.msra.mxu0 0
    %844 = vmatprep.subr.bf16.mxu0 0
    %845 = vmatpush2.bf16.msra.mxu0 0
    %846 = vmatprep.subr.bf16.mxu0 0
    %847 = vmatpush2.bf16.msra.mxu0 0
    %848 = vmatprep.subr.bf16.mxu0 0
    %849 = vmatpush2.bf16.msra.mxu0 0
    %850 = vmatprep.subr.bf16.mxu0 0
    %851 = vmatpush2.bf16.msra.mxu0 0
    %852 = vmatprep.subr.bf16.mxu0 0
    %853 = vmatpush2.bf16.msra.mxu0 0
    %854 = vmatprep.subr.bf16.mxu0 0
    %855 = vmatpush2.bf16.msra.mxu0 0
    %856 = vmatprep.mubr.bf16.mxu0 0
    %857 = vmatmul.mubr.bf16.gmra.mxu0 %v822
    %v858 = vpop.f32.mrf.mxu0
    %v859 = vadd.f32 0.0, %v858
    %v860 = vpop.f32.mrf.mxu0
    %v861 = vpop.f32.mrf.mxu0
    %v862 = vadd.f32 0.0, %v861
    %v863 = vpop.f32.mrf.mxu0
    %864 = vdwg.mxu0
    %v865 = vadd.f32 %v741, %v859
    %v866 = vadd.f32 %v744, %v862
    %v867 = vlaneseq
    %v868 = vshrl.u32 %v867, 7
    %v869 = vsub.s32 3, %v868
    %v870 = vrot.slane %v202, %v869
    %v871 = vmul.f32 %v460, %v870
    %v872 = vmul.f32 %v464, %v870
    %v873 = vpack.c.bf16 %v872, %v871
    %v874 = vmul.f32 %v503, %v870
    %v875 = vmul.f32 %v506, %v870
    %v876 = vpack.c.bf16 %v875, %v874
    %877 = vmatprep.subr.bf16.mxu0 0
    %878 = vmatpush1.bf16.xpose.msra.mxu0 0
    %879 = vmatprep.subr.bf16.mxu0 0
    %880 = vmatpush1.bf16.xpose.msra.mxu0 0
    %881 = vmatprep.subr.bf16.mxu0 0
    %882 = vmatpush1.bf16.xpose.msra.mxu0 0
    %883 = vmatprep.subr.bf16.mxu0 0
    %884 = vmatpush1.bf16.xpose.msra.mxu0 0
    %885 = vmatprep.subr.bf16.mxu0 0
    %886 = vmatpush1.bf16.xpose.msra.mxu0 0
    %887 = vmatprep.subr.bf16.mxu0 0
    %888 = vmatpush1.bf16.xpose.msra.mxu0 0
    %889 = vmatprep.subr.bf16.mxu0 0
    %890 = vmatpush1.bf16.xpose.msra.mxu0 0
    %891 = vmatprep.subr.bf16.mxu0 0
    %892 = vmatpush1.bf16.xpose.msra.mxu0 %v509
    %893 = vmatprep.subr.bf16.mxu0 0
    %894 = vmatpush2.bf16.xpose.msra.mxu0 0
    %895 = vmatprep.subr.bf16.mxu0 0
    %896 = vmatpush2.bf16.xpose.msra.mxu0 0
    %897 = vmatprep.subr.bf16.mxu0 0
    %898 = vmatpush2.bf16.xpose.msra.mxu0 0
    %899 = vmatprep.subr.bf16.mxu0 0
    %900 = vmatpush2.bf16.xpose.msra.mxu0 0
    %901 = vmatprep.subr.bf16.mxu0 0
    %902 = vmatpush2.bf16.xpose.msra.mxu0 0
    %903 = vmatprep.subr.bf16.mxu0 0
    %904 = vmatpush2.bf16.xpose.msra.mxu0 0
    %905 = vmatprep.subr.bf16.mxu0 0
    %906 = vmatpush2.bf16.xpose.msra.mxu0 0
    %907 = vmatprep.subr.bf16.mxu0 0
    %908 = vmatpush2.bf16.xpose.msra.mxu0 0
    %909 = vmatprep.mubr.bf16.mxu0 0
    %910 = vmatmul.mubr.bf16.gmra.mxu0 %v873
    %v911 = vpop.f32.mrf.mxu0
    %v912 = vadd.f32 %v200, %v911
    %v913 = vpop.f32.mrf.mxu0
    %v914 = vpop.f32.mrf.mxu0
    %v915 = vadd.f32 %v201, %v914
    %v916 = vpop.f32.mrf.mxu0
    %917 = vdwg.mxu0
    %v918 = vsel %vm561, %v912, -inf
    %919 = vmax.xlane.f32.xlu0 %v918
    %v920 = vpop.xlane.xlu0 %919
    %v921 = vsel %vm561, %v915, -inf
    %922 = vmax.xlane.f32.xlu0 %v921
    %v923 = vpop.xlane.xlu0 %922
    %v924 = vsub.f32 %v912, %v920
    %v925 = vsub.f32 %v915, %v923
    %v926 = vmul.f32 %v924, 1.442695
    %v927 = vpow.pop %v926
    %v928 = vmul.f32 %v925, 1.442695
    %v929 = vpow.pop %v928
    %v930 = vsel %vm561, %v927, 0.0
    %931 = vadd.xlane.f32.xlu0 %v930
    %v932 = vpop.xlane.xlu0 %931
    %v933 = vsel %vm561, %v929, 0.0
    %934 = vadd.xlane.f32.xlu0 %v933
    %v935 = vpop.xlane.xlu0 %934
    %v936 = vrcp.pop %v932
    %v937 = vrcp.pop %v935
    %v938 = vmul.f32 %v927, %v936
    %v939 = vmul.f32 %v929, %v937
    %v940 = vpack.c.bf16 %v939, %v938
    %v942 = vsel %vm561, %v940, 0
    %944 = vmatprep.subr.bf16.mxu0 0
    %945 = vmatpush1.bf16.msra.mxu0 0
    %946 = vmatprep.subr.bf16.mxu0 0
    %947 = vmatpush1.bf16.msra.mxu0 0
    %948 = vmatprep.subr.bf16.mxu0 0
    %949 = vmatpush1.bf16.msra.mxu0 0
    %950 = vmatprep.subr.bf16.mxu0 0
    %951 = vmatpush1.bf16.msra.mxu0 0
    %952 = vmatprep.subr.bf16.mxu0 0
    %953 = vmatpush1.bf16.msra.mxu0 0
    %954 = vmatprep.subr.bf16.mxu0 0
    %955 = vmatpush1.bf16.msra.mxu0 0
    %956 = vmatprep.subr.bf16.mxu0 0
    %957 = vmatpush1.bf16.msra.mxu0 0
    %958 = vmatprep.subr.bf16.mxu0 0
    %959 = vmatpush1.bf16.msra.mxu0 %v876
    %960 = vmatprep.subr.bf16.mxu0 0
    %961 = vmatpush2.bf16.msra.mxu0 0
    %962 = vmatprep.subr.bf16.mxu0 0
    %963 = vmatpush2.bf16.msra.mxu0 0
    %964 = vmatprep.subr.bf16.mxu0 0
    %965 = vmatpush2.bf16.msra.mxu0 0
    %966 = vmatprep.subr.bf16.mxu0 0
    %967 = vmatpush2.bf16.msra.mxu0 0
    %968 = vmatprep.subr.bf16.mxu0 0
    %969 = vmatpush2.bf16.msra.mxu0 0
    %970 = vmatprep.subr.bf16.mxu0 0
    %971 = vmatpush2.bf16.msra.mxu0 0
    %972 = vmatprep.subr.bf16.mxu0 0
    %973 = vmatpush2.bf16.msra.mxu0 0
    %974 = vmatprep.subr.bf16.mxu0 0
    %975 = vmatpush2.bf16.msra.mxu0 0
    %976 = vmatprep.mubr.bf16.mxu0 0
    %977 = vmatmul.mubr.bf16.gmra.mxu0 %v942
    %v978 = vpop.f32.mrf.mxu0
    %v979 = vadd.f32 0.0, %v978
    %v980 = vpop.f32.mrf.mxu0
    %v981 = vpop.f32.mrf.mxu0
    %v982 = vadd.f32 0.0, %v981
    %v983 = vpop.f32.mrf.mxu0
    %984 = vdwg.mxu0
    %v985 = vadd.f32 %v865, %v979
    %v986 = vadd.f32 %v866, %v982
    %v987 = vlaneseq
    %v988 = vshrl.u32 %v987, 7
    %v989 = vsub.s32 4, %v988
    %v990 = vrot.slane %v202, %v989
    %v991 = vmul.f32 %v460, %v990
    %v992 = vmul.f32 %v464, %v990
    %v993 = vpack.c.bf16 %v992, %v991
    %v994 = vmul.f32 %v503, %v990
    %v995 = vmul.f32 %v506, %v990
    %v996 = vpack.c.bf16 %v995, %v994
    %997 = vmatprep.subr.bf16.mxu0 0
    %998 = vmatpush1.bf16.xpose.msra.mxu0 0
    %999 = vmatprep.subr.bf16.mxu0 0
    %1000 = vmatpush1.bf16.xpose.msra.mxu0 0
    %1001 = vmatprep.subr.bf16.mxu0 0
    %1002 = vmatpush1.bf16.xpose.msra.mxu0 0
    %1003 = vmatprep.subr.bf16.mxu0 0
    %1004 = vmatpush1.bf16.xpose.msra.mxu0 0
    %1005 = vmatprep.subr.bf16.mxu0 0
    %1006 = vmatpush1.bf16.xpose.msra.mxu0 0
    %1007 = vmatprep.subr.bf16.mxu0 0
    %1008 = vmatpush1.bf16.xpose.msra.mxu0 0
    %1009 = vmatprep.subr.bf16.mxu0 0
    %1010 = vmatpush1.bf16.xpose.msra.mxu0 0
    %1011 = vmatprep.subr.bf16.mxu0 0
    %1012 = vmatpush1.bf16.xpose.msra.mxu0 %v509
    %1013 = vmatprep.subr.bf16.mxu0 0
    %1014 = vmatpush2.bf16.xpose.msra.mxu0 0
    %1015 = vmatprep.subr.bf16.mxu0 0
    %1016 = vmatpush2.bf16.xpose.msra.mxu0 0
    %1017 = vmatprep.subr.bf16.mxu0 0
    %1018 = vmatpush2.bf16.xpose.msra.mxu0 0
    %1019 = vmatprep.subr.bf16.mxu0 0
    %1020 = vmatpush2.bf16.xpose.msra.mxu0 0
    %1021 = vmatprep.subr.bf16.mxu0 0
    %1022 = vmatpush2.bf16.xpose.msra.mxu0 0
    %1023 = vmatprep.subr.bf16.mxu0 0
    %1024 = vmatpush2.bf16.xpose.msra.mxu0 0
    %1025 = vmatprep.subr.bf16.mxu0 0
    %1026 = vmatpush2.bf16.xpose.msra.mxu0 0
    %1027 = vmatprep.subr.bf16.mxu0 0
    %1028 = vmatpush2.bf16.xpose.msra.mxu0 0
    %1029 = vmatprep.mubr.bf16.mxu0 0
    %1030 = vmatmul.mubr.bf16.gmra.mxu0 %v993
    %v1031 = vpop.f32.mrf.mxu0
    %v1032 = vadd.f32 %v200, %v1031
    %v1033 = vpop.f32.mrf.mxu0
    %v1034 = vpop.f32.mrf.mxu0
    %v1035 = vadd.f32 %v201, %v1034
    %v1036 = vpop.f32.mrf.mxu0
    %1037 = vdwg.mxu0
    %v1038 = vsel %vm561, %v1032, -inf
    %1039 = vmax.xlane.f32.xlu0 %v1038
    %v1040 = vpop.xlane.xlu0 %1039
    %v1041 = vsel %vm561, %v1035, -inf
    %1042 = vmax.xlane.f32.xlu0 %v1041
    %v1043 = vpop.xlane.xlu0 %1042
    %v1044 = vsub.f32 %v1032, %v1040
    %v1045 = vsub.f32 %v1035, %v1043
    %v1046 = vmul.f32 %v1044, 1.442695
    %v1047 = vpow.pop %v1046
    %v1048 = vmul.f32 %v1045, 1.442695
    %v1049 = vpow.pop %v1048
    %v1050 = vsel %vm561, %v1047, 0.0
    %1051 = vadd.xlane.f32.xlu0 %v1050
    %v1052 = vpop.xlane.xlu0 %1051
    %v1053 = vsel %vm561, %v1049, 0.0
    %1054 = vadd.xlane.f32.xlu0 %v1053
    %v1055 = vpop.xlane.xlu0 %1054
    %v1056 = vrcp.pop %v1052
    %v1057 = vrcp.pop %v1055
    %v1058 = vmul.f32 %v1047, %v1056
    %v1059 = vmul.f32 %v1049, %v1057
    %v1060 = vpack.c.bf16 %v1059, %v1058
    %v1062 = vsel %vm561, %v1060, 0
    %1064 = vmatprep.subr.bf16.mxu0 0
    %1065 = vmatpush1.bf16.msra.mxu0 0
    %1066 = vmatprep.subr.bf16.mxu0 0
    %1067 = vmatpush1.bf16.msra.mxu0 0
    %1068 = vmatprep.subr.bf16.mxu0 0
    %1069 = vmatpush1.bf16.msra.mxu0 0
    %1070 = vmatprep.subr.bf16.mxu0 0
    %1071 = vmatpush1.bf16.msra.mxu0 0
    %1072 = vmatprep.subr.bf16.mxu0 0
    %1073 = vmatpush1.bf16.msra.mxu0 0
    %1074 = vmatprep.subr.bf16.mxu0 0
    %1075 = vmatpush1.bf16.msra.mxu0 0
    %1076 = vmatprep.subr.bf16.mxu0 0
    %1077 = vmatpush1.bf16.msra.mxu0 0
    %1078 = vmatprep.subr.bf16.mxu0 0
    %1079 = vmatpush1.bf16.msra.mxu0 %v996
    %1080 = vmatprep.subr.bf16.mxu0 0
    %1081 = vmatpush2.bf16.msra.mxu0 0
    %1082 = vmatprep.subr.bf16.mxu0 0
    %1083 = vmatpush2.bf16.msra.mxu0 0
    %1084 = vmatprep.subr.bf16.mxu0 0
    %1085 = vmatpush2.bf16.msra.mxu0 0
    %1086 = vmatprep.subr.bf16.mxu0 0
    %1087 = vmatpush2.bf16.msra.mxu0 0
    %1088 = vmatprep.subr.bf16.mxu0 0
    %1089 = vmatpush2.bf16.msra.mxu0 0
    %1090 = vmatprep.subr.bf16.mxu0 0
    %1091 = vmatpush2.bf16.msra.mxu0 0
    %1092 = vmatprep.subr.bf16.mxu0 0
    %1093 = vmatpush2.bf16.msra.mxu0 0
    %1094 = vmatprep.subr.bf16.mxu0 0
    %1095 = vmatpush2.bf16.msra.mxu0 0
    %1096 = vmatprep.mubr.bf16.mxu0 0
    %1097 = vmatmul.mubr.bf16.gmra.mxu0 %v1062
    %v1098 = vpop.f32.mrf.mxu0
    %v1099 = vadd.f32 0.0, %v1098
    %v1100 = vpop.f32.mrf.mxu0
    %v1101 = vpop.f32.mrf.mxu0
    %v1102 = vadd.f32 0.0, %v1101
    %v1103 = vpop.f32.mrf.mxu0
    %1104 = vdwg.mxu0
    %v1105 = vadd.f32 %v985, %v1099
    %v1106 = vadd.f32 %v986, %v1102
    %v1107 = vlaneseq
    %v1108 = vshrl.u32 %v1107, 7
    %v1109 = vsub.s32 5, %v1108
    %v1110 = vrot.slane %v202, %v1109
    %v1111 = vmul.f32 %v460, %v1110
    %v1112 = vmul.f32 %v464, %v1110
    %v1113 = vpack.c.bf16 %v1112, %v1111
    %v1114 = vmul.f32 %v503, %v1110
    %v1115 = vmul.f32 %v506, %v1110
    %v1116 = vpack.c.bf16 %v1115, %v1114
    %1117 = vmatprep.subr.bf16.mxu0 0
    %1118 = vmatpush1.bf16.xpose.msra.mxu0 0
    %1119 = vmatprep.subr.bf16.mxu0 0
    %1120 = vmatpush1.bf16.xpose.msra.mxu0 0
    %1121 = vmatprep.subr.bf16.mxu0 0
    %1122 = vmatpush1.bf16.xpose.msra.mxu0 0
    %1123 = vmatprep.subr.bf16.mxu0 0
    %1124 = vmatpush1.bf16.xpose.msra.mxu0 0
    %1125 = vmatprep.subr.bf16.mxu0 0
    %1126 = vmatpush1.bf16.xpose.msra.mxu0 0
    %1127 = vmatprep.subr.bf16.mxu0 0
    %1128 = vmatpush1.bf16.xpose.msra.mxu0 0
    %1129 = vmatprep.subr.bf16.mxu0 0
    %1130 = vmatpush1.bf16.xpose.msra.mxu0 0
    %1131 = vmatprep.subr.bf16.mxu0 0
    %1132 = vmatpush1.bf16.xpose.msra.mxu0 %v509
    %1133 = vmatprep.subr.bf16.mxu0 0
    %1134 = vmatpush2.bf16.xpose.msra.mxu0 0
    %1135 = vmatprep.subr.bf16.mxu0 0
    %1136 = vmatpush2.bf16.xpose.msra.mxu0 0
    %1137 = vmatprep.subr.bf16.mxu0 0
    %1138 = vmatpush2.bf16.xpose.msra.mxu0 0
    %1139 = vmatprep.subr.bf16.mxu0 0
    %1140 = vmatpush2.bf16.xpose.msra.mxu0 0
    %1141 = vmatprep.subr.bf16.mxu0 0
    %1142 = vmatpush2.bf16.xpose.msra.mxu0 0
    %1143 = vmatprep.subr.bf16.mxu0 0
    %1144 = vmatpush2.bf16.xpose.msra.mxu0 0
    %1145 = vmatprep.subr.bf16.mxu0 0
    %1146 = vmatpush2.bf16.xpose.msra.mxu0 0
    %1147 = vmatprep.subr.bf16.mxu0 0
    %1148 = vmatpush2.bf16.xpose.msra.mxu0 0
    %1149 = vmatprep.mubr.bf16.mxu0 0
    %1150 = vmatmul.mubr.bf16.gmra.mxu0 %v1113
    %v1151 = vpop.f32.mrf.mxu0
    %v1152 = vadd.f32 %v200, %v1151
    %v1153 = vpop.f32.mrf.mxu0
    %v1154 = vpop.f32.mrf.mxu0
    %v1155 = vadd.f32 %v201, %v1154
    %v1156 = vpop.f32.mrf.mxu0
    %1157 = vdwg.mxu0
    %v1158 = vsel %vm561, %v1152, -inf
    %1159 = vmax.xlane.f32.xlu0 %v1158
    %v1160 = vpop.xlane.xlu0 %1159
    %v1161 = vsel %vm561, %v1155, -inf
    %1162 = vmax.xlane.f32.xlu0 %v1161
    %v1163 = vpop.xlane.xlu0 %1162
    %v1164 = vsub.f32 %v1152, %v1160
    %v1165 = vsub.f32 %v1155, %v1163
    %v1166 = vmul.f32 %v1164, 1.442695
    %v1167 = vpow.pop %v1166
    %v1168 = vmul.f32 %v1165, 1.442695
    %v1169 = vpow.pop %v1168
    %v1170 = vsel %vm561, %v1167, 0.0
    %1171 = vadd.xlane.f32.xlu0 %v1170
    %v1172 = vpop.xlane.xlu0 %1171
    %v1173 = vsel %vm561, %v1169, 0.0
    %1174 = vadd.xlane.f32.xlu0 %v1173
    %v1175 = vpop.xlane.xlu0 %1174
    %v1176 = vrcp.pop %v1172
    %v1177 = vrcp.pop %v1175
    %v1178 = vmul.f32 %v1167, %v1176
    %v1179 = vmul.f32 %v1169, %v1177
    %v1180 = vpack.c.bf16 %v1179, %v1178
    %v1182 = vsel %vm561, %v1180, 0
    %1184 = vmatprep.subr.bf16.mxu0 0
    %1185 = vmatpush1.bf16.msra.mxu0 0
    %1186 = vmatprep.subr.bf16.mxu0 0
    %1187 = vmatpush1.bf16.msra.mxu0 0
    %1188 = vmatprep.subr.bf16.mxu0 0
    %1189 = vmatpush1.bf16.msra.mxu0 0
    %1190 = vmatprep.subr.bf16.mxu0 0
    %1191 = vmatpush1.bf16.msra.mxu0 0
    %1192 = vmatprep.subr.bf16.mxu0 0
    %1193 = vmatpush1.bf16.msra.mxu0 0
    %1194 = vmatprep.subr.bf16.mxu0 0
    %1195 = vmatpush1.bf16.msra.mxu0 0
    %1196 = vmatprep.subr.bf16.mxu0 0
    %1197 = vmatpush1.bf16.msra.mxu0 0
    %1198 = vmatprep.subr.bf16.mxu0 0
    %1199 = vmatpush1.bf16.msra.mxu0 %v1116
    %1200 = vmatprep.subr.bf16.mxu0 0
    %1201 = vmatpush2.bf16.msra.mxu0 0
    %1202 = vmatprep.subr.bf16.mxu0 0
    %1203 = vmatpush2.bf16.msra.mxu0 0
    %1204 = vmatprep.subr.bf16.mxu0 0
    %1205 = vmatpush2.bf16.msra.mxu0 0
    %1206 = vmatprep.subr.bf16.mxu0 0
    %1207 = vmatpush2.bf16.msra.mxu0 0
    %1208 = vmatprep.subr.bf16.mxu0 0
    %1209 = vmatpush2.bf16.msra.mxu0 0
    %1210 = vmatprep.subr.bf16.mxu0 0
    %1211 = vmatpush2.bf16.msra.mxu0 0
    %1212 = vmatprep.subr.bf16.mxu0 0
    %1213 = vmatpush2.bf16.msra.mxu0 0
    %1214 = vmatprep.subr.bf16.mxu0 0
    %1215 = vmatpush2.bf16.msra.mxu0 0
    %1216 = vmatprep.mubr.bf16.mxu0 0
    %1217 = vmatmul.mubr.bf16.gmra.mxu0 %v1182
    %v1218 = vpop.f32.mrf.mxu0
    %v1219 = vadd.f32 0.0, %v1218
    %v1220 = vpop.f32.mrf.mxu0
    %v1221 = vpop.f32.mrf.mxu0
    %v1222 = vadd.f32 0.0, %v1221
    %v1223 = vpop.f32.mrf.mxu0
    %1224 = vdwg.mxu0
    %v1225 = vadd.f32 %v1105, %v1219
    %v1226 = vadd.f32 %v1106, %v1222
    %v1227 = vld [vmem:[#allocation13] sm:$0xf]
    %v1228 = vld [vmem:[#allocation13 + $0x4] sm:$0xf]
    %v1229 = vld [vmem:[#allocation13 + $0x8] sm:$0xf]
    %v1230 = vld [vmem:[#allocation13 + $0xc] sm:$0xf]
    %v1231 = vld [vmem:[#allocation13 + $0x10] sm:$0xf]
    %v1232 = vld [vmem:[#allocation13 + $0x14] sm:$0xf]
    %v1233 = vld [vmem:[#allocation13 + $0x18] sm:$0xf]
    %v1234 = vld [vmem:[#allocation13 + $0x1c] sm:$0xf]
    %v1235 = vld [vmem:[#allocation13 + $0x20] sm:$0xf]
    %v1236 = vld [vmem:[#allocation13 + $0x24] sm:$0xf]
    %v1237 = vld [vmem:[#allocation13 + $0x28] sm:$0xf]
    %v1238 = vld [vmem:[#allocation13 + $0x2c] sm:$0xf]
    %v1239 = vld [vmem:[#allocation13 + $0x30] sm:$0xf]
    %v1240 = vld [vmem:[#allocation13 + $0x34] sm:$0xf]
    %v1241 = vld [vmem:[#allocation13 + $0x38] sm:$0xf]
    %v1242 = vld [vmem:[#allocation13 + $0x3c] sm:$0xf]
    %v1243 = vld [vmem:[%s8] sm:$0x1]
    %v1244 = vpack.c.bf16 %v1226, %v1225
    %v1246 = vlaneseq
    %v1247 = vshrl.u32 %v1246, 7
    %v1248 = vsub.s32 0, %v1247
    %v1249 = vrot.slane %v1243, %v1248
    %v1267 = vunpack.c.l.b16 %v1227
    %v1268 = vunpack.c.l.b16 %v1228
    %v1269 = vunpack.c.l.b16 %v1229
    %v1270 = vunpack.c.l.b16 %v1230
    %v1271 = vunpack.c.l.b16 %v1231
    %v1272 = vunpack.c.l.b16 %v1232
    %v1273 = vunpack.c.l.b16 %v1233
    %v1274 = vunpack.c.l.b16 %v1234
    %v1275 = vunpack.c.l.b16 %v1235
    %v1276 = vunpack.c.l.b16 %v1236
    %v1277 = vunpack.c.l.b16 %v1237
    %v1278 = vunpack.c.l.b16 %v1238
    %v1279 = vunpack.c.l.b16 %v1239
    %v1280 = vunpack.c.l.b16 %v1240
    %v1281 = vunpack.c.l.b16 %v1241
    %v1282 = vunpack.c.l.b16 %v1242
    %v1283 = vpack.c.b16 %v1268, %v1267
    %v1284 = vpack.c.b16 %v1270, %v1269
    %v1285 = vpack.c.b16 %v1272, %v1271
    %v1286 = vpack.c.b16 %v1274, %v1273
    %v1287 = vpack.c.b16 %v1276, %v1275
    %v1288 = vpack.c.b16 %v1278, %v1277
    %v1289 = vpack.c.b16 %v1280, %v1279
    %v1290 = vpack.c.b16 %v1282, %v1281
    %1299 = vmatprep.subr.bf16.mxu0 0
    %1300 = vmatpush1.bf16.msra.mxu0 %v1290
    %1301 = vmatprep.subr.bf16.mxu0 0
    %1302 = vmatpush1.bf16.msra.mxu0 %v1289
    %1303 = vmatprep.subr.bf16.mxu0 0
    %1304 = vmatpush1.bf16.msra.mxu0 %v1288
    %1305 = vmatprep.subr.bf16.mxu0 0
    %1306 = vmatpush1.bf16.msra.mxu0 %v1287
    %1307 = vmatprep.subr.bf16.mxu0 0
    %1308 = vmatpush1.bf16.msra.mxu0 %v1286
    %1309 = vmatprep.subr.bf16.mxu0 0
    %1310 = vmatpush1.bf16.msra.mxu0 %v1285
    %1311 = vmatprep.subr.bf16.mxu0 0
    %1312 = vmatpush1.bf16.msra.mxu0 %v1284
    %1313 = vmatprep.subr.bf16.mxu0 0
    %1314 = vmatpush1.bf16.msra.mxu0 %v1283
    %1315 = vmatprep.subr.bf16.mxu0 0
    %1316 = vmatpush2.bf16.msra.mxu0 0
    %1317 = vmatprep.subr.bf16.mxu0 0
    %1318 = vmatpush2.bf16.msra.mxu0 0
    %1319 = vmatprep.subr.bf16.mxu0 0
    %1320 = vmatpush2.bf16.msra.mxu0 0
    %1321 = vmatprep.subr.bf16.mxu0 0
    %1322 = vmatpush2.bf16.msra.mxu0 0
    %1323 = vmatprep.subr.bf16.mxu0 0
    %1324 = vmatpush2.bf16.msra.mxu0 0
    %1325 = vmatprep.subr.bf16.mxu0 0
    %1326 = vmatpush2.bf16.msra.mxu0 0
    %1327 = vmatprep.subr.bf16.mxu0 0
    %1328 = vmatpush2.bf16.msra.mxu0 0
    %1329 = vmatprep.subr.bf16.mxu0 0
    %1330 = vmatpush2.bf16.msra.mxu0 0
    %1331 = vmatprep.mubr.bf16.mxu0 0
    %1332 = vmatmul.mubr.bf16.gmra.mxu0 %v1244
    %v1333 = vpop.f32.mrf.mxu0
    %v1334 = vadd.f32 %v1249, %v1333
    %v1335 = vpop.f32.mrf.mxu0
    %v1336 = vpop.f32.mrf.mxu0
    %v1337 = vadd.f32 %v1249, %v1336
    %v1338 = vpop.f32.mrf.mxu0
    %1339 = vdwg.mxu0
    %v1340 = vadd.f32 %v198, %v1334
    %v1341 = vadd.f32 %v199, %v1337
    %v1342 = vld [vmem:[%s9] sm:$0x1]
    %v1343 = vld [vmem:[%s10] sm:$0x1]
    %1344 = vadd.xlane.f32.xlu0 %v1340
    %v1345 = vpop.xlane.xlu0 %1344
    %1346 = vadd.xlane.f32.xlu0 %v1341
    %v1347 = vpop.xlane.xlu0 %1346
    %v1348 = vmul.f32 %v1345, 0.020833334
    %v1349 = vmul.f32 %v1347, 0.020833334
    %v1350 = vmul.f32 %v1340, %v1340
    %v1351 = vmul.f32 %v1341, %v1341
    %1352 = vadd.xlane.f32.xlu0 %v1350
    %v1353 = vpop.xlane.xlu0 %1352
    %1354 = vadd.xlane.f32.xlu0 %v1351
    %v1355 = vpop.xlane.xlu0 %1354
    %v1356 = vmul.f32 %v1353, 0.020833334
    %v1357 = vmul.f32 %v1355, 0.020833334
    %v1358 = vmul.f32 %v1348, %v1348
    %v1359 = vmul.f32 %v1349, %v1349
    %v1360 = vsub.f32 %v1356, %v1358
    %v1361 = vsub.f32 %v1357, %v1359
    %v1362 = vsub.f32 %v1340, %v1348
    %v1363 = vsub.f32 %v1341, %v1349
    %v1364 = vadd.f32 %v1360, 1e-05
    %v1365 = vadd.f32 %v1361, 1e-05
    %v1366 = vrsqrt.pop %v1364
    %v1367 = vrsqrt.pop %v1365
    %v1368 = vmul.f32 %v1362, %v1366
    %v1369 = vmul.f32 %v1363, %v1367
    %v1371 = vlaneseq
    %v1372 = vshrl.u32 %v1371, 7
    %v1373 = vsub.s32 0, %v1372
    %v1374 = vrot.slane %v1342, %v1373
    %v1376 = vmul.f32 %v1368, %v1374
    %v1377 = vmul.f32 %v1369, %v1374
    %v1379 = vlaneseq
    %v1380 = vshrl.u32 %v1379, 7
    %v1381 = vsub.s32 0, %v1380
    %v1382 = vrot.slane %v1343, %v1381
    %v1384 = vadd.f32 %v1376, %v1382
    %v1385 = vadd.f32 %v1377, %v1382
    %v1386 = vld [vmem:[#allocation14] sm:$0xff]
    %v1387 = vld [vmem:[#allocation14 + $0x8] sm:$0xff]
    %v1388 = vld [vmem:[#allocation14 + $0x10] sm:$0xff]
    %v1389 = vld [vmem:[#allocation14 + $0x18] sm:$0xff]
    %v1390 = vld [vmem:[#allocation14 + $0x20] sm:$0xff]
    %v1391 = vld [vmem:[#allocation14 + $0x28] sm:$0xff]
    %v1392 = vld [vmem:[#allocation14 + $0x30] sm:$0xff]
    %v1393 = vld [vmem:[#allocation14 + $0x38] sm:$0xff]
    %v1394 = vld [vmem:[#allocation14 + $0x40] sm:$0xff]
    %v1395 = vld [vmem:[#allocation14 + $0x48] sm:$0xff]
    %v1396 = vld [vmem:[#allocation14 + $0x50] sm:$0xff]
    %v1397 = vld [vmem:[#allocation14 + $0x58] sm:$0xff]
    %v1398 = vld [vmem:[#allocation14 + $0x60] sm:$0xff]
    %v1399 = vld [vmem:[#allocation14 + $0x68] sm:$0xff]
    %v1400 = vld [vmem:[#allocation14 + $0x70] sm:$0xff]
    %v1401 = vld [vmem:[#allocation14 + $0x78] sm:$0xff]
    %v1402 = vld [vmem:[%s12] sm:$0x3]
    %v1403 = vpack.c.bf16 %v1385, %v1384
    %v1405 = vlaneseq
    %v1406 = vshrl.u32 %v1405, 7
    %v1407 = vsub.s32 0, %v1406
    %v1408 = vrot.slane %v1402, %v1407
    %v1409 = vlaneseq
    %v1410 = vshrl.u32 %v1409, 7
    %v1411 = vsub.s32 1, %v1410
    %v1412 = vrot.slane %v1402, %v1411
    %v1431 = vunpack.c.l.b16 %v1386
    %v1432 = vunpack.c.h.b16 %v1386
    %v1433 = vunpack.c.l.b16 %v1387
    %v1434 = vunpack.c.h.b16 %v1387
    %v1435 = vunpack.c.l.b16 %v1388
    %v1436 = vunpack.c.h.b16 %v1388
    %v1437 = vunpack.c.l.b16 %v1389
    %v1438 = vunpack.c.h.b16 %v1389
    %v1439 = vunpack.c.l.b16 %v1390
    %v1440 = vunpack.c.h.b16 %v1390
    %v1441 = vunpack.c.l.b16 %v1391
    %v1442 = vunpack.c.h.b16 %v1391
    %v1443 = vunpack.c.l.b16 %v1392
    %v1444 = vunpack.c.h.b16 %v1392
    %v1445 = vunpack.c.l.b16 %v1393
    %v1446 = vunpack.c.h.b16 %v1393
    %v1447 = vunpack.c.l.b16 %v1394
    %v1448 = vunpack.c.h.b16 %v1394
    %v1449 = vunpack.c.l.b16 %v1395
    %v1450 = vunpack.c.h.b16 %v1395
    %v1451 = vunpack.c.l.b16 %v1396
    %v1452 = vunpack.c.h.b16 %v1396
    %v1453 = vunpack.c.l.b16 %v1397
    %v1454 = vunpack.c.h.b16 %v1397
    %v1455 = vunpack.c.l.b16 %v1398
    %v1456 = vunpack.c.h.b16 %v1398
    %v1457 = vunpack.c.l.b16 %v1399
    %v1458 = vunpack.c.h.b16 %v1399
    %v1459 = vunpack.c.l.b16 %v1400
    %v1460 = vunpack.c.h.b16 %v1400
    %v1461 = vunpack.c.l.b16 %v1401
    %v1462 = vunpack.c.h.b16 %v1401
    %v1463 = vpack.c.b16 %v1433, %v1431
    %v1464 = vpack.c.b16 %v1434, %v1432
    %v1465 = vpack.c.b16 %v1437, %v1435
    %v1466 = vpack.c.b16 %v1438, %v1436
    %v1467 = vpack.c.b16 %v1441, %v1439
    %v1468 = vpack.c.b16 %v1442, %v1440
    %v1469 = vpack.c.b16 %v1445, %v1443
    %v1470 = vpack.c.b16 %v1446, %v1444
    %v1471 = vpack.c.b16 %v1449, %v1447
    %v1472 = vpack.c.b16 %v1450, %v1448
    %v1473 = vpack.c.b16 %v1453, %v1451
    %v1474 = vpack.c.b16 %v1454, %v1452
    %v1475 = vpack.c.b16 %v1457, %v1455
    %v1476 = vpack.c.b16 %v1458, %v1456
    %v1477 = vpack.c.b16 %v1461, %v1459
    %v1478 = vpack.c.b16 %v1462, %v1460
    %1495 = vmatprep.subr.bf16.mxu0 %v1478
    %1496 = vmatpush1.bf16.msra.mxu0 %v1477
    %1497 = vmatprep.subr.bf16.mxu0 %v1476
    %1498 = vmatpush1.bf16.msra.mxu0 %v1475
    %1499 = vmatprep.subr.bf16.mxu0 %v1474
    %1500 = vmatpush1.bf16.msra.mxu0 %v1473
    %1501 = vmatprep.subr.bf16.mxu0 %v1472
    %1502 = vmatpush1.bf16.msra.mxu0 %v1471
    %1503 = vmatprep.subr.bf16.mxu0 %v1470
    %1504 = vmatpush1.bf16.msra.mxu0 %v1469
    %1505 = vmatprep.subr.bf16.mxu0 %v1468
    %1506 = vmatpush1.bf16.msra.mxu0 %v1467
    %1507 = vmatprep.subr.bf16.mxu0 %v1466
    %1508 = vmatpush1.bf16.msra.mxu0 %v1465
    %1509 = vmatprep.subr.bf16.mxu0 %v1464
    %1510 = vmatpush1.bf16.msra.mxu0 %v1463
    %1511 = vmatprep.subr.bf16.mxu0 0
    %1512 = vmatpush2.bf16.msra.mxu0 0
    %1513 = vmatprep.subr.bf16.mxu0 0
    %1514 = vmatpush2.bf16.msra.mxu0 0
    %1515 = vmatprep.subr.bf16.mxu0 0
    %1516 = vmatpush2.bf16.msra.mxu0 0
    %1517 = vmatprep.subr.bf16.mxu0 0
    %1518 = vmatpush2.bf16.msra.mxu0 0
    %1519 = vmatprep.subr.bf16.mxu0 0
    %1520 = vmatpush2.bf16.msra.mxu0 0
    %1521 = vmatprep.subr.bf16.mxu0 0
    %1522 = vmatpush2.bf16.msra.mxu0 0
    %1523 = vmatprep.subr.bf16.mxu0 0
    %1524 = vmatpush2.bf16.msra.mxu0 0
    %1525 = vmatprep.subr.bf16.mxu0 0
    %1526 = vmatpush2.bf16.msra.mxu0 0
    %1527 = vmatprep.mubr.bf16.mxu0 0
    %1528 = vmatmul.mubr.bf16.gmra.mxu0 %v1403
    %v1529 = vpop.f32.mrf.mxu0
    %v1530 = vadd.f32 %v1408, %v1529
    %v1531 = vpop.f32.mrf.mxu0
    %v1532 = vadd.f32 %v1412, %v1531
    %v1533 = vpop.f32.mrf.mxu0
    %v1534 = vadd.f32 %v1408, %v1533
    %v1535 = vpop.f32.mrf.mxu0
    %v1536 = vadd.f32 %v1412, %v1535
    %1537 = vdwg.mxu0
    %v1538 = vmax.f32 %v1530, 0.0
    %v1539 = vmax.f32 %v1532, 0.0
    %v1540 = vmax.f32 %v1534, 0.0
    %v1541 = vmax.f32 %v1536, 0.0
    %v1542 = vld [vmem:[#allocation16] sm:$0xf]
    %v1543 = vld [vmem:[#allocation16 + $0x4] sm:$0xf]
    %v1544 = vld [vmem:[#allocation16 + $0x8] sm:$0xf]
    %v1545 = vld [vmem:[#allocation16 + $0xc] sm:$0xf]
    %v1546 = vld [vmem:[#allocation16 + $0x10] sm:$0xf]
    %v1547 = vld [vmem:[#allocation16 + $0x14] sm:$0xf]
    %v1548 = vld [vmem:[#allocation16 + $0x18] sm:$0xf]
    %v1549 = vld [vmem:[#allocation16 + $0x1c] sm:$0xf]
    %v1550 = vld [vmem:[#allocation16 + $0x20] sm:$0xf]
    %v1551 = vld [vmem:[#allocation16 + $0x24] sm:$0xf]
    %v1552 = vld [vmem:[#allocation16 + $0x28] sm:$0xf]
    %v1553 = vld [vmem:[#allocation16 + $0x2c] sm:$0xf]
    %v1554 = vld [vmem:[#allocation16 + $0x30] sm:$0xf]
    %v1555 = vld [vmem:[#allocation16 + $0x34] sm:$0xf]
    %v1556 = vld [vmem:[#allocation16 + $0x38] sm:$0xf]
    %v1557 = vld [vmem:[#allocation16 + $0x3c] sm:$0xf]
    %v1558 = vld [vmem:[#allocation16 + $0x40] sm:$0xf]
    %v1559 = vld [vmem:[#allocation16 + $0x44] sm:$0xf]
    %v1560 = vld [vmem:[#allocation16 + $0x48] sm:$0xf]
    %v1561 = vld [vmem:[#allocation16 + $0x4c] sm:$0xf]
    %v1562 = vld [vmem:[#allocation16 + $0x50] sm:$0xf]
    %v1563 = vld [vmem:[#allocation16 + $0x54] sm:$0xf]
    %v1564 = vld [vmem:[#allocation16 + $0x58] sm:$0xf]
    %v1565 = vld [vmem:[#allocation16 + $0x5c] sm:$0xf]
    %v1566 = vld [vmem:[#allocation16 + $0x60] sm:$0xf]
    %v1567 = vld [vmem:[#allocation16 + $0x64] sm:$0xf]
    %v1568 = vld [vmem:[#allocation16 + $0x68] sm:$0xf]
    %v1569 = vld [vmem:[#allocation16 + $0x6c] sm:$0xf]
    %v1570 = vld [vmem:[#allocation16 + $0x70] sm:$0xf]
    %v1571 = vld [vmem:[#allocation16 + $0x74] sm:$0xf]
    %v1572 = vld [vmem:[#allocation16 + $0x78] sm:$0xf]
    %v1573 = vld [vmem:[#allocation16 + $0x7c] sm:$0xf]
    %v1574 = vld [vmem:[%s14] sm:$0x1]
    %v1575 = vpack.c.bf16 %v1540, %v1538
    %v1576 = vpack.c.bf16 %v1541, %v1539
    %v1578 = vlaneseq
    %v1579 = vshrl.u32 %v1578, 7
    %v1580 = vsub.s32 0, %v1579
    %v1581 = vrot.slane %v1574, %v1580
    %v1615 = vunpack.c.l.b16 %v1542
    %v1616 = vunpack.c.l.b16 %v1543
    %v1617 = vunpack.c.l.b16 %v1544
    %v1618 = vunpack.c.l.b16 %v1545
    %v1619 = vunpack.c.l.b16 %v1546
    %v1620 = vunpack.c.l.b16 %v1547
    %v1621 = vunpack.c.l.b16 %v1548
    %v1622 = vunpack.c.l.b16 %v1549
    %v1623 = vunpack.c.l.b16 %v1550
    %v1624 = vunpack.c.l.b16 %v1551
    %v1625 = vunpack.c.l.b16 %v1552
    %v1626 = vunpack.c.l.b16 %v1553
    %v1627 = vunpack.c.l.b16 %v1554
    %v1628 = vunpack.c.l.b16 %v1555
    %v1629 = vunpack.c.l.b16 %v1556
    %v1630 = vunpack.c.l.b16 %v1557
    %v1631 = vunpack.c.l.b16 %v1558
    %v1632 = vunpack.c.l.b16 %v1559
    %v1633 = vunpack.c.l.b16 %v1560
    %v1634 = vunpack.c.l.b16 %v1561
    %v1635 = vunpack.c.l.b16 %v1562
    %v1636 = vunpack.c.l.b16 %v1563
    %v1637 = vunpack.c.l.b16 %v1564
    %v1638 = vunpack.c.l.b16 %v1565
    %v1639 = vunpack.c.l.b16 %v1566
    %v1640 = vunpack.c.l.b16 %v1567
    %v1641 = vunpack.c.l.b16 %v1568
    %v1642 = vunpack.c.l.b16 %v1569
    %v1643 = vunpack.c.l.b16 %v1570
    %v1644 = vunpack.c.l.b16 %v1571
    %v1645 = vunpack.c.l.b16 %v1572
    %v1646 = vunpack.c.l.b16 %v1573
    %v1647 = vpack.c.b16 %v1616, %v1615
    %v1648 = vpack.c.b16 %v1618, %v1617
    %v1649 = vpack.c.b16 %v1620, %v1619
    %v1650 = vpack.c.b16 %v1622, %v1621
    %v1651 = vpack.c.b16 %v1624, %v1623
    %v1652 = vpack.c.b16 %v1626, %v1625
    %v1653 = vpack.c.b16 %v1628, %v1627
    %v1654 = vpack.c.b16 %v1630, %v1629
    %v1655 = vpack.c.b16 %v1632, %v1631
    %v1656 = vpack.c.b16 %v1634, %v1633
    %v1657 = vpack.c.b16 %v1636, %v1635
    %v1658 = vpack.c.b16 %v1638, %v1637
    %v1659 = vpack.c.b16 %v1640, %v1639
    %v1660 = vpack.c.b16 %v1642, %v1641
    %v1661 = vpack.c.b16 %v1644, %v1643
    %v1662 = vpack.c.b16 %v1646, %v1645
    %1679 = vmatprep.subr.bf16.mxu0 0
    %1680 = vmatpush1.bf16.msra.mxu0 %v1654
    %1681 = vmatprep.subr.bf16.mxu0 0
    %1682 = vmatpush1.bf16.msra.mxu0 %v1653
    %1683 = vmatprep.subr.bf16.mxu0 0
    %1684 = vmatpush1.bf16.msra.mxu0 %v1652
    %1685 = vmatprep.subr.bf16.mxu0 0
    %1686 = vmatpush1.bf16.msra.mxu0 %v1651
    %1687 = vmatprep.subr.bf16.mxu0 0
    %1688 = vmatpush1.bf16.msra.mxu0 %v1650
    %1689 = vmatprep.subr.bf16.mxu0 0
    %1690 = vmatpush1.bf16.msra.mxu0 %v1649
    %1691 = vmatprep.subr.bf16.mxu0 0
    %1692 = vmatpush1.bf16.msra.mxu0 %v1648
    %1693 = vmatprep.subr.bf16.mxu0 0
    %1694 = vmatpush1.bf16.msra.mxu0 %v1647
    %1695 = vmatprep.subr.bf16.mxu0 0
    %1696 = vmatpush2.bf16.msra.mxu0 %v1662
    %1697 = vmatprep.subr.bf16.mxu0 0
    %1698 = vmatpush2.bf16.msra.mxu0 %v1661
    %1699 = vmatprep.subr.bf16.mxu0 0
    %1700 = vmatpush2.bf16.msra.mxu0 %v1660
    %1701 = vmatprep.subr.bf16.mxu0 0
    %1702 = vmatpush2.bf16.msra.mxu0 %v1659
    %1703 = vmatprep.subr.bf16.mxu0 0
    %1704 = vmatpush2.bf16.msra.mxu0 %v1658
    %1705 = vmatprep.subr.bf16.mxu0 0
    %1706 = vmatpush2.bf16.msra.mxu0 %v1657
    %1707 = vmatprep.subr.bf16.mxu0 0
    %1708 = vmatpush2.bf16.msra.mxu0 %v1656
    %1709 = vmatprep.subr.bf16.mxu0 0
    %1710 = vmatpush2.bf16.msra.mxu0 %v1655
    %1711 = vmatprep.mubr.bf16.mxu0 %v1576
    %1712 = vmatmul.mubr.bf16.gmra.mxu0 %v1575
    %v1713 = vpop.f32.mrf.mxu0
    %v1714 = vadd.f32 %v1581, %v1713
    %v1715 = vpop.f32.mrf.mxu0
    %v1716 = vpop.f32.mrf.mxu0
    %v1717 = vadd.f32 %v1581, %v1716
    %v1718 = vpop.f32.mrf.mxu0
    %1719 = vdwg.mxu0
    %v1720 = vadd.f32 %v1340, %v1714
    %v1721 = vadd.f32 %v1341, %v1717
    %s1722 = scalar_lea.vmem [#allocation8], 1
    %v1723 = vld [vmem:[%s1722] sm:$0x1]
    %s1724 = scalar_lea.vmem [#allocation10], 1
    %v1725 = vld [vmem:[%s1724] sm:$0x1]
    %1726 = vadd.xlane.f32.xlu0 %v1720
    %v1727 = vpop.xlane.xlu0 %1726
    %1728 = vadd.xlane.f32.xlu0 %v1721
    %v1729 = vpop.xlane.xlu0 %1728
    %v1730 = vmul.f32 %v1727, 0.020833334
    %v1731 = vmul.f32 %v1729, 0.020833334
    %v1732 = vmul.f32 %v1720, %v1720
    %v1733 = vmul.f32 %v1721, %v1721
    %1734 = vadd.xlane.f32.xlu0 %v1732
    %v1735 = vpop.xlane.xlu0 %1734
    %1736 = vadd.xlane.f32.xlu0 %v1733
    %v1737 = vpop.xlane.xlu0 %1736
    %v1738 = vmul.f32 %v1735, 0.020833334
    %v1739 = vmul.f32 %v1737, 0.020833334
    %v1740 = vmul.f32 %v1730, %v1730
    %v1741 = vmul.f32 %v1731, %v1731
    %v1742 = vsub.f32 %v1738, %v1740
    %v1743 = vsub.f32 %v1739, %v1741
    %v1744 = vsub.f32 %v1720, %v1730
    %v1745 = vsub.f32 %v1721, %v1731
    %v1746 = vadd.f32 %v1742, 1e-05
    %v1747 = vadd.f32 %v1743, 1e-05
    %v1748 = vrsqrt.pop %v1746
    %v1749 = vrsqrt.pop %v1747
    %v1750 = vmul.f32 %v1744, %v1748
    %v1751 = vmul.f32 %v1745, %v1749
    %v1753 = vlaneseq
    %v1754 = vshrl.u32 %v1753, 7
    %v1755 = vsub.s32 0, %v1754
    %v1756 = vrot.slane %v1723, %v1755
    %v1758 = vmul.f32 %v1750, %v1756
    %v1759 = vmul.f32 %v1751, %v1756
    %v1761 = vlaneseq
    %v1762 = vshrl.u32 %v1761, 7
    %v1763 = vsub.s32 0, %v1762
    %v1764 = vrot.slane %v1725, %v1763
    %v1766 = vadd.f32 %v1758, %v1764
    %v1767 = vadd.f32 %v1759, %v1764
    %s1768 = scalar_lea.vmem [#allocation11], 192
    %v1769 = vld [vmem:[%s1768] sm:$0xff]
    %v1770 = vld [vmem:[%s1768 + $0x8] sm:$0xf]
    %v1771 = vld [vmem:[%s1768 + $0xc] sm:$0xff]
    %v1772 = vld [vmem:[%s1768 + $0x14] sm:$0xf]
    %v1773 = vld [vmem:[%s1768 + $0x18] sm:$0xff]
    %v1774 = vld [vmem:[%s1768 + $0x20] sm:$0xf]
    %v1775 = vld [vmem:[%s1768 + $0x24] sm:$0xff]
    %v1776 = vld [vmem:[%s1768 + $0x2c] sm:$0xf]
    %v1777 = vld [vmem:[%s1768 + $0x30] sm:$0xff]
    %v1778 = vld [vmem:[%s1768 + $0x38] sm:$0xf]
    %v1779 = vld [vmem:[%s1768 + $0x3c] sm:$0xff]
    %v1780 = vld [vmem:[%s1768 + $0x44] sm:$0xf]
    %v1781 = vld [vmem:[%s1768 + $0x48] sm:$0xff]
    %v1782 = vld [vmem:[%s1768 + $0x50] sm:$0xf]
    %v1783 = vld [vmem:[%s1768 + $0x54] sm:$0xff]
    %v1784 = vld [vmem:[%s1768 + $0x5c] sm:$0xf]
    %v1785 = vld [vmem:[%s1768 + $0x60] sm:$0xff]
    %v1786 = vld [vmem:[%s1768 + $0x68] sm:$0xf]
    %v1787 = vld [vmem:[%s1768 + $0x6c] sm:$0xff]
    %v1788 = vld [vmem:[%s1768 + $0x74] sm:$0xf]
    %v1789 = vld [vmem:[%s1768 + $0x78] sm:$0xff]
    %v1790 = vld [vmem:[%s1768 + $0x80] sm:$0xf]
    %v1791 = vld [vmem:[%s1768 + $0x84] sm:$0xff]
    %v1792 = vld [vmem:[%s1768 + $0x8c] sm:$0xf]
    %v1793 = vld [vmem:[%s1768 + $0x90] sm:$0xff]
    %v1794 = vld [vmem:[%s1768 + $0x98] sm:$0xf]
    %v1795 = vld [vmem:[%s1768 + $0x9c] sm:$0xff]
    %v1796 = vld [vmem:[%s1768 + $0xa4] sm:$0xf]
    %v1797 = vld [vmem:[%s1768 + $0xa8] sm:$0xff]
    %v1798 = vld [vmem:[%s1768 + $0xb0] sm:$0xf]
    %v1799 = vld [vmem:[%s1768 + $0xb4] sm:$0xff]
    %v1800 = vld [vmem:[%s1768 + $0xbc] sm:$0xf]
    %s1801 = scalar_lea.vmem %s6, 3
    %v1802 = vld [vmem:[%s1801] sm:$0x7]
    %v1803 = vpack.c.bf16 %v1767, %v1766
    %v1805 = vlaneseq
    %v1806 = vshrl.u32 %v1805, 7
    %v1807 = vsub.s32 0, %v1806
    %v1808 = vrot.slane %v1802, %v1807
    %v1809 = vlaneseq
    %v1810 = vshrl.u32 %v1809, 7
    %v1811 = vsub.s32 1, %v1810
    %v1812 = vrot.slane %v1802, %v1811
    %v1813 = vlaneseq
    %v1814 = vshrl.u32 %v1813, 7
    %v1815 = vsub.s32 2, %v1814
    %v1816 = vrot.slane %v1802, %v1815
    %v1852 = vunpack.c.l.b16 %v1769
    %v1853 = vunpack.c.h.b16 %v1769
    %v1854 = vunpack.c.l.b16 %v1770
    %v1855 = vunpack.c.l.b16 %v1771
    %v1856 = vunpack.c.h.b16 %v1771
    %v1857 = vunpack.c.l.b16 %v1772
    %v1858 = vunpack.c.l.b16 %v1773
    %v1859 = vunpack.c.h.b16 %v1773
    %v1860 = vunpack.c.l.b16 %v1774
    %v1861 = vunpack.c.l.b16 %v1775
    %v1862 = vunpack.c.h.b16 %v1775
    %v1863 = vunpack.c.l.b16 %v1776
    %v1864 = vunpack.c.l.b16 %v1777
    %v1865 = vunpack.c.h.b16 %v1777
    %v1866 = vunpack.c.l.b16 %v1778
    %v1867 = vunpack.c.l.b16 %v1779
    %v1868 = vunpack.c.h.b16 %v1779
    %v1869 = vunpack.c.l.b16 %v1780
    %v1870 = vunpack.c.l.b16 %v1781
    %v1871 = vunpack.c.h.b16 %v1781
    %v1872 = vunpack.c.l.b16 %v1782
    %v1873 = vunpack.c.l.b16 %v1783
    %v1874 = vunpack.c.h.b16 %v1783
    %v1875 = vunpack.c.l.b16 %v1784
    %v1876 = vunpack.c.l.b16 %v1785
    %v1877 = vunpack.c.h.b16 %v1785
    %v1878 = vunpack.c.l.b16 %v1786
    %v1879 = vunpack.c.l.b16 %v1787
    %v1880 = vunpack.c.h.b16 %v1787
    %v1881 = vunpack.c.l.b16 %v1788
    %v1882 = vunpack.c.l.b16 %v1789
    %v1883 = vunpack.c.h.b16 %v1789
    %v1884 = vunpack.c.l.b16 %v1790
    %v1885 = vunpack.c.l.b16 %v1791
    %v1886 = vunpack.c.h.b16 %v1791
    %v1887 = vunpack.c.l.b16 %v1792
    %v1888 = vunpack.c.l.b16 %v1793
    %v1889 = vunpack.c.h.b16 %v1793
    %v1890 = vunpack.c.l.b16 %v1794
    %v1891 = vunpack.c.l.b16 %v1795
    %v1892 = vunpack.c.h.b16 %v1795
    %v1893 = vunpack.c.l.b16 %v1796
    %v1894 = vunpack.c.l.b16 %v1797
    %v1895 = vunpack.c.h.b16 %v1797
    %v1896 = vunpack.c.l.b16 %v1798
    %v1897 = vunpack.c.l.b16 %v1799
    %v1898 = vunpack.c.h.b16 %v1799
    %v1899 = vunpack.c.l.b16 %v1800
    %v1900 = vpack.c.b16 %v1855, %v1852
    %v1901 = vpack.c.b16 %v1856, %v1853
    %v1902 = vpack.c.b16 %v1857, %v1854
    %v1903 = vpack.c.b16 %v1861, %v1858
    %v1904 = vpack.c.b16 %v1862, %v1859
    %v1905 = vpack.c.b16 %v1863, %v1860
    %v1906 = vpack.c.b16 %v1867, %v1864
    %v1907 = vpack.c.b16 %v1868, %v1865
    %v1908 = vpack.c.b16 %v1869, %v1866
    %v1909 = vpack.c.b16 %v1873, %v1870
    %v1910 = vpack.c.b16 %v1874, %v1871
    %v1911 = vpack.c.b16 %v1875, %v1872
    %v1912 = vpack.c.b16 %v1879, %v1876
    %v1913 = vpack.c.b16 %v1880, %v1877
    %v1914 = vpack.c.b16 %v1881, %v1878
    %v1915 = vpack.c.b16 %v1885, %v1882
    %v1916 = vpack.c.b16 %v1886, %v1883
    %v1917 = vpack.c.b16 %v1887, %v1884
    %v1918 = vpack.c.b16 %v1891, %v1888
    %v1919 = vpack.c.b16 %v1892, %v1889
    %v1920 = vpack.c.b16 %v1893, %v1890
    %v1921 = vpack.c.b16 %v1897, %v1894
    %v1922 = vpack.c.b16 %v1898, %v1895
    %v1923 = vpack.c.b16 %v1899, %v1896
    %1948 = vmatprep.subr.bf16.mxu0 %v1922
    %1949 = vmatpush1.bf16.msra.mxu0 %v1921
    %1950 = vmatprep.subr.bf16.mxu0 %v1919
    %1951 = vmatpush1.bf16.msra.mxu0 %v1918
    %1952 = vmatprep.subr.bf16.mxu0 %v1916
    %1953 = vmatpush1.bf16.msra.mxu0 %v1915
    %1954 = vmatprep.subr.bf16.mxu0 %v1913
    %1955 = vmatpush1.bf16.msra.mxu0 %v1912
    %1956 = vmatprep.subr.bf16.mxu0 %v1910
    %1957 = vmatpush1.bf16.msra.mxu0 %v1909
    %1958 = vmatprep.subr.bf16.mxu0 %v1907
    %1959 = vmatpush1.bf16.msra.mxu0 %v1906
    %1960 = vmatprep.subr.bf16.mxu0 %v1904
    %1961 = vmatpush1.bf16.msra.mxu0 %v1903
    %1962 = vmatprep.subr.bf16.mxu0 %v1901
    %1963 = vmatpush1.bf16.msra.mxu0 %v1900
    %1964 = vmatprep.subr.bf16.mxu0 0
    %1965 = vmatpush2.bf16.msra.mxu0 0
    %1966 = vmatprep.subr.bf16.mxu0 0
    %1967 = vmatpush2.bf16.msra.mxu0 0
    %1968 = vmatprep.subr.bf16.mxu0 0
    %1969 = vmatpush2.bf16.msra.mxu0 0
    %1970 = vmatprep.subr.bf16.mxu0 0
    %1971 = vmatpush2.bf16.msra.mxu0 0
    %1972 = vmatprep.subr.bf16.mxu0 0
    %1973 = vmatpush2.bf16.msra.mxu0 0
    %1974 = vmatprep.subr.bf16.mxu0 0
    %1975 = vmatpush2.bf16.msra.mxu0 0
    %1976 = vmatprep.subr.bf16.mxu0 0
    %1977 = vmatpush2.bf16.msra.mxu0 0
    %1978 = vmatprep.subr.bf16.mxu0 0
    %1979 = vmatpush2.bf16.msra.mxu0 0
    %1980 = vmatprep.mubr.bf16.mxu0 0
    %1981 = vmatmul.mubr.bf16.gmra.mxu0 %v1803
    %v1982 = vpop.f32.mrf.mxu0
    %v1983 = vadd.f32 %v1808, %v1982
    %v1984 = vpop.f32.mrf.mxu0
    %v1985 = vadd.f32 %v1812, %v1984
    %v1986 = vpop.f32.mrf.mxu0
    %v1987 = vadd.f32 %v1808, %v1986
    %v1988 = vpop.f32.mrf.mxu0
    %v1989 = vadd.f32 %v1812, %v1988
    %1990 = vdwg.mxu0
    %1991 = vmatprep.subr.bf16.mxu0 0
    %1992 = vmatpush1.bf16.msra.mxu0 %v1923
    %1993 = vmatprep.subr.bf16.mxu0 0
    %1994 = vmatpush1.bf16.msra.mxu0 %v1920
    %1995 = vmatprep.subr.bf16.mxu0 0
    %1996 = vmatpush1.bf16.msra.mxu0 %v1917
    %1997 = vmatprep.subr.bf16.mxu0 0
    %1998 = vmatpush1.bf16.msra.mxu0 %v1914
    %1999 = vmatprep.subr.bf16.mxu0 0
    %2000 = vmatpush1.bf16.msra.mxu0 %v1911
    %2001 = vmatprep.subr.bf16.mxu0 0
    %2002 = vmatpush1.bf16.msra.mxu0 %v1908
    %2003 = vmatprep.subr.bf16.mxu0 0
    %2004 = vmatpush1.bf16.msra.mxu0 %v1905
    %2005 = vmatprep.subr.bf16.mxu0 0
    %2006 = vmatpush1.bf16.msra.mxu0 %v1902
    %2007 = vmatprep.subr.bf16.mxu0 0
    %2008 = vmatpush2.bf16.msra.mxu0 0
    %2009 = vmatprep.subr.bf16.mxu0 0
    %2010 = vmatpush2.bf16.msra.mxu0 0
    %2011 = vmatprep.subr.bf16.mxu0 0
    %2012 = vmatpush2.bf16.msra.mxu0 0
    %2013 = vmatprep.subr.bf16.mxu0 0
    %2014 = vmatpush2.bf16.msra.mxu0 0
    %2015 = vmatprep.subr.bf16.mxu0 0
    %2016 = vmatpush2.bf16.msra.mxu0 0
    %2017 = vmatprep.subr.bf16.mxu0 0
    %2018 = vmatpush2.bf16.msra.mxu0 0
    %2019 = vmatprep.subr.bf16.mxu0 0
    %2020 = vmatpush2.bf16.msra.mxu0 0
    %2021 = vmatprep.subr.bf16.mxu0 0
    %2022 = vmatpush2.bf16.msra.mxu0 0
    %2023 = vmatprep.mubr.bf16.mxu0 0
    %2024 = vmatmul.mubr.bf16.gmra.mxu0 %v1803
    %v2025 = vpop.f32.mrf.mxu0
    %v2026 = vadd.f32 %v1816, %v2025
    %v2027 = vpop.f32.mrf.mxu0
    %v2028 = vpop.f32.mrf.mxu0
    %v2029 = vadd.f32 %v1816, %v2028
    %v2030 = vpop.f32.mrf.mxu0
    %2031 = vdwg.mxu0
    %v2032 = vpack.c.bf16 %v1989, %v1985
    %v2033 = vmul.f32 %v1983, %v513
    %v2034 = vmul.f32 %v1987, %v513
    %v2035 = vpack.c.bf16 %v2034, %v2033
    %v2036 = vmul.f32 %v2026, %v513
    %v2037 = vmul.f32 %v2029, %v513
    %v2038 = vpack.c.bf16 %v2037, %v2036
    %2039 = vmatprep.subr.bf16.mxu0 0
    %2040 = vmatpush1.bf16.xpose.msra.mxu0 0
    %2041 = vmatprep.subr.bf16.mxu0 0
    %2042 = vmatpush1.bf16.xpose.msra.mxu0 0
    %2043 = vmatprep.subr.bf16.mxu0 0
    %2044 = vmatpush1.bf16.xpose.msra.mxu0 0
    %2045 = vmatprep.subr.bf16.mxu0 0
    %2046 = vmatpush1.bf16.xpose.msra.mxu0 0
    %2047 = vmatprep.subr.bf16.mxu0 0
    %2048 = vmatpush1.bf16.xpose.msra.mxu0 0
    %2049 = vmatprep.subr.bf16.mxu0 0
    %2050 = vmatpush1.bf16.xpose.msra.mxu0 0
    %2051 = vmatprep.subr.bf16.mxu0 0
    %2052 = vmatpush1.bf16.xpose.msra.mxu0 0
    %2053 = vmatprep.subr.bf16.mxu0 0
    %2054 = vmatpush1.bf16.xpose.msra.mxu0 %v2032
    %2055 = vmatprep.subr.bf16.mxu0 0
    %2056 = vmatpush2.bf16.xpose.msra.mxu0 0
    %2057 = vmatprep.subr.bf16.mxu0 0
    %2058 = vmatpush2.bf16.xpose.msra.mxu0 0
    %2059 = vmatprep.subr.bf16.mxu0 0
    %2060 = vmatpush2.bf16.xpose.msra.mxu0 0
    %2061 = vmatprep.subr.bf16.mxu0 0
    %2062 = vmatpush2.bf16.xpose.msra.mxu0 0
    %2063 = vmatprep.subr.bf16.mxu0 0
    %2064 = vmatpush2.bf16.xpose.msra.mxu0 0
    %2065 = vmatprep.subr.bf16.mxu0 0
    %2066 = vmatpush2.bf16.xpose.msra.mxu0 0
    %2067 = vmatprep.subr.bf16.mxu0 0
    %2068 = vmatpush2.bf16.xpose.msra.mxu0 0
    %2069 = vmatprep.subr.bf16.mxu0 0
    %2070 = vmatpush2.bf16.xpose.msra.mxu0 0
    %2071 = vmatprep.mubr.bf16.mxu0 0
    %2072 = vmatmul.mubr.bf16.gmra.mxu0 %v2035
    %v2073 = vpop.f32.mrf.mxu0
    %v2074 = vadd.f32 %v200, %v2073
    %v2075 = vpop.f32.mrf.mxu0
    %v2076 = vpop.f32.mrf.mxu0
    %v2077 = vadd.f32 %v201, %v2076
    %v2078 = vpop.f32.mrf.mxu0
    %2079 = vdwg.mxu0
    %v2080 = vsel %vm561, %v2074, -inf
    %2081 = vmax.xlane.f32.xlu0 %v2080
    %v2082 = vpop.xlane.xlu0 %2081
    %v2083 = vsel %vm561, %v2077, -inf
    %2084 = vmax.xlane.f32.xlu0 %v2083
    %v2085 = vpop.xlane.xlu0 %2084
    %v2086 = vsub.f32 %v2074, %v2082
    %v2087 = vsub.f32 %v2077, %v2085
    %v2088 = vmul.f32 %v2086, 1.442695
    %v2089 = vpow.pop %v2088
    %v2090 = vmul.f32 %v2087, 1.442695
    %v2091 = vpow.pop %v2090
    %v2092 = vsel %vm561, %v2089, 0.0
    %2093 = vadd.xlane.f32.xlu0 %v2092
    %v2094 = vpop.xlane.xlu0 %2093
    %v2095 = vsel %vm561, %v2091, 0.0
    %2096 = vadd.xlane.f32.xlu0 %v2095
    %v2097 = vpop.xlane.xlu0 %2096
    %v2098 = vrcp.pop %v2094
    %v2099 = vrcp.pop %v2097
    %v2100 = vmul.f32 %v2089, %v2098
    %v2101 = vmul.f32 %v2091, %v2099
    %v2102 = vpack.c.bf16 %v2101, %v2100
    %v2103 = vmul.f32 %v1983, %v588
    %v2104 = vmul.f32 %v1987, %v588
    %v2105 = vpack.c.bf16 %v2104, %v2103
    %v2106 = vmul.f32 %v2026, %v588
    %v2107 = vmul.f32 %v2029, %v588
    %v2108 = vpack.c.bf16 %v2107, %v2106
    %2109 = vmatprep.subr.bf16.mxu0 0
    %2110 = vmatpush1.bf16.xpose.msra.mxu0 0
    %2111 = vmatprep.subr.bf16.mxu0 0
    %2112 = vmatpush1.bf16.xpose.msra.mxu0 0
    %2113 = vmatprep.subr.bf16.mxu0 0
    %2114 = vmatpush1.bf16.xpose.msra.mxu0 0
    %2115 = vmatprep.subr.bf16.mxu0 0
    %2116 = vmatpush1.bf16.xpose.msra.mxu0 0
    %2117 = vmatprep.subr.bf16.mxu0 0
    %2118 = vmatpush1.bf16.xpose.msra.mxu0 0
    %2119 = vmatprep.subr.bf16.mxu0 0
    %2120 = vmatpush1.bf16.xpose.msra.mxu0 0
    %2121 = vmatprep.subr.bf16.mxu0 0
    %2122 = vmatpush1.bf16.xpose.msra.mxu0 0
    %2123 = vmatprep.subr.bf16.mxu0 0
    %2124 = vmatpush1.bf16.xpose.msra.mxu0 %v2032
    %2125 = vmatprep.subr.bf16.mxu0 0
    %2126 = vmatpush2.bf16.xpose.msra.mxu0 0
    %2127 = vmatprep.subr.bf16.mxu0 0
    %2128 = vmatpush2.bf16.xpose.msra.mxu0 0
    %2129 = vmatprep.subr.bf16.mxu0 0
    %2130 = vmatpush2.bf16.xpose.msra.mxu0 0
    %2131 = vmatprep.subr.bf16.mxu0 0
    %2132 = vmatpush2.bf16.xpose.msra.mxu0 0
    %2133 = vmatprep.subr.bf16.mxu0 0
    %2134 = vmatpush2.bf16.xpose.msra.mxu0 0
    %2135 = vmatprep.subr.bf16.mxu0 0
    %2136 = vmatpush2.bf16.xpose.msra.mxu0 0
    %2137 = vmatprep.subr.bf16.mxu0 0
    %2138 = vmatpush2.bf16.xpose.msra.mxu0 0
    %2139 = vmatprep.subr.bf16.mxu0 0
    %2140 = vmatpush2.bf16.xpose.msra.mxu0 0
    %2141 = vmatprep.mubr.bf16.mxu0 0
    %2142 = vmatmul.mubr.bf16.gmra.mxu0 %v2105
    %v2143 = vpop.f32.mrf.mxu0
    %v2144 = vadd.f32 %v200, %v2143
    %v2145 = vpop.f32.mrf.mxu0
    %v2146 = vpop.f32.mrf.mxu0
    %v2147 = vadd.f32 %v201, %v2146
    %v2148 = vpop.f32.mrf.mxu0
    %2149 = vdwg.mxu0
    %v2150 = vsel %vm561, %v2144, -inf
    %2151 = vmax.xlane.f32.xlu0 %v2150
    %v2152 = vpop.xlane.xlu0 %2151
    %v2153 = vsel %vm561, %v2147, -inf
    %2154 = vmax.xlane.f32.xlu0 %v2153
    %v2155 = vpop.xlane.xlu0 %2154
    %v2156 = vsub.f32 %v2144, %v2152
    %v2157 = vsub.f32 %v2147, %v2155
    %v2158 = vmul.f32 %v2156, 1.442695
    %v2159 = vpow.pop %v2158
    %v2160 = vmul.f32 %v2157, 1.442695
    %v2161 = vpow.pop %v2160
    %v2162 = vsel %vm561, %v2159, 0.0
    %2163 = vadd.xlane.f32.xlu0 %v2162
    %v2164 = vpop.xlane.xlu0 %2163
    %v2165 = vsel %vm561, %v2161, 0.0
    %2166 = vadd.xlane.f32.xlu0 %v2165
    %v2167 = vpop.xlane.xlu0 %2166
    %v2168 = vrcp.pop %v2164
    %v2169 = vrcp.pop %v2167
    %v2170 = vmul.f32 %v2159, %v2168
    %v2171 = vmul.f32 %v2161, %v2169
    %v2172 = vpack.c.bf16 %v2171, %v2170
    %v2174 = vsel %vm561, %v2172, 0
    %2176 = vmatprep.subr.bf16.mxu0 0
    %2177 = vmatpush1.bf16.msra.mxu0 0
    %2178 = vmatprep.subr.bf16.mxu0 0
    %2179 = vmatpush1.bf16.msra.mxu0 0
    %2180 = vmatprep.subr.bf16.mxu0 0
    %2181 = vmatpush1.bf16.msra.mxu0 0
    %2182 = vmatprep.subr.bf16.mxu0 0
    %2183 = vmatpush1.bf16.msra.mxu0 0
    %2184 = vmatprep.subr.bf16.mxu0 0
    %2185 = vmatpush1.bf16.msra.mxu0 0
    %2186 = vmatprep.subr.bf16.mxu0 0
    %2187 = vmatpush1.bf16.msra.mxu0 0
    %2188 = vmatprep.subr.bf16.mxu0 0
    %2189 = vmatpush1.bf16.msra.mxu0 0
    %2190 = vmatprep.subr.bf16.mxu0 0
    %2191 = vmatpush1.bf16.msra.mxu0 %v2108
    %2192 = vmatprep.subr.bf16.mxu0 0
    %2193 = vmatpush2.bf16.msra.mxu0 0
    %2194 = vmatprep.subr.bf16.mxu0 0
    %2195 = vmatpush2.bf16.msra.mxu0 0
    %2196 = vmatprep.subr.bf16.mxu0 0
    %2197 = vmatpush2.bf16.msra.mxu0 0
    %2198 = vmatprep.subr.bf16.mxu0 0
    %2199 = vmatpush2.bf16.msra.mxu0 0
    %2200 = vmatprep.subr.bf16.mxu0 0
    %2201 = vmatpush2.bf16.msra.mxu0 0
    %2202 = vmatprep.subr.bf16.mxu0 0
    %2203 = vmatpush2.bf16.msra.mxu0 0
    %2204 = vmatprep.subr.bf16.mxu0 0
    %2205 = vmatpush2.bf16.msra.mxu0 0
    %2206 = vmatprep.subr.bf16.mxu0 0
    %2207 = vmatpush2.bf16.msra.mxu0 0
    %2208 = vmatprep.mubr.bf16.mxu0 0
    %2209 = vmatmul.mubr.bf16.gmra.mxu0 %v2174
    %v2210 = vpop.f32.mrf.mxu0
    %v2211 = vadd.f32 0.0, %v2210
    %v2212 = vpop.f32.mrf.mxu0
    %v2213 = vpop.f32.mrf.mxu0
    %v2214 = vadd.f32 0.0, %v2213
    %v2215 = vpop.f32.mrf.mxu0
    %2216 = vdwg.mxu0
    %v2218 = vsel %vm561, %v2102, 0
    %2220 = vmatprep.subr.bf16.mxu0 0
    %2221 = vmatpush1.bf16.msra.mxu0 0
    %2222 = vmatprep.subr.bf16.mxu0 0
    %2223 = vmatpush1.bf16.msra.mxu0 0
    %2224 = vmatprep.subr.bf16.mxu0 0
    %2225 = vmatpush1.bf16.msra.mxu0 0
    %2226 = vmatprep.subr.bf16.mxu0 0
    %2227 = vmatpush1.bf16.msra.mxu0 0
    %2228 = vmatprep.subr.bf16.mxu0 0
    %2229 = vmatpush1.bf16.msra.mxu0 0
    %2230 = vmatprep.subr.bf16.mxu0 0
    %2231 = vmatpush1.bf16.msra.mxu0 0
    %2232 = vmatprep.subr.bf16.mxu0 0
    %2233 = vmatpush1.bf16.msra.mxu0 0
    %2234 = vmatprep.subr.bf16.mxu0 0
    %2235 = vmatpush1.bf16.msra.mxu0 %v2038
    %2236 = vmatprep.subr.bf16.mxu0 0
    %2237 = vmatpush2.bf16.msra.mxu0 0
    %2238 = vmatprep.subr.bf16.mxu0 0
    %2239 = vmatpush2.bf16.msra.mxu0 0
    %2240 = vmatprep.subr.bf16.mxu0 0
    %2241 = vmatpush2.bf16.msra.mxu0 0
    %2242 = vmatprep.subr.bf16.mxu0 0
    %2243 = vmatpush2.bf16.msra.mxu0 0
    %2244 = vmatprep.subr.bf16.mxu0 0
    %2245 = vmatpush2.bf16.msra.mxu0 0
    %2246 = vmatprep.subr.bf16.mxu0 0
    %2247 = vmatpush2.bf16.msra.mxu0 0
    %2248 = vmatprep.subr.bf16.mxu0 0
    %2249 = vmatpush2.bf16.msra.mxu0 0
    %2250 = vmatprep.subr.bf16.mxu0 0
    %2251 = vmatpush2.bf16.msra.mxu0 0
    %2252 = vmatprep.mubr.bf16.mxu0 0
    %2253 = vmatmul.mubr.bf16.gmra.mxu0 %v2218
    %v2254 = vpop.f32.mrf.mxu0
    %v2255 = vadd.f32 %v2211, %v2254
    %v2256 = vpop.f32.mrf.mxu0
    %v2257 = vpop.f32.mrf.mxu0
    %v2258 = vadd.f32 %v2214, %v2257
    %v2259 = vpop.f32.mrf.mxu0
    %2260 = vdwg.mxu0
    %v2261 = vmul.f32 %v1983, %v750
    %v2262 = vmul.f32 %v1987, %v750
    %v2263 = vpack.c.bf16 %v2262, %v2261
    %v2264 = vmul.f32 %v2026, %v750
    %v2265 = vmul.f32 %v2029, %v750
    %v2266 = vpack.c.bf16 %v2265, %v2264
    %2267 = vmatprep.subr.bf16.mxu0 0
    %2268 = vmatpush1.bf16.xpose.msra.mxu0 0
    %2269 = vmatprep.subr.bf16.mxu0 0
    %2270 = vmatpush1.bf16.xpose.msra.mxu0 0
    %2271 = vmatprep.subr.bf16.mxu0 0
    %2272 = vmatpush1.bf16.xpose.msra.mxu0 0
    %2273 = vmatprep.subr.bf16.mxu0 0
    %2274 = vmatpush1.bf16.xpose.msra.mxu0 0
    %2275 = vmatprep.subr.bf16.mxu0 0
    %2276 = vmatpush1.bf16.xpose.msra.mxu0 0
    %2277 = vmatprep.subr.bf16.mxu0 0
    %2278 = vmatpush1.bf16.xpose.msra.mxu0 0
    %2279 = vmatprep.subr.bf16.mxu0 0
    %2280 = vmatpush1.bf16.xpose.msra.mxu0 0
    %2281 = vmatprep.subr.bf16.mxu0 0
    %2282 = vmatpush1.bf16.xpose.msra.mxu0 %v2032
    %2283 = vmatprep.subr.bf16.mxu0 0
    %2284 = vmatpush2.bf16.xpose.msra.mxu0 0
    %2285 = vmatprep.subr.bf16.mxu0 0
    %2286 = vmatpush2.bf16.xpose.msra.mxu0 0
    %2287 = vmatprep.subr.bf16.mxu0 0
    %2288 = vmatpush2.bf16.xpose.msra.mxu0 0
    %2289 = vmatprep.subr.bf16.mxu0 0
    %2290 = vmatpush2.bf16.xpose.msra.mxu0 0
    %2291 = vmatprep.subr.bf16.mxu0 0
    %2292 = vmatpush2.bf16.xpose.msra.mxu0 0
    %2293 = vmatprep.subr.bf16.mxu0 0
    %2294 = vmatpush2.bf16.xpose.msra.mxu0 0
    %2295 = vmatprep.subr.bf16.mxu0 0
    %2296 = vmatpush2.bf16.xpose.msra.mxu0 0
    %2297 = vmatprep.subr.bf16.mxu0 0
    %2298 = vmatpush2.bf16.xpose.msra.mxu0 0
    %2299 = vmatprep.mubr.bf16.mxu0 0
    %2300 = vmatmul.mubr.bf16.gmra.mxu0 %v2263
    %v2301 = vpop.f32.mrf.mxu0
    %v2302 = vadd.f32 %v200, %v2301
    %v2303 = vpop.f32.mrf.mxu0
    %v2304 = vpop.f32.mrf.mxu0
    %v2305 = vadd.f32 %v201, %v2304
    %v2306 = vpop.f32.mrf.mxu0
    %2307 = vdwg.mxu0
    %v2308 = vsel %vm561, %v2302, -inf
    %2309 = vmax.xlane.f32.xlu0 %v2308
    %v2310 = vpop.xlane.xlu0 %2309
    %v2311 = vsel %vm561, %v2305, -inf
    %2312 = vmax.xlane.f32.xlu0 %v2311
    %v2313 = vpop.xlane.xlu0 %2312
    %v2314 = vsub.f32 %v2302, %v2310
    %v2315 = vsub.f32 %v2305, %v2313
    %v2316 = vmul.f32 %v2314, 1.442695
    %v2317 = vpow.pop %v2316
    %v2318 = vmul.f32 %v2315, 1.442695
    %v2319 = vpow.pop %v2318
    %v2320 = vsel %vm561, %v2317, 0.0
    %2321 = vadd.xlane.f32.xlu0 %v2320
    %v2322 = vpop.xlane.xlu0 %2321
    %v2323 = vsel %vm561, %v2319, 0.0
    %2324 = vadd.xlane.f32.xlu0 %v2323
    %v2325 = vpop.xlane.xlu0 %2324
    %v2326 = vrcp.pop %v2322
    %v2327 = vrcp.pop %v2325
    %v2328 = vmul.f32 %v2317, %v2326
    %v2329 = vmul.f32 %v2319, %v2327
    %v2330 = vpack.c.bf16 %v2329, %v2328
    %v2332 = vsel %vm561, %v2330, 0
    %2334 = vmatprep.subr.bf16.mxu0 0
    %2335 = vmatpush1.bf16.msra.mxu0 0
    %2336 = vmatprep.subr.bf16.mxu0 0
    %2337 = vmatpush1.bf16.msra.mxu0 0
    %2338 = vmatprep.subr.bf16.mxu0 0
    %2339 = vmatpush1.bf16.msra.mxu0 0
    %2340 = vmatprep.subr.bf16.mxu0 0
    %2341 = vmatpush1.bf16.msra.mxu0 0
    %2342 = vmatprep.subr.bf16.mxu0 0
    %2343 = vmatpush1.bf16.msra.mxu0 0
    %2344 = vmatprep.subr.bf16.mxu0 0
    %2345 = vmatpush1.bf16.msra.mxu0 0
    %2346 = vmatprep.subr.bf16.mxu0 0
    %2347 = vmatpush1.bf16.msra.mxu0 0
    %2348 = vmatprep.subr.bf16.mxu0 0
    %2349 = vmatpush1.bf16.msra.mxu0 %v2266
    %2350 = vmatprep.subr.bf16.mxu0 0
    %2351 = vmatpush2.bf16.msra.mxu0 0
    %2352 = vmatprep.subr.bf16.mxu0 0
    %2353 = vmatpush2.bf16.msra.mxu0 0
    %2354 = vmatprep.subr.bf16.mxu0 0
    %2355 = vmatpush2.bf16.msra.mxu0 0
    %2356 = vmatprep.subr.bf16.mxu0 0
    %2357 = vmatpush2.bf16.msra.mxu0 0
    %2358 = vmatprep.subr.bf16.mxu0 0
    %2359 = vmatpush2.bf16.msra.mxu0 0
    %2360 = vmatprep.subr.bf16.mxu0 0
    %2361 = vmatpush2.bf16.msra.mxu0 0
    %2362 = vmatprep.subr.bf16.mxu0 0
    %2363 = vmatpush2.bf16.msra.mxu0 0
    %2364 = vmatprep.subr.bf16.mxu0 0
    %2365 = vmatpush2.bf16.msra.mxu0 0
    %2366 = vmatprep.mubr.bf16.mxu0 0
    %2367 = vmatmul.mubr.bf16.gmra.mxu0 %v2332
    %v2368 = vpop.f32.mrf.mxu0
    %v2369 = vadd.f32 0.0, %v2368
    %v2370 = vpop.f32.mrf.mxu0
    %v2371 = vpop.f32.mrf.mxu0
    %v2372 = vadd.f32 0.0, %v2371
    %v2373 = vpop.f32.mrf.mxu0
    %2374 = vdwg.mxu0
    %v2375 = vadd.f32 %v2255, %v2369
    %v2376 = vadd.f32 %v2258, %v2372
    %v2377 = vmul.f32 %v1983, %v870
    %v2378 = vmul.f32 %v1987, %v870
    %v2379 = vpack.c.bf16 %v2378, %v2377
    %v2380 = vmul.f32 %v2026, %v870
    %v2381 = vmul.f32 %v2029, %v870
    %v2382 = vpack.c.bf16 %v2381, %v2380
    %2383 = vmatprep.subr.bf16.mxu0 0
    %2384 = vmatpush1.bf16.xpose.msra.mxu0 0
    %2385 = vmatprep.subr.bf16.mxu0 0
    %2386 = vmatpush1.bf16.xpose.msra.mxu0 0
    %2387 = vmatprep.subr.bf16.mxu0 0
    %2388 = vmatpush1.bf16.xpose.msra.mxu0 0
    %2389 = vmatprep.subr.bf16.mxu0 0
    %2390 = vmatpush1.bf16.xpose.msra.mxu0 0
    %2391 = vmatprep.subr.bf16.mxu0 0
    %2392 = vmatpush1.bf16.xpose.msra.mxu0 0
    %2393 = vmatprep.subr.bf16.mxu0 0
    %2394 = vmatpush1.bf16.xpose.msra.mxu0 0
    %2395 = vmatprep.subr.bf16.mxu0 0
    %2396 = vmatpush1.bf16.xpose.msra.mxu0 0
    %2397 = vmatprep.subr.bf16.mxu0 0
    %2398 = vmatpush1.bf16.xpose.msra.mxu0 %v2032
    %2399 = vmatprep.subr.bf16.mxu0 0
    %2400 = vmatpush2.bf16.xpose.msra.mxu0 0
    %2401 = vmatprep.subr.bf16.mxu0 0
    %2402 = vmatpush2.bf16.xpose.msra.mxu0 0
    %2403 = vmatprep.subr.bf16.mxu0 0
    %2404 = vmatpush2.bf16.xpose.msra.mxu0 0
    %2405 = vmatprep.subr.bf16.mxu0 0
    %2406 = vmatpush2.bf16.xpose.msra.mxu0 0
    %2407 = vmatprep.subr.bf16.mxu0 0
    %2408 = vmatpush2.bf16.xpose.msra.mxu0 0
    %2409 = vmatprep.subr.bf16.mxu0 0
    %2410 = vmatpush2.bf16.xpose.msra.mxu0 0
    %2411 = vmatprep.subr.bf16.mxu0 0
    %2412 = vmatpush2.bf16.xpose.msra.mxu0 0
    %2413 = vmatprep.subr.bf16.mxu0 0
    %2414 = vmatpush2.bf16.xpose.msra.mxu0 0
    %2415 = vmatprep.mubr.bf16.mxu0 0
    %2416 = vmatmul.mubr.bf16.gmra.mxu0 %v2379
    %v2417 = vpop.f32.mrf.mxu0
    %v2418 = vadd.f32 %v200, %v2417
    %v2419 = vpop.f32.mrf.mxu0
    %v2420 = vpop.f32.mrf.mxu0
    %v2421 = vadd.f32 %v201, %v2420
    %v2422 = vpop.f32.mrf.mxu0
    %2423 = vdwg.mxu0
    %v2424 = vsel %vm561, %v2418, -inf
    %2425 = vmax.xlane.f32.xlu0 %v2424
    %v2426 = vpop.xlane.xlu0 %2425
    %v2427 = vsel %vm561, %v2421, -inf
    %2428 = vmax.xlane.f32.xlu0 %v2427
    %v2429 = vpop.xlane.xlu0 %2428
    %v2430 = vsub.f32 %v2418, %v2426
    %v2431 = vsub.f32 %v2421, %v2429
    %v2432 = vmul.f32 %v2430, 1.442695
    %v2433 = vpow.pop %v2432
    %v2434 = vmul.f32 %v2431, 1.442695
    %v2435 = vpow.pop %v2434
    %v2436 = vsel %vm561, %v2433, 0.0
    %2437 = vadd.xlane.f32.xlu0 %v2436
    %v2438 = vpop.xlane.xlu0 %2437
    %v2439 = vsel %vm561, %v2435, 0.0
    %2440 = vadd.xlane.f32.xlu0 %v2439
    %v2441 = vpop.xlane.xlu0 %2440
    %v2442 = vrcp.pop %v2438
    %v2443 = vrcp.pop %v2441
    %v2444 = vmul.f32 %v2433, %v2442
    %v2445 = vmul.f32 %v2435, %v2443
    %v2446 = vpack.c.bf16 %v2445, %v2444
    %v2448 = vsel %vm561, %v2446, 0
    %2450 = vmatprep.subr.bf16.mxu0 0
    %2451 = vmatpush1.bf16.msra.mxu0 0
    %2452 = vmatprep.subr.bf16.mxu0 0
    %2453 = vmatpush1.bf16.msra.mxu0 0
    %2454 = vmatprep.subr.bf16.mxu0 0
    %2455 = vmatpush1.bf16.msra.mxu0 0
    %2456 = vmatprep.subr.bf16.mxu0 0
    %2457 = vmatpush1.bf16.msra.mxu0 0
    %2458 = vmatprep.subr.bf16.mxu0 0
    %2459 = vmatpush1.bf16.msra.mxu0 0
    %2460 = vmatprep.subr.bf16.mxu0 0
    %2461 = vmatpush1.bf16.msra.mxu0 0
    %2462 = vmatprep.subr.bf16.mxu0 0
    %2463 = vmatpush1.bf16.msra.mxu0 0
    %2464 = vmatprep.subr.bf16.mxu0 0
    %2465 = vmatpush1.bf16.msra.mxu0 %v2382
    %2466 = vmatprep.subr.bf16.mxu0 0
    %2467 = vmatpush2.bf16.msra.mxu0 0
    %2468 = vmatprep.subr.bf16.mxu0 0
    %2469 = vmatpush2.bf16.msra.mxu0 0
    %2470 = vmatprep.subr.bf16.mxu0 0
    %2471 = vmatpush2.bf16.msra.mxu0 0
    %2472 = vmatprep.subr.bf16.mxu0 0
    %2473 = vmatpush2.bf16.msra.mxu0 0
    %2474 = vmatprep.subr.bf16.mxu0 0
    %2475 = vmatpush2.bf16.msra.mxu0 0
    %2476 = vmatprep.subr.bf16.mxu0 0
    %2477 = vmatpush2.bf16.msra.mxu0 0
    %2478 = vmatprep.subr.bf16.mxu0 0
    %2479 = vmatpush2.bf16.msra.mxu0 0
    %2480 = vmatprep.subr.bf16.mxu0 0
    %2481 = vmatpush2.bf16.msra.mxu0 0
    %2482 = vmatprep.mubr.bf16.mxu0 0
    %2483 = vmatmul.mubr.bf16.gmra.mxu0 %v2448
    %v2484 = vpop.f32.mrf.mxu0
    %v2485 = vadd.f32 0.0, %v2484
    %v2486 = vpop.f32.mrf.mxu0
    %v2487 = vpop.f32.mrf.mxu0
    %v2488 = vadd.f32 0.0, %v2487
    %v2489 = vpop.f32.mrf.mxu0
    %2490 = vdwg.mxu0
    %v2491 = vadd.f32 %v2375, %v2485
    %v2492 = vadd.f32 %v2376, %v2488
    %v2493 = vmul.f32 %v1983, %v990
    %v2494 = vmul.f32 %v1987, %v990
    %v2495 = vpack.c.bf16 %v2494, %v2493
    %v2496 = vmul.f32 %v2026, %v990
    %v2497 = vmul.f32 %v2029, %v990
    %v2498 = vpack.c.bf16 %v2497, %v2496
    %2499 = vmatprep.subr.bf16.mxu0 0
    %2500 = vmatpush1.bf16.xpose.msra.mxu0 0
    %2501 = vmatprep.subr.bf16.mxu0 0
    %2502 = vmatpush1.bf16.xpose.msra.mxu0 0
    %2503 = vmatprep.subr.bf16.mxu0 0
    %2504 = vmatpush1.bf16.xpose.msra.mxu0 0
    %2505 = vmatprep.subr.bf16.mxu0 0
    %2506 = vmatpush1.bf16.xpose.msra.mxu0 0
    %2507 = vmatprep.subr.bf16.mxu0 0
    %2508 = vmatpush1.bf16.xpose.msra.mxu0 0
    %2509 = vmatprep.subr.bf16.mxu0 0
    %2510 = vmatpush1.bf16.xpose.msra.mxu0 0
    %2511 = vmatprep.subr.bf16.mxu0 0
    %2512 = vmatpush1.bf16.xpose.msra.mxu0 0
    %2513 = vmatprep.subr.bf16.mxu0 0
    %2514 = vmatpush1.bf16.xpose.msra.mxu0 %v2032
    %2515 = vmatprep.subr.bf16.mxu0 0
    %2516 = vmatpush2.bf16.xpose.msra.mxu0 0
    %2517 = vmatprep.subr.bf16.mxu0 0
    %2518 = vmatpush2.bf16.xpose.msra.mxu0 0
    %2519 = vmatprep.subr.bf16.mxu0 0
    %2520 = vmatpush2.bf16.xpose.msra.mxu0 0
    %2521 = vmatprep.subr.bf16.mxu0 0
    %2522 = vmatpush2.bf16.xpose.msra.mxu0 0
    %2523 = vmatprep.subr.bf16.mxu0 0
    %2524 = vmatpush2.bf16.xpose.msra.mxu0 0
    %2525 = vmatprep.subr.bf16.mxu0 0
    %2526 = vmatpush2.bf16.xpose.msra.mxu0 0
    %2527 = vmatprep.subr.bf16.mxu0 0
    %2528 = vmatpush2.bf16.xpose.msra.mxu0 0
    %2529 = vmatprep.subr.bf16.mxu0 0
    %2530 = vmatpush2.bf16.xpose.msra.mxu0 0
    %2531 = vmatprep.mubr.bf16.mxu0 0
    %2532 = vmatmul.mubr.bf16.gmra.mxu0 %v2495
    %v2533 = vpop.f32.mrf.mxu0
    %v2534 = vadd.f32 %v200, %v2533
    %v2535 = vpop.f32.mrf.mxu0
    %v2536 = vpop.f32.mrf.mxu0
    %v2537 = vadd.f32 %v201, %v2536
    %v2538 = vpop.f32.mrf.mxu0
    %2539 = vdwg.mxu0
    %v2540 = vsel %vm561, %v2534, -inf
    %2541 = vmax.xlane.f32.xlu0 %v2540
    %v2542 = vpop.xlane.xlu0 %2541
    %v2543 = vsel %vm561, %v2537, -inf
    %2544 = vmax.xlane.f32.xlu0 %v2543
    %v2545 = vpop.xlane.xlu0 %2544
    %v2546 = vsub.f32 %v2534, %v2542
    %v2547 = vsub.f32 %v2537, %v2545
    %v2548 = vmul.f32 %v2546, 1.442695
    %v2549 = vpow.pop %v2548
    %v2550 = vmul.f32 %v2547, 1.442695
    %v2551 = vpow.pop %v2550
    %v2552 = vsel %vm561, %v2549, 0.0
    %2553 = vadd.xlane.f32.xlu0 %v2552
    %v2554 = vpop.xlane.xlu0 %2553
    %v2555 = vsel %vm561, %v2551, 0.0
    %2556 = vadd.xlane.f32.xlu0 %v2555
    %v2557 = vpop.xlane.xlu0 %2556
    %v2558 = vrcp.pop %v2554
    %v2559 = vrcp.pop %v2557
    %v2560 = vmul.f32 %v2549, %v2558
    %v2561 = vmul.f32 %v2551, %v2559
    %v2562 = vpack.c.bf16 %v2561, %v2560
    %v2564 = vsel %vm561, %v2562, 0
    %2566 = vmatprep.subr.bf16.mxu0 0
    %2567 = vmatpush1.bf16.msra.mxu0 0
    %2568 = vmatprep.subr.bf16.mxu0 0
    %2569 = vmatpush1.bf16.msra.mxu0 0
    %2570 = vmatprep.subr.bf16.mxu0 0
    %2571 = vmatpush1.bf16.msra.mxu0 0
    %2572 = vmatprep.subr.bf16.mxu0 0
    %2573 = vmatpush1.bf16.msra.mxu0 0
    %2574 = vmatprep.subr.bf16.mxu0 0
    %2575 = vmatpush1.bf16.msra.mxu0 0
    %2576 = vmatprep.subr.bf16.mxu0 0
    %2577 = vmatpush1.bf16.msra.mxu0 0
    %2578 = vmatprep.subr.bf16.mxu0 0
    %2579 = vmatpush1.bf16.msra.mxu0 0
    %2580 = vmatprep.subr.bf16.mxu0 0
    %2581 = vmatpush1.bf16.msra.mxu0 %v2498
    %2582 = vmatprep.subr.bf16.mxu0 0
    %2583 = vmatpush2.bf16.msra.mxu0 0
    %2584 = vmatprep.subr.bf16.mxu0 0
    %2585 = vmatpush2.bf16.msra.mxu0 0
    %2586 = vmatprep.subr.bf16.mxu0 0
    %2587 = vmatpush2.bf16.msra.mxu0 0
    %2588 = vmatprep.subr.bf16.mxu0 0
    %2589 = vmatpush2.bf16.msra.mxu0 0
    %2590 = vmatprep.subr.bf16.mxu0 0
    %2591 = vmatpush2.bf16.msra.mxu0 0
    %2592 = vmatprep.subr.bf16.mxu0 0
    %2593 = vmatpush2.bf16.msra.mxu0 0
    %2594 = vmatprep.subr.bf16.mxu0 0
    %2595 = vmatpush2.bf16.msra.mxu0 0
    %2596 = vmatprep.subr.bf16.mxu0 0
    %2597 = vmatpush2.bf16.msra.mxu0 0
    %2598 = vmatprep.mubr.bf16.mxu0 0
    %2599 = vmatmul.mubr.bf16.gmra.mxu0 %v2564
    %v2600 = vpop.f32.mrf.mxu0
    %v2601 = vadd.f32 0.0, %v2600
    %v2602 = vpop.f32.mrf.mxu0
    %v2603 = vpop.f32.mrf.mxu0
    %v2604 = vadd.f32 0.0, %v2603
    %v2605 = vpop.f32.mrf.mxu0
    %2606 = vdwg.mxu0
    %v2607 = vadd.f32 %v2491, %v2601
    %v2608 = vadd.f32 %v2492, %v2604
    %v2609 = vmul.f32 %v1983, %v1110
    %v2610 = vmul.f32 %v1987, %v1110
    %v2611 = vpack.c.bf16 %v2610, %v2609
    %v2612 = vmul.f32 %v2026, %v1110
    %v2613 = vmul.f32 %v2029, %v1110
    %v2614 = vpack.c.bf16 %v2613, %v2612
    %2615 = vmatprep.subr.bf16.mxu0 0
    %2616 = vmatpush1.bf16.xpose.msra.mxu0 0
    %2617 = vmatprep.subr.bf16.mxu0 0
    %2618 = vmatpush1.bf16.xpose.msra.mxu0 0
    %2619 = vmatprep.subr.bf16.mxu0 0
    %2620 = vmatpush1.bf16.xpose.msra.mxu0 0
    %2621 = vmatprep.subr.bf16.mxu0 0
    %2622 = vmatpush1.bf16.xpose.msra.mxu0 0
    %2623 = vmatprep.subr.bf16.mxu0 0
    %2624 = vmatpush1.bf16.xpose.msra.mxu0 0
    %2625 = vmatprep.subr.bf16.mxu0 0
    %2626 = vmatpush1.bf16.xpose.msra.mxu0 0
    %2627 = vmatprep.subr.bf16.mxu0 0
    %2628 = vmatpush1.bf16.xpose.msra.mxu0 0
    %2629 = vmatprep.subr.bf16.mxu0 0
    %2630 = vmatpush1.bf16.xpose.msra.mxu0 %v2032
    %2631 = vmatprep.subr.bf16.mxu0 0
    %2632 = vmatpush2.bf16.xpose.msra.mxu0 0
    %2633 = vmatprep.subr.bf16.mxu0 0
    %2634 = vmatpush2.bf16.xpose.msra.mxu0 0
    %2635 = vmatprep.subr.bf16.mxu0 0
    %2636 = vmatpush2.bf16.xpose.msra.mxu0 0
    %2637 = vmatprep.subr.bf16.mxu0 0
    %2638 = vmatpush2.bf16.xpose.msra.mxu0 0
    %2639 = vmatprep.subr.bf16.mxu0 0
    %2640 = vmatpush2.bf16.xpose.msra.mxu0 0
    %2641 = vmatprep.subr.bf16.mxu0 0
    %2642 = vmatpush2.bf16.xpose.msra.mxu0 0
    %2643 = vmatprep.subr.bf16.mxu0 0
    %2644 = vmatpush2.bf16.xpose.msra.mxu0 0
    %2645 = vmatprep.subr.bf16.mxu0 0
    %2646 = vmatpush2.bf16.xpose.msra.mxu0 0
    %2647 = vmatprep.mubr.bf16.mxu0 0
    %2648 = vmatmul.mubr.bf16.gmra.mxu0 %v2611
    %v2649 = vpop.f32.mrf.mxu0
    %v2650 = vadd.f32 %v200, %v2649
    %v2651 = vpop.f32.mrf.mxu0
    %v2652 = vpop.f32.mrf.mxu0
    %v2653 = vadd.f32 %v201, %v2652
    %v2654 = vpop.f32.mrf.mxu0
    %2655 = vdwg.mxu0
    %v2656 = vsel %vm561, %v2650, -inf
    %2657 = vmax.xlane.f32.xlu0 %v2656
    %v2658 = vpop.xlane.xlu0 %2657
    %v2659 = vsel %vm561, %v2653, -inf
    %2660 = vmax.xlane.f32.xlu0 %v2659
    %v2661 = vpop.xlane.xlu0 %2660
    %v2662 = vsub.f32 %v2650, %v2658
    %v2663 = vsub.f32 %v2653, %v2661
    %v2664 = vmul.f32 %v2662, 1.442695
    %v2665 = vpow.pop %v2664
    %v2666 = vmul.f32 %v2663, 1.442695
    %v2667 = vpow.pop %v2666
    %v2668 = vsel %vm561, %v2665, 0.0
    %2669 = vadd.xlane.f32.xlu0 %v2668
    %v2670 = vpop.xlane.xlu0 %2669
    %v2671 = vsel %vm561, %v2667, 0.0
    %2672 = vadd.xlane.f32.xlu0 %v2671
    %v2673 = vpop.xlane.xlu0 %2672
    %v2674 = vrcp.pop %v2670
    %v2675 = vrcp.pop %v2673
    %v2676 = vmul.f32 %v2665, %v2674
    %v2677 = vmul.f32 %v2667, %v2675
    %v2678 = vpack.c.bf16 %v2677, %v2676
    %v2680 = vsel %vm561, %v2678, 0
    %2682 = vmatprep.subr.bf16.mxu0 0
    %2683 = vmatpush1.bf16.msra.mxu0 0
    %2684 = vmatprep.subr.bf16.mxu0 0
    %2685 = vmatpush1.bf16.msra.mxu0 0
    %2686 = vmatprep.subr.bf16.mxu0 0
    %2687 = vmatpush1.bf16.msra.mxu0 0
    %2688 = vmatprep.subr.bf16.mxu0 0
    %2689 = vmatpush1.bf16.msra.mxu0 0
    %2690 = vmatprep.subr.bf16.mxu0 0
    %2691 = vmatpush1.bf16.msra.mxu0 0
    %2692 = vmatprep.subr.bf16.mxu0 0
    %2693 = vmatpush1.bf16.msra.mxu0 0
    %2694 = vmatprep.subr.bf16.mxu0 0
    %2695 = vmatpush1.bf16.msra.mxu0 0
    %2696 = vmatprep.subr.bf16.mxu0 0
    %2697 = vmatpush1.bf16.msra.mxu0 %v2614
    %2698 = vmatprep.subr.bf16.mxu0 0
    %2699 = vmatpush2.bf16.msra.mxu0 0
    %2700 = vmatprep.subr.bf16.mxu0 0
    %2701 = vmatpush2.bf16.msra.mxu0 0
    %2702 = vmatprep.subr.bf16.mxu0 0
    %2703 = vmatpush2.bf16.msra.mxu0 0
    %2704 = vmatprep.subr.bf16.mxu0 0
    %2705 = vmatpush2.bf16.msra.mxu0 0
    %2706 = vmatprep.subr.bf16.mxu0 0
    %2707 = vmatpush2.bf16.msra.mxu0 0
    %2708 = vmatprep.subr.bf16.mxu0 0
    %2709 = vmatpush2.bf16.msra.mxu0 0
    %2710 = vmatprep.subr.bf16.mxu0 0
    %2711 = vmatpush2.bf16.msra.mxu0 0
    %2712 = vmatprep.subr.bf16.mxu0 0
    %2713 = vmatpush2.bf16.msra.mxu0 0
    %2714 = vmatprep.mubr.bf16.mxu0 0
    %2715 = vmatmul.mubr.bf16.gmra.mxu0 %v2680
    %v2716 = vpop.f32.mrf.mxu0
    %v2717 = vadd.f32 0.0, %v2716
    %v2718 = vpop.f32.mrf.mxu0
    %v2719 = vpop.f32.mrf.mxu0
    %v2720 = vadd.f32 0.0, %v2719
    %v2721 = vpop.f32.mrf.mxu0
    %2722 = vdwg.mxu0
    %v2723 = vadd.f32 %v2607, %v2717
    %v2724 = vadd.f32 %v2608, %v2720
    %s2725 = scalar_lea.vmem [#allocation13], 64
    %v2726 = vld [vmem:[%s2725] sm:$0xf]
    %v2727 = vld [vmem:[%s2725 + $0x4] sm:$0xf]
    %v2728 = vld [vmem:[%s2725 + $0x8] sm:$0xf]
    %v2729 = vld [vmem:[%s2725 + $0xc] sm:$0xf]
    %v2730 = vld [vmem:[%s2725 + $0x10] sm:$0xf]
    %v2731 = vld [vmem:[%s2725 + $0x14] sm:$0xf]
    %v2732 = vld [vmem:[%s2725 + $0x18] sm:$0xf]
    %v2733 = vld [vmem:[%s2725 + $0x1c] sm:$0xf]
    %v2734 = vld [vmem:[%s2725 + $0x20] sm:$0xf]
    %v2735 = vld [vmem:[%s2725 + $0x24] sm:$0xf]
    %v2736 = vld [vmem:[%s2725 + $0x28] sm:$0xf]
    %v2737 = vld [vmem:[%s2725 + $0x2c] sm:$0xf]
    %v2738 = vld [vmem:[%s2725 + $0x30] sm:$0xf]
    %v2739 = vld [vmem:[%s2725 + $0x34] sm:$0xf]
    %v2740 = vld [vmem:[%s2725 + $0x38] sm:$0xf]
    %v2741 = vld [vmem:[%s2725 + $0x3c] sm:$0xf]
    %s2742 = scalar_lea.vmem %s8, 1
    %v2743 = vld [vmem:[%s2742] sm:$0x1]
    %v2744 = vpack.c.bf16 %v2724, %v2723
    %v2746 = vlaneseq
    %v2747 = vshrl.u32 %v2746, 7
    %v2748 = vsub.s32 0, %v2747
    %v2749 = vrot.slane %v2743, %v2748
    %v2767 = vunpack.c.l.b16 %v2726
    %v2768 = vunpack.c.l.b16 %v2727
    %v2769 = vunpack.c.l.b16 %v2728
    %v2770 = vunpack.c.l.b16 %v2729
    %v2771 = vunpack.c.l.b16 %v2730
    %v2772 = vunpack.c.l.b16 %v2731
    %v2773 = vunpack.c.l.b16 %v2732
    %v2774 = vunpack.c.l.b16 %v2733
    %v2775 = vunpack.c.l.b16 %v2734
    %v2776 = vunpack.c.l.b16 %v2735
    %v2777 = vunpack.c.l.b16 %v2736
    %v2778 = vunpack.c.l.b16 %v2737
    %v2779 = vunpack.c.l.b16 %v2738
    %v2780 = vunpack.c.l.b16 %v2739
    %v2781 = vunpack.c.l.b16 %v2740
    %v2782 = vunpack.c.l.b16 %v2741
    %v2783 = vpack.c.b16 %v2768, %v2767
    %v2784 = vpack.c.b16 %v2770, %v2769
    %v2785 = vpack.c.b16 %v2772, %v2771
    %v2786 = vpack.c.b16 %v2774, %v2773
    %v2787 = vpack.c.b16 %v2776, %v2775
    %v2788 = vpack.c.b16 %v2778, %v2777
    %v2789 = vpack.c.b16 %v2780, %v2779
    %v2790 = vpack.c.b16 %v2782, %v2781
    %2799 = vmatprep.subr.bf16.mxu0 0
    %2800 = vmatpush1.bf16.msra.mxu0 %v2790
    %2801 = vmatprep.subr.bf16.mxu0 0
    %2802 = vmatpush1.bf16.msra.mxu0 %v2789
    %2803 = vmatprep.subr.bf16.mxu0 0
    %2804 = vmatpush1.bf16.msra.mxu0 %v2788
    %2805 = vmatprep.subr.bf16.mxu0 0
    %2806 = vmatpush1.bf16.msra.mxu0 %v2787
    %2807 = vmatprep.subr.bf16.mxu0 0
    %2808 = vmatpush1.bf16.msra.mxu0 %v2786
    %2809 = vmatprep.subr.bf16.mxu0 0
    %2810 = vmatpush1.bf16.msra.mxu0 %v2785
    %2811 = vmatprep.subr.bf16.mxu0 0
    %2812 = vmatpush1.bf16.msra.mxu0 %v2784
    %2813 = vmatprep.subr.bf16.mxu0 0
    %2814 = vmatpush1.bf16.msra.mxu0 %v2783
    %2815 = vmatprep.subr.bf16.mxu0 0
    %2816 = vmatpush2.bf16.msra.mxu0 0
    %2817 = vmatprep.subr.bf16.mxu0 0
    %2818 = vmatpush2.bf16.msra.mxu0 0
    %2819 = vmatprep.subr.bf16.mxu0 0
    %2820 = vmatpush2.bf16.msra.mxu0 0
    %2821 = vmatprep.subr.bf16.mxu0 0
    %2822 = vmatpush2.bf16.msra.mxu0 0
    %2823 = vmatprep.subr.bf16.mxu0 0
    %2824 = vmatpush2.bf16.msra.mxu0 0
    %2825 = vmatprep.subr.bf16.mxu0 0
    %2826 = vmatpush2.bf16.msra.mxu0 0
    %2827 = vmatprep.subr.bf16.mxu0 0
    %2828 = vmatpush2.bf16.msra.mxu0 0
    %2829 = vmatprep.subr.bf16.mxu0 0
    %2830 = vmatpush2.bf16.msra.mxu0 0
    %2831 = vmatprep.mubr.bf16.mxu0 0
    %2832 = vmatmul.mubr.bf16.gmra.mxu0 %v2744
    %v2833 = vpop.f32.mrf.mxu0
    %v2834 = vadd.f32 %v2749, %v2833
    %v2835 = vpop.f32.mrf.mxu0
    %v2836 = vpop.f32.mrf.mxu0
    %v2837 = vadd.f32 %v2749, %v2836
    %v2838 = vpop.f32.mrf.mxu0
    %2839 = vdwg.mxu0
    %v2840 = vadd.f32 %v1720, %v2834
    %v2841 = vadd.f32 %v1721, %v2837
    %s2842 = scalar_lea.vmem %s9, 1
    %v2843 = vld [vmem:[%s2842] sm:$0x1]
    %s2844 = scalar_lea.vmem %s10, 1
    %v2845 = vld [vmem:[%s2844] sm:$0x1]
    %2846 = vadd.xlane.f32.xlu0 %v2840
    %v2847 = vpop.xlane.xlu0 %2846
    %2848 = vadd.xlane.f32.xlu0 %v2841
    %v2849 = vpop.xlane.xlu0 %2848
    %v2850 = vmul.f32 %v2847, 0.020833334
    %v2851 = vmul.f32 %v2849, 0.020833334
    %v2852 = vmul.f32 %v2840, %v2840
    %v2853 = vmul.f32 %v2841, %v2841
    %2854 = vadd.xlane.f32.xlu0 %v2852
    %v2855 = vpop.xlane.xlu0 %2854
    %2856 = vadd.xlane.f32.xlu0 %v2853
    %v2857 = vpop.xlane.xlu0 %2856
    %v2858 = vmul.f32 %v2855, 0.020833334
    %v2859 = vmul.f32 %v2857, 0.020833334
    %v2860 = vmul.f32 %v2850, %v2850
    %v2861 = vmul.f32 %v2851, %v2851
    %v2862 = vsub.f32 %v2858, %v2860
    %v2863 = vsub.f32 %v2859, %v2861
    %v2864 = vsub.f32 %v2840, %v2850
    %v2865 = vsub.f32 %v2841, %v2851
    %v2866 = vadd.f32 %v2862, 1e-05
    %v2867 = vadd.f32 %v2863, 1e-05
    %v2868 = vrsqrt.pop %v2866
    %v2869 = vrsqrt.pop %v2867
    %v2870 = vmul.f32 %v2864, %v2868
    %v2871 = vmul.f32 %v2865, %v2869
    %v2873 = vlaneseq
    %v2874 = vshrl.u32 %v2873, 7
    %v2875 = vsub.s32 0, %v2874
    %v2876 = vrot.slane %v2843, %v2875
    %v2878 = vmul.f32 %v2870, %v2876
    %v2879 = vmul.f32 %v2871, %v2876
    %v2881 = vlaneseq
    %v2882 = vshrl.u32 %v2881, 7
    %v2883 = vsub.s32 0, %v2882
    %v2884 = vrot.slane %v2845, %v2883
    %v2886 = vadd.f32 %v2878, %v2884
    %v2887 = vadd.f32 %v2879, %v2884
    %s2888 = scalar_lea.vmem [#allocation14], 128
    %v2889 = vld [vmem:[%s2888] sm:$0xff]
    %v2890 = vld [vmem:[%s2888 + $0x8] sm:$0xff]
    %v2891 = vld [vmem:[%s2888 + $0x10] sm:$0xff]
    %v2892 = vld [vmem:[%s2888 + $0x18] sm:$0xff]
    %v2893 = vld [vmem:[%s2888 + $0x20] sm:$0xff]
    %v2894 = vld [vmem:[%s2888 + $0x28] sm:$0xff]
    %v2895 = vld [vmem:[%s2888 + $0x30] sm:$0xff]
    %v2896 = vld [vmem:[%s2888 + $0x38] sm:$0xff]
    %v2897 = vld [vmem:[%s2888 + $0x40] sm:$0xff]
    %v2898 = vld [vmem:[%s2888 + $0x48] sm:$0xff]
    %v2899 = vld [vmem:[%s2888 + $0x50] sm:$0xff]
    %v2900 = vld [vmem:[%s2888 + $0x58] sm:$0xff]
    %v2901 = vld [vmem:[%s2888 + $0x60] sm:$0xff]
    %v2902 = vld [vmem:[%s2888 + $0x68] sm:$0xff]
    %v2903 = vld [vmem:[%s2888 + $0x70] sm:$0xff]
    %v2904 = vld [vmem:[%s2888 + $0x78] sm:$0xff]
    %s2905 = scalar_lea.vmem %s12, 2
    %v2906 = vld [vmem:[%s2905] sm:$0x3]
    %v2907 = vpack.c.bf16 %v2887, %v2886
    %v2909 = vlaneseq
    %v2910 = vshrl.u32 %v2909, 7
    %v2911 = vsub.s32 0, %v2910
    %v2912 = vrot.slane %v2906, %v2911
    %v2913 = vlaneseq
    %v2914 = vshrl.u32 %v2913, 7
    %v2915 = vsub.s32 1, %v2914
    %v2916 = vrot.slane %v2906, %v2915
    %v2935 = vunpack.c.l.b16 %v2889
    %v2936 = vunpack.c.h.b16 %v2889
    %v2937 = vunpack.c.l.b16 %v2890
    %v2938 = vunpack.c.h.b16 %v2890
    %v2939 = vunpack.c.l.b16 %v2891
    %v2940 = vunpack.c.h.b16 %v2891
    %v2941 = vunpack.c.l.b16 %v2892
    %v2942 = vunpack.c.h.b16 %v2892
    %v2943 = vunpack.c.l.b16 %v2893
    %v2944 = vunpack.c.h.b16 %v2893
    %v2945 = vunpack.c.l.b16 %v2894
    %v2946 = vunpack.c.h.b16 %v2894
    %v2947 = vunpack.c.l.b16 %v2895
    %v2948 = vunpack.c.h.b16 %v2895
    %v2949 = vunpack.c.l.b16 %v2896
    %v2950 = vunpack.c.h.b16 %v2896
    %v2951 = vunpack.c.l.b16 %v2897
    %v2952 = vunpack.c.h.b16 %v2897
    %v2953 = vunpack.c.l.b16 %v2898
    %v2954 = vunpack.c.h.b16 %v2898
    %v2955 = vunpack.c.l.b16 %v2899
    %v2956 = vunpack.c.h.b16 %v2899
    %v2957 = vunpack.c.l.b16 %v2900
    %v2958 = vunpack.c.h.b16 %v2900
    %v2959 = vunpack.c.l.b16 %v2901
    %v2960 = vunpack.c.h.b16 %v2901
    %v2961 = vunpack.c.l.b16 %v2902
    %v2962 = vunpack.c.h.b16 %v2902
    %v2963 = vunpack.c.l.b16 %v2903
    %v2964 = vunpack.c.h.b16 %v2903
    %v2965 = vunpack.c.l.b16 %v2904
    %v2966 = vunpack.c.h.b16 %v2904
    %v2967 = vpack.c.b16 %v2937, %v2935
    %v2968 = vpack.c.b16 %v2938, %v2936
    %v2969 = vpack.c.b16 %v2941, %v2939
    %v2970 = vpack.c.b16 %v2942, %v2940
    %v2971 = vpack.c.b16 %v2945, %v2943
    %v2972 = vpack.c.b16 %v2946, %v2944
    %v2973 = vpack.c.b16 %v2949, %v2947
    %v2974 = vpack.c.b16 %v2950, %v2948
    %v2975 = vpack.c.b16 %v2953, %v2951
    %v2976 = vpack.c.b16 %v2954, %v2952
    %v2977 = vpack.c.b16 %v2957, %v2955
    %v2978 = vpack.c.b16 %v2958, %v2956
    %v2979 = vpack.c.b16 %v2961, %v2959
    %v2980 = vpack.c.b16 %v2962, %v2960
    %v2981 = vpack.c.b16 %v2965, %v2963
    %v2982 = vpack.c.b16 %v2966, %v2964
    %2999 = vmatprep.subr.bf16.mxu0 %v2982
    %3000 = vmatpush1.bf16.msra.mxu0 %v2981
    %3001 = vmatprep.subr.bf16.mxu0 %v2980
    %3002 = vmatpush1.bf16.msra.mxu0 %v2979
    %3003 = vmatprep.subr.bf16.mxu0 %v2978
    %3004 = vmatpush1.bf16.msra.mxu0 %v2977
    %3005 = vmatprep.subr.bf16.mxu0 %v2976
    %3006 = vmatpush1.bf16.msra.mxu0 %v2975
    %3007 = vmatprep.subr.bf16.mxu0 %v2974
    %3008 = vmatpush1.bf16.msra.mxu0 %v2973
    %3009 = vmatprep.subr.bf16.mxu0 %v2972
    %3010 = vmatpush1.bf16.msra.mxu0 %v2971
    %3011 = vmatprep.subr.bf16.mxu0 %v2970
    %3012 = vmatpush1.bf16.msra.mxu0 %v2969
    %3013 = vmatprep.subr.bf16.mxu0 %v2968
    %3014 = vmatpush1.bf16.msra.mxu0 %v2967
    %3015 = vmatprep.subr.bf16.mxu0 0
    %3016 = vmatpush2.bf16.msra.mxu0 0
    %3017 = vmatprep.subr.bf16.mxu0 0
    %3018 = vmatpush2.bf16.msra.mxu0 0
    %3019 = vmatprep.subr.bf16.mxu0 0
    %3020 = vmatpush2.bf16.msra.mxu0 0
    %3021 = vmatprep.subr.bf16.mxu0 0
    %3022 = vmatpush2.bf16.msra.mxu0 0
    %3023 = vmatprep.subr.bf16.mxu0 0
    %3024 = vmatpush2.bf16.msra.mxu0 0
    %3025 = vmatprep.subr.bf16.mxu0 0
    %3026 = vmatpush2.bf16.msra.mxu0 0
    %3027 = vmatprep.subr.bf16.mxu0 0
    %3028 = vmatpush2.bf16.msra.mxu0 0
    %3029 = vmatprep.subr.bf16.mxu0 0
    %3030 = vmatpush2.bf16.msra.mxu0 0
    %3031 = vmatprep.mubr.bf16.mxu0 0
    %3032 = vmatmul.mubr.bf16.gmra.mxu0 %v2907
    %v3033 = vpop.f32.mrf.mxu0
    %v3034 = vadd.f32 %v2912, %v3033
    %v3035 = vpop.f32.mrf.mxu0
    %v3036 = vadd.f32 %v2916, %v3035
    %v3037 = vpop.f32.mrf.mxu0
    %v3038 = vadd.f32 %v2912, %v3037
    %v3039 = vpop.f32.mrf.mxu0
    %v3040 = vadd.f32 %v2916, %v3039
    %3041 = vdwg.mxu0
    %v3042 = vmax.f32 %v3034, 0.0
    %v3043 = vmax.f32 %v3036, 0.0
    %v3044 = vmax.f32 %v3038, 0.0
    %v3045 = vmax.f32 %v3040, 0.0
    %s3046 = scalar_lea.vmem [#allocation16], 128
    %v3047 = vld [vmem:[%s3046] sm:$0xf]
    %v3048 = vld [vmem:[%s3046 + $0x4] sm:$0xf]
    %v3049 = vld [vmem:[%s3046 + $0x8] sm:$0xf]
    %v3050 = vld [vmem:[%s3046 + $0xc] sm:$0xf]
    %v3051 = vld [vmem:[%s3046 + $0x10] sm:$0xf]
    %v3052 = vld [vmem:[%s3046 + $0x14] sm:$0xf]
    %v3053 = vld [vmem:[%s3046 + $0x18] sm:$0xf]
    %v3054 = vld [vmem:[%s3046 + $0x1c] sm:$0xf]
    %v3055 = vld [vmem:[%s3046 + $0x20] sm:$0xf]
    %v3056 = vld [vmem:[%s3046 + $0x24] sm:$0xf]
    %v3057 = vld [vmem:[%s3046 + $0x28] sm:$0xf]
    %v3058 = vld [vmem:[%s3046 + $0x2c] sm:$0xf]
    %v3059 = vld [vmem:[%s3046 + $0x30] sm:$0xf]
    %v3060 = vld [vmem:[%s3046 + $0x34] sm:$0xf]
    %v3061 = vld [vmem:[%s3046 + $0x38] sm:$0xf]
    %v3062 = vld [vmem:[%s3046 + $0x3c] sm:$0xf]
    %v3063 = vld [vmem:[%s3046 + $0x40] sm:$0xf]
    %v3064 = vld [vmem:[%s3046 + $0x44] sm:$0xf]
    %v3065 = vld [vmem:[%s3046 + $0x48] sm:$0xf]
    %v3066 = vld [vmem:[%s3046 + $0x4c] sm:$0xf]
    %v3067 = vld [vmem:[%s3046 + $0x50] sm:$0xf]
    %v3068 = vld [vmem:[%s3046 + $0x54] sm:$0xf]
    %v3069 = vld [vmem:[%s3046 + $0x58] sm:$0xf]
    %v3070 = vld [vmem:[%s3046 + $0x5c] sm:$0xf]
    %v3071 = vld [vmem:[%s3046 + $0x60] sm:$0xf]
    %v3072 = vld [vmem:[%s3046 + $0x64] sm:$0xf]
    %v3073 = vld [vmem:[%s3046 + $0x68] sm:$0xf]
    %v3074 = vld [vmem:[%s3046 + $0x6c] sm:$0xf]
    %v3075 = vld [vmem:[%s3046 + $0x70] sm:$0xf]
    %v3076 = vld [vmem:[%s3046 + $0x74] sm:$0xf]
    %v3077 = vld [vmem:[%s3046 + $0x78] sm:$0xf]
    %v3078 = vld [vmem:[%s3046 + $0x7c] sm:$0xf]
    %s3079 = scalar_lea.vmem %s14, 1
    %v3080 = vld [vmem:[%s3079] sm:$0x1]
    %v3081 = vpack.c.bf16 %v3044, %v3042
    %v3082 = vpack.c.bf16 %v3045, %v3043
    %v3084 = vlaneseq
    %v3085 = vshrl.u32 %v3084, 7
    %v3086 = vsub.s32 0, %v3085
    %v3087 = vrot.slane %v3080, %v3086
    %v3121 = vunpack.c.l.b16 %v3047
    %v3122 = vunpack.c.l.b16 %v3048
    %v3123 = vunpack.c.l.b16 %v3049
    %v3124 = vunpack.c.l.b16 %v3050
    %v3125 = vunpack.c.l.b16 %v3051
    %v3126 = vunpack.c.l.b16 %v3052
    %v3127 = vunpack.c.l.b16 %v3053
    %v3128 = vunpack.c.l.b16 %v3054
    %v3129 = vunpack.c.l.b16 %v3055
    %v3130 = vunpack.c.l.b16 %v3056
    %v3131 = vunpack.c.l.b16 %v3057
    %v3132 = vunpack.c.l.b16 %v3058
    %v3133 = vunpack.c.l.b16 %v3059
    %v3134 = vunpack.c.l.b16 %v3060
    %v3135 = vunpack.c.l.b16 %v3061
    %v3136 = vunpack.c.l.b16 %v3062
    %v3137 = vunpack.c.l.b16 %v3063
    %v3138 = vunpack.c.l.b16 %v3064
    %v3139 = vunpack.c.l.b16 %v3065
    %v3140 = vunpack.c.l.b16 %v3066
    %v3141 = vunpack.c.l.b16 %v3067
    %v3142 = vunpack.c.l.b16 %v3068
    %v3143 = vunpack.c.l.b16 %v3069
    %v3144 = vunpack.c.l.b16 %v3070
    %v3145 = vunpack.c.l.b16 %v3071
    %v3146 = vunpack.c.l.b16 %v3072
    %v3147 = vunpack.c.l.b16 %v3073
    %v3148 = vunpack.c.l.b16 %v3074
    %v3149 = vunpack.c.l.b16 %v3075
    %v3150 = vunpack.c.l.b16 %v3076
    %v3151 = vunpack.c.l.b16 %v3077
    %v3152 = vunpack.c.l.b16 %v3078
    %v3153 = vpack.c.b16 %v3122, %v3121
    %v3154 = vpack.c.b16 %v3124, %v3123
    %v3155 = vpack.c.b16 %v3126, %v3125
    %v3156 = vpack.c.b16 %v3128, %v3127
    %v3157 = vpack.c.b16 %v3130, %v3129
    %v3158 = vpack.c.b16 %v3132, %v3131
    %v3159 = vpack.c.b16 %v3134, %v3133
    %v3160 = vpack.c.b16 %v3136, %v3135
    %v3161 = vpack.c.b16 %v3138, %v3137
    %v3162 = vpack.c.b16 %v3140, %v3139
    %v3163 = vpack.c.b16 %v3142, %v3141
    %v3164 = vpack.c.b16 %v3144, %v3143
    %v3165 = vpack.c.b16 %v3146, %v3145
    %v3166 = vpack.c.b16 %v3148, %v3147
    %v3167 = vpack.c.b16 %v3150, %v3149
    %v3168 = vpack.c.b16 %v3152, %v3151
    %3185 = vmatprep.subr.bf16.mxu0 0
    %3186 = vmatpush1.bf16.msra.mxu0 %v3160
    %3187 = vmatprep.subr.bf16.mxu0 0
    %3188 = vmatpush1.bf16.msra.mxu0 %v3159
    %3189 = vmatprep.subr.bf16.mxu0 0
    %3190 = vmatpush1.bf16.msra.mxu0 %v3158
    %3191 = vmatprep.subr.bf16.mxu0 0
    %3192 = vmatpush1.bf16.msra.mxu0 %v3157
    %3193 = vmatprep.subr.bf16.mxu0 0
    %3194 = vmatpush1.bf16.msra.mxu0 %v3156
    %3195 = vmatprep.subr.bf16.mxu0 0
    %3196 = vmatpush1.bf16.msra.mxu0 %v3155
    %3197 = vmatprep.subr.bf16.mxu0 0
    %3198 = vmatpush1.bf16.msra.mxu0 %v3154
    %3199 = vmatprep.subr.bf16.mxu0 0
    %3200 = vmatpush1.bf16.msra.mxu0 %v3153
    %3201 = vmatprep.subr.bf16.mxu0 0
    %3202 = vmatpush2.bf16.msra.mxu0 %v3168
    %3203 = vmatprep.subr.bf16.mxu0 0
    %3204 = vmatpush2.bf16.msra.mxu0 %v3167
    %3205 = vmatprep.subr.bf16.mxu0 0
    %3206 = vmatpush2.bf16.msra.mxu0 %v3166
    %3207 = vmatprep.subr.bf16.mxu0 0
    %3208 = vmatpush2.bf16.msra.mxu0 %v3165
    %3209 = vmatprep.subr.bf16.mxu0 0
    %3210 = vmatpush2.bf16.msra.mxu0 %v3164
    %3211 = vmatprep.subr.bf16.mxu0 0
    %3212 = vmatpush2.bf16.msra.mxu0 %v3163
    %3213 = vmatprep.subr.bf16.mxu0 0
    %3214 = vmatpush2.bf16.msra.mxu0 %v3162
    %3215 = vmatprep.subr.bf16.mxu0 0
    %3216 = vmatpush2.bf16.msra.mxu0 %v3161
    %3217 = vmatprep.mubr.bf16.mxu0 %v3082
    %3218 = vmatmul.mubr.bf16.gmra.mxu0 %v3081
    %v3219 = vpop.f32.mrf.mxu0
    %v3220 = vadd.f32 %v3087, %v3219
    %v3221 = vpop.f32.mrf.mxu0
    %v3222 = vpop.f32.mrf.mxu0
    %v3223 = vadd.f32 %v3087, %v3222
    %v3224 = vpop.f32.mrf.mxu0
    %3225 = vdwg.mxu0
    %v3226 = vadd.f32 %v2840, %v3220
    %v3227 = vadd.f32 %v2841, %v3223
    %v3228 = vld [vmem:[%s15] sm:$0x1]
    %v3229 = vld [vmem:[%s16] sm:$0x1]
    %3230 = vadd.xlane.f32.xlu0 %v3226
    %v3231 = vpop.xlane.xlu0 %3230
    %3232 = vadd.xlane.f32.xlu0 %v3227
    %v3233 = vpop.xlane.xlu0 %3232
    %v3234 = vmul.f32 %v3231, 0.020833334
    %v3235 = vmul.f32 %v3233, 0.020833334
    %v3236 = vmul.f32 %v3226, %v3226
    %v3237 = vmul.f32 %v3227, %v3227
    %3238 = vadd.xlane.f32.xlu0 %v3236
    %v3239 = vpop.xlane.xlu0 %3238
    %3240 = vadd.xlane.f32.xlu0 %v3237
    %v3241 = vpop.xlane.xlu0 %3240
    %v3242 = vmul.f32 %v3239, 0.020833334
    %v3243 = vmul.f32 %v3241, 0.020833334
    %v3244 = vmul.f32 %v3234, %v3234
    %v3245 = vmul.f32 %v3235, %v3235
    %v3246 = vsub.f32 %v3242, %v3244
    %v3247 = vsub.f32 %v3243, %v3245
    %v3248 = vsub.f32 %v3226, %v3234
    %v3249 = vsub.f32 %v3227, %v3235
    %v3250 = vadd.f32 %v3246, 1e-05
    %v3251 = vadd.f32 %v3247, 1e-05
    %v3252 = vrsqrt.pop %v3250
    %v3253 = vrsqrt.pop %v3251
    %v3254 = vmul.f32 %v3248, %v3252
    %v3255 = vmul.f32 %v3249, %v3253
    %v3257 = vlaneseq
    %v3258 = vshrl.u32 %v3257, 7
    %v3259 = vsub.s32 0, %v3258
    %v3260 = vrot.slane %v3228, %v3259
    %v3262 = vmul.f32 %v3254, %v3260
    %v3263 = vmul.f32 %v3255, %v3260
    %v3265 = vlaneseq
    %v3266 = vshrl.u32 %v3265, 7
    %v3267 = vsub.s32 0, %v3266
    %v3268 = vrot.slane %v3229, %v3267
    %v3270 = vadd.f32 %v3262, %v3268
    %v3271 = vadd.f32 %v3263, %v3268
    %v3272 = vld [vmem:[#allocation17] sm:$0xf]
    %v3273 = vld [vmem:[#allocation17 + $0x4] sm:$0xf]
    %v3274 = vld [vmem:[#allocation17 + $0x8] sm:$0xf]
    %v3275 = vld [vmem:[#allocation17 + $0xc] sm:$0xf]
    %v3276 = vld [vmem:[#allocation17 + $0x10] sm:$0xf]
    %v3277 = vld [vmem:[#allocation17 + $0x14] sm:$0xf]
    %v3278 = vld [vmem:[#allocation17 + $0x18] sm:$0xf]
    %v3279 = vld [vmem:[#allocation17 + $0x1c] sm:$0xf]
    %v3280 = vld [vmem:[#allocation17 + $0x20] sm:$0xf]
    %v3281 = vld [vmem:[#allocation17 + $0x24] sm:$0xf]
    %v3282 = vld [vmem:[#allocation17 + $0x28] sm:$0xf]
    %v3283 = vld [vmem:[#allocation17 + $0x2c] sm:$0xf]
    %v3284 = vld [vmem:[#allocation17 + $0x30] sm:$0xf]
    %v3285 = vld [vmem:[#allocation17 + $0x34] sm:$0xf]
    %v3286 = vld [vmem:[#allocation17 + $0x38] sm:$0xf]
    %v3287 = vld [vmem:[#allocation17 + $0x3c] sm:$0xf]
    %v3288 = vld [vmem:[%s18] sm:$0x1]
    %v3289 = vpack.c.bf16 %v3271, %v3270
    %v3291 = vlaneseq
    %v3292 = vshrl.u32 %v3291, 7
    %v3293 = vsub.s32 0, %v3292
    %v3294 = vrot.slane %v3288, %v3293
    %v3312 = vunpack.c.l.b16 %v3272
    %v3313 = vunpack.c.l.b16 %v3273
    %v3314 = vunpack.c.l.b16 %v3274
    %v3315 = vunpack.c.l.b16 %v3275
    %v3316 = vunpack.c.l.b16 %v3276
    %v3317 = vunpack.c.l.b16 %v3277
    %v3318 = vunpack.c.l.b16 %v3278
    %v3319 = vunpack.c.l.b16 %v3279
    %v3320 = vunpack.c.l.b16 %v3280
    %v3321 = vunpack.c.l.b16 %v3281
    %v3322 = vunpack.c.l.b16 %v3282
    %v3323 = vunpack.c.l.b16 %v3283
    %v3324 = vunpack.c.l.b16 %v3284
    %v3325 = vunpack.c.l.b16 %v3285
    %v3326 = vunpack.c.l.b16 %v3286
    %v3327 = vunpack.c.l.b16 %v3287
    %v3328 = vpack.c.b16 %v3313, %v3312
    %v3329 = vpack.c.b16 %v3315, %v3314
    %v3330 = vpack.c.b16 %v3317, %v3316
    %v3331 = vpack.c.b16 %v3319, %v3318
    %v3332 = vpack.c.b16 %v3321, %v3320
    %v3333 = vpack.c.b16 %v3323, %v3322
    %v3334 = vpack.c.b16 %v3325, %v3324
    %v3335 = vpack.c.b16 %v3327, %v3326
    %3344 = vmatprep.subr.bf16.mxu0 0
    %3345 = vmatpush1.bf16.msra.mxu0 %v3335
    %3346 = vmatprep.subr.bf16.mxu0 0
    %3347 = vmatpush1.bf16.msra.mxu0 %v3334
    %3348 = vmatprep.subr.bf16.mxu0 0
    %3349 = vmatpush1.bf16.msra.mxu0 %v3333
    %3350 = vmatprep.subr.bf16.mxu0 0
    %3351 = vmatpush1.bf16.msra.mxu0 %v3332
    %3352 = vmatprep.subr.bf16.mxu0 0
    %3353 = vmatpush1.bf16.msra.mxu0 %v3331
    %3354 = vmatprep.subr.bf16.mxu0 0
    %3355 = vmatpush1.bf16.msra.mxu0 %v3330
    %3356 = vmatprep.subr.bf16.mxu0 0
    %3357 = vmatpush1.bf16.msra.mxu0 %v3329
    %3358 = vmatprep.subr.bf16.mxu0 0
    %3359 = vmatpush1.bf16.msra.mxu0 %v3328
    %3360 = vmatprep.subr.bf16.mxu0 0
    %3361 = vmatpush2.bf16.msra.mxu0 0
    %3362 = vmatprep.subr.bf16.mxu0 0
    %3363 = vmatpush2.bf16.msra.mxu0 0
    %3364 = vmatprep.subr.bf16.mxu0 0
    %3365 = vmatpush2.bf16.msra.mxu0 0
    %3366 = vmatprep.subr.bf16.mxu0 0
    %3367 = vmatpush2.bf16.msra.mxu0 0
    %3368 = vmatprep.subr.bf16.mxu0 0
    %3369 = vmatpush2.bf16.msra.mxu0 0
    %3370 = vmatprep.subr.bf16.mxu0 0
    %3371 = vmatpush2.bf16.msra.mxu0 0
    %3372 = vmatprep.subr.bf16.mxu0 0
    %3373 = vmatpush2.bf16.msra.mxu0 0
    %3374 = vmatprep.subr.bf16.mxu0 0
    %3375 = vmatpush2.bf16.msra.mxu0 0
    %3376 = vmatprep.mubr.bf16.mxu0 0
    %3377 = vmatmul.mubr.bf16.gmra.mxu0 %v3289
    %v3378 = vpop.f32.mrf.mxu0
    %v3379 = vadd.f32 %v3294, %v3378
    %v3380 = vpop.f32.mrf.mxu0
    %v3381 = vpop.f32.mrf.mxu0
    %v3382 = vadd.f32 %v3294, %v3381
    %v3383 = vpop.f32.mrf.mxu0
    %3384 = vdwg.mxu0
    %3385 = vst [vmem:[#allocation19] sm:$0xff] %v3379
    %3386 = vst [vmem:[#allocation19 + $0x8] sm:$0xff] %v3382
    // Predicated region
    $region118: #{tpu_custom_call.1} parent=1 // pred_check
      _
    $region119: #{tpu_custom_call.1} parent=1 // pred_check_branch
      %3388 = sbr.rel (0) target = $region121
    $region120: #{tpu_custom_call.1} parent=1 // pred_region
      %s3390 = ssub.s32 256, 256
      %3391 = vsyncadd [#allocation4], %s3390
      %s3392 = sshll.u32 [#allocation19], 4
      %s3393 = int_to_ptr.vmem [resolvable:$true] %s3392
      %3398 = dma.vmem_to_hbm [thread:$0]  %s3393, 256, %s19, [#allocation4], 128, 128, 8
    $region121: #{tpu_custom_call.1} parent=1 // pred_fallthru
      _
    // Predicated region
    $region122: #{tpu_custom_call.1} parent=1 // pred_check
      _
    $region123: #{tpu_custom_call.1} parent=1 // pred_check_branch
      %3400 = sbr.rel (0) target = $region125
    $region124: #{tpu_custom_call.1} parent=1 // pred_region
      %3401 = dma.done [#allocation4], 256
    $region125: #{tpu_custom_call.1} parent=1 // pred_fallthru
      _
    %3402 = vsyncpa [#allocation3], 1
    %3403 = vsyncpa [#allocation6], 1
    %3404 = vsyncpa [#allocation9], 1
    %3405 = vsyncpa [#allocation12], 1
    %3406 = vsyncpa [#allocation15], 1
    %3407 = vsyncpa [#allocation18], 1
    %3408 = vsyncpa [#allocation4], 1

</llo_original>
